<compile_context>
chip_gen: v5e
topology: v5e:2x2
jax: 0.10.0
libtpu: 0.0.40
codegen_flags: <defaults>
</compile_context>

<pallas_src>
import jax
import jax.numpy as jnp
from jax.experimental import pallas as pl
from jax.experimental.pallas import tpu as pltpu

LANES = 128
SUBLANES = 8


def _round_up(v, m):
    return ((v + m - 1) // m) * m


def _pad_to(a, shape):
    return jnp.pad(a, [(0, s - d) for d, s in zip(a.shape, shape)])


def _vmem_limit_bytes():
    """Generation-aware VMEM limit (~80% of physical; conservative fallback)."""
    try:
        cap = int(pltpu.get_tpu_info().vmem_capacity_bytes)
    except Exception:
        cap = 64 * 1024 * 1024  # assume v7x-sized VMEM if the query is unavailable
    return int(min(cap - 8 * 1024 * 1024, int(cap * 0.82), 110 * 1024 * 1024))


def _pick_batch_tile(N, L, c_pad, o_pad, p_pad, vmem_limit):
    """VMEM-budget-driven batch tile; keep grid >= 2 (and even, for v7x's 2 TCs)."""
    per_b = 4 * ((p_pad + L) * c_pad      # hpad scratch (f32)
                 + L * c_pad              # residual scratch (f32)
                 + 2 * L * c_pad          # x block (double buffered)
                 + 2 * L * o_pad          # out block (double buffered)
                 + 4 * L * c_pad)         # live temporaries headroom
    budget = int(vmem_limit * 0.4)
    bn = max(1, min(N, budget // max(per_b, 1)))
    if N >= 2:
        bn = max(1, min(bn, N // 2))      # at least 2 grid steps (pipeline/megacore)
    while N % bn:
        bn -= 1
    if (N // bn) % 2 and N % 2 == 0:      # prefer an even grid (v7x: 2 TensorCores)
        for cand in range(bn, 0, -1):
            if N % cand == 0 and (N // cand) % 2 == 0:
                bn = cand
                break
    return bn


# --------------------------------------------------------------------------
# Fused kernel: all TemporalBlocks + Linear + Sigmoid.
# cfg: tuple of (dilation, has_downsample) per block (all channel dims padded to C).
# refs = (x, block0 weights..., ..., lin_w, lin_b, out, hpad_scratch, res_scratch)
# --------------------------------------------------------------------------
def _make_fused_kernel(cfg, K, BN, L, C, O, P_pad, n_w):
    M = BN * L
    f32 = jnp.float32
    bf16 = jnp.bfloat16

    def kernel(*refs):
        x_ref = refs[0]
        w_refs = refs[1:1 + n_w]
        out_ref = refs[1 + n_w]
        hpad_ref = refs[2 + n_w]
        res_ref = refs[3 + n_w]

        # Zero the causal-padding rows once; they are never written below.
        hpad_ref[:, :P_pad, :] = jnp.zeros((BN, P_pad, C), f32)
        # Stage the (channel-padded) input activation at the aligned offset P_pad.
        hpad_ref[:, P_pad:, :] = x_ref[...]

        def conv(w_ref, b_ref, dil):
            # K accumulating matmuls; each tap is a static slice of the zero-padded
            # scratch (no zero-concat, no shifted activation copies).
            acc = None
            for k in range(K):
                start = P_pad - (K - 1 - k) * dil
                tap = hpad_ref[:, start:start + L, :].reshape(M, C).astype(bf16)
                d = jnp.dot(tap, w_ref[k], preferred_element_type=f32)
                acc = d if acc is None else acc + d
            return acc + b_ref[...]          # single bias broadcast per conv

        idx = 0
        for (dil, has_down) in cfg:
            w1, b1, w2, b2 = w_refs[idx:idx + 4]
            idx += 4

            # Residual of this block (optionally 1x1 downsampled), staged in VMEM
            # so it does not stay live in vregs across both convs.
            h_in = hpad_ref[:, P_pad:, :].reshape(M, C)
            if has_down:
                wd, bd = w_refs[idx:idx + 2]
                idx += 2
                res = jnp.dot(h_in.astype(bf16), wd[...],
                              preferred_element_type=f32) + bd[...]
            else:
                res = h_in
            res_ref[...] = res.reshape(BN, L, C)

            # conv1 -> ReLU   (dropout layers are identity: inference semantics)
            h1 = jnp.maximum(conv(w1, b1, dil), 0.0)
            hpad_ref[:, P_pad:, :] = h1.reshape(BN, L, C)
            # conv2 -> ReLU
            h2 = jnp.maximum(conv(w2, b2, dil), 0.0)
            # residual add -> final ReLU; write back for the next block / head.
            h = jnp.maximum(h2 + res_ref[...].reshape(M, C), 0.0)
            hpad_ref[:, P_pad:, :] = h.reshape(BN, L, C)

        # Linear head + sigmoid.
        # TODO(synk): torch casts to .double() before the sigmoid; TPU Pallas has
        # no f64, so the sigmoid is computed in f32 (exact tanh identity, one EUP op).
        lw, lb = w_refs[idx], w_refs[idx + 1]
        hfin = hpad_ref[:, P_pad:, :].reshape(M, C).astype(bf16)
        logits = jnp.dot(hfin, lw[...], preferred_element_type=f32) + lb[...]
        out_ref[...] = (0.5 * jnp.tanh(0.5 * logits) + 0.5).reshape(BN, L, O)

    return kernel


def _const_spec(shape, use_buffered):
    nd = len(shape)
    imap = lambda n: (0,) * nd
    if use_buffered:
        # Block-invariant weights do not need a second pipeline buffer.
        return pl.BlockSpec(shape, imap, pipeline_mode=pl.Buffered(1))
    return pl.BlockSpec(shape, imap)


def tcn_forward(x, params, *, kernel_size):
    """x: (N, L, input_size) f32 -> (N, L, output_size) f32."""
    N, L, C0 = x.shape
    K = kernel_size
    nb = len(params["blocks"])
    O = params["lin_w"].shape[1]

    chans = [C0] + [p["w1"].shape[2] for p in params["blocks"]]
    C_pad = _round_up(max(chans), LANES)          # uniform 128-lane channel width
    O_pad = _round_up(O, LANES)                   # lane-dense output store
    P_max = (K - 1) * (2 ** (nb - 1))             # largest causal left-pad
    P_pad = max(SUBLANES, _round_up(P_max, SUBLANES))

    vmem_limit = _vmem_limit_bytes()
    BN = _pick_batch_tile(N, L, C_pad, O_pad, P_pad, vmem_limit)

    # One-time host-side prep: zero-pad channels to 128 lanes, weights to bf16.
    x_p = jnp.pad(x.astype(jnp.float32), ((0, 0), (0, 0), (0, C_pad - C0)))

    cfg = []
    w_args = []
    for i, p in enumerate(params["blocks"]):
        c_out = p["w1"].shape[2]
        has_down = p["wd"] is not None
        cfg.append((2 ** i, has_down))
        w_args.append(_pad_to(p["w1"], (K, C_pad, C_pad)).astype(jnp.bfloat16))
        w_args.append(_pad_to(p["b1"].reshape(1, c_out), (1, C_pad)).astype(jnp.float32))
        w_args.append(_pad_to(p["w2"], (K, C_pad, C_pad)).astype(jnp.bfloat16))
        w_args.append(_pad_to(p["b2"].reshape(1, c_out), (1, C_pad)).astype(jnp.float32))
        if has_down:
            w_args.append(_pad_to(p["wd"], (C_pad, C_pad)).astype(jnp.bfloat16))
            w_args.append(_pad_to(p["bd"].reshape(1, c_out), (1, C_pad)).astype(jnp.float32))
    w_args.append(_pad_to(params["lin_w"], (C_pad, O_pad)).astype(jnp.bfloat16))
    w_args.append(_pad_to(params["lin_b"].reshape(1, O), (1, O_pad)).astype(jnp.float32))

    kernel = _make_fused_kernel(tuple(cfg), K, BN, L, C_pad, O_pad, P_pad, len(w_args))

    def build_and_call(use_buffered):
        in_specs = [pl.BlockSpec((BN, L, C_pad), lambda n: (n, 0, 0))]
        in_specs += [_const_spec(a.shape, use_buffered) for a in w_args]
        return pl.pallas_call(
            kernel,
            out_shape=jax.ShapeDtypeStruct((N, L, O_pad), jnp.float32),
            grid=(N // BN,),
            in_specs=in_specs,
            out_specs=pl.BlockSpec((BN, L, O_pad), lambda n: (n, 0, 0)),
            scratch_shapes=[
                pltpu.VMEM((BN, P_pad + L, C_pad), jnp.float32),  # tap / inter-block
                pltpu.VMEM((BN, L, C_pad), jnp.float32),          # residual
            ],
            compiler_params=pltpu.CompilerParams(
                dimension_semantics=("parallel",),
                vmem_limit_bytes=vmem_limit,
            ),
        )(x_p, *w_args)

    try:
        out = build_and_call(hasattr(pl, "Buffered"))
    except Exception:
        # Fallback for jax versions without pipeline_mode=pl.Buffered on BlockSpec.
        out = build_and_call(False)

    return out[..., :O]


# --------------------------------------------------------------------------
# Pure-JAX reference (same math, HIGHEST precision) for correctness checking.
# --------------------------------------------------------------------------
def tcn_reference(x, params, *, kernel_size):
    def causal_conv(h, w, b, dil):
        N, L, _ = h.shape
        pad = (kernel_size - 1) * dil
        hp = jnp.pad(h, ((0, 0), (pad, 0), (0, 0)))
        out = jnp.zeros((N, L, w.shape[2]), jnp.float32) + b[None, None, :]
        for k in range(kernel_size):
            out = out + jnp.einsum("nlc,cd->nld",
                                   hp[:, k * dil:k * dil + L, :], w[k],
                                   precision=jax.lax.Precision.HIGHEST)
        return out

    h = x
    for i, p in enumerate(params["blocks"]):
        dil = 2 ** i
        o = jnp.maximum(causal_conv(h, p["w1"], p["b1"], dil), 0.0)
        o = jnp.maximum(causal_conv(o, p["w2"], p["b2"], dil), 0.0)
        if p["wd"] is not None:
            res = jnp.einsum("nlc,cd->nld", h, p["wd"],
                             precision=jax.lax.Precision.HIGHEST) + p["bd"]
        else:
            res = h
        h = jnp.maximum(o + res, 0.0)
    logits = jnp.einsum("nlc,cd->nld", h, params["lin_w"],
                        precision=jax.lax.Precision.HIGHEST) + params["lin_b"]
    return jax.nn.sigmoid(logits)


# --------------------------------------------------------------------------
# Deterministic parameter init (shapes follow nn.Conv1d / nn.Linear;
# weight_norm at init is equivalent to using the raw weights directly).
# TODO(synk): for trained checkpoints, consume g*v/||v|| (weight_norm) weights.
# --------------------------------------------------------------------------
def init_params(key, input_size, output_size, num_channels, kernel_size):
    blocks = []
    c_in = input_size
    for c_out in num_channels:
        key, k0, k1, k2, k3, k4, k5 = jax.random.split(key, 7)
        w1 = 0.1 * jax.random.normal(k0, (kernel_size, c_in, c_out), jnp.float32)
        b1 = 0.1 * jax.random.normal(k1, (c_out,), jnp.float32)
        w2 = 0.1 * jax.random.normal(k2, (kernel_size, c_out, c_out), jnp.float32)
        b2 = 0.1 * jax.random.normal(k3, (c_out,), jnp.float32)
        if c_in != c_out:
            wd = 0.1 * jax.random.normal(k4, (c_in, c_out), jnp.float32)
            bd = 0.1 * jax.random.normal(k5, (c_out,), jnp.float32)
        else:
            wd, bd = None, None
        blocks.append(dict(w1=w1, b1=b1, w2=w2, b2=b2, wd=wd, bd=bd))
        c_in = c_out
    key, ka, kb = jax.random.split(key, 3)
    lin_w = 0.1 * jax.random.normal(ka, (c_in, output_size), jnp.float32)
    lin_b = 0.1 * jax.random.normal(kb, (output_size,), jnp.float32)
    return dict(blocks=blocks, lin_w=lin_w, lin_b=lin_b)


if __name__ == "__main__":
    # Small poly-music-like configuration.
    N, L = 2, 16                 # batch, sequence length
    input_size, output_size = 8, 8
    num_channels = [16, 16]      # two TemporalBlocks, dilations 1 and 2
    kernel_size = 2

    key = jax.random.PRNGKey(0)
    kx, kp = jax.random.split(key)
    x = jax.random.normal(kx, (N, L, input_size), jnp.float32)
    params = init_params(kp, input_size, output_size, num_channels, kernel_size)

    out = tcn_forward(x, params, kernel_size=kernel_size)
    out = jax.block_until_ready(out)

    ref = tcn_reference(x, params, kernel_size=kernel_size)
    assert out.shape == (N, L, output_size), out.shape
    assert out.dtype == jnp.float32
    max_err = float(jnp.max(jnp.abs(out - ref)))
    # Tolerance: kernel matmuls use explicit bf16 operands (f32 accumulation)
    # while the reference runs f32 at Precision.HIGHEST; sigmoid compresses the
    # resulting few-e-3 logit error to ~1e-3 at the output.
    assert max_err < 5e-3, f"max_err={max_err}"

    print("KERNEL_OK")
</pallas_src>

<mosaic_0001>
module attributes {stable_mosaic.version = 11 : i64} {
  func.func @kernel(%arg0: i32, %arg1: memref<1x16x128xf32, #tpu.memory_space<vmem>>, %arg2: memref<2x128x128xbf16, #tpu.memory_space<vmem>>, %arg3: memref<1x128xf32, #tpu.memory_space<vmem>>, %arg4: memref<2x128x128xbf16, #tpu.memory_space<vmem>>, %arg5: memref<1x128xf32, #tpu.memory_space<vmem>>, %arg6: memref<128x128xbf16, #tpu.memory_space<vmem>>, %arg7: memref<1x128xf32, #tpu.memory_space<vmem>>, %arg8: memref<2x128x128xbf16, #tpu.memory_space<vmem>>, %arg9: memref<1x128xf32, #tpu.memory_space<vmem>>, %arg10: memref<2x128x128xbf16, #tpu.memory_space<vmem>>, %arg11: memref<1x128xf32, #tpu.memory_space<vmem>>, %arg12: memref<128x128xbf16, #tpu.memory_space<vmem>>, %arg13: memref<1x128xf32, #tpu.memory_space<vmem>>, %arg14: memref<1x16x128xf32, #tpu.memory_space<vmem>>, %arg15: memref<1x24x128xf32, #tpu.memory_space<vmem>>, %arg16: memref<1x16x128xf32, #tpu.memory_space<vmem>>) attributes {dimension_semantics = [#tpu.dimension_semantics<parallel>], iteration_bounds = array<i64: 2>, scalar_prefetch = 0 : i64, scratch_operands = 2 : i64, tpu.core_type = #tpu.core_type<tc>, window_params = [{transform_indices = @transform_0, window_bounds = array<i64: 1, 16, 128>}, {pipeline_mode = #tpu.pipeline_mode<synchronous>, transform_indices = @transform_1, window_bounds = array<i64: 2, 128, 128>}, {pipeline_mode = #tpu.pipeline_mode<synchronous>, transform_indices = @transform_2, window_bounds = array<i64: 1, 128>}, {pipeline_mode = #tpu.pipeline_mode<synchronous>, transform_indices = @transform_3, window_bounds = array<i64: 2, 128, 128>}, {pipeline_mode = #tpu.pipeline_mode<synchronous>, transform_indices = @transform_4, window_bounds = array<i64: 1, 128>}, {pipeline_mode = #tpu.pipeline_mode<synchronous>, transform_indices = @transform_5, window_bounds = array<i64: 128, 128>}, {pipeline_mode = #tpu.pipeline_mode<synchronous>, transform_indices = @transform_6, window_bounds = array<i64: 1, 128>}, {pipeline_mode = #tpu.pipeline_mode<synchronous>, transform_indices = @transform_7, window_bounds = array<i64: 2, 128, 128>}, {pipeline_mode = #tpu.pipeline_mode<synchronous>, transform_indices = @transform_8, window_bounds = array<i64: 1, 128>}, {pipeline_mode = #tpu.pipeline_mode<synchronous>, transform_indices = @transform_9, window_bounds = array<i64: 2, 128, 128>}, {pipeline_mode = #tpu.pipeline_mode<synchronous>, transform_indices = @transform_10, window_bounds = array<i64: 1, 128>}, {pipeline_mode = #tpu.pipeline_mode<synchronous>, transform_indices = @transform_11, window_bounds = array<i64: 128, 128>}, {pipeline_mode = #tpu.pipeline_mode<synchronous>, transform_indices = @transform_12, window_bounds = array<i64: 1, 128>}, {transform_indices = @transform_13, window_bounds = array<i64: 1, 16, 128>}]} {
    %cst = arith.constant 0.000000e+00 : f32
    %0 = vector.broadcast %cst : f32 to vector<1x8x128xf32>
    %c0 = arith.constant 0 : index
    %c0_0 = arith.constant 0 : index
    %c0_1 = arith.constant 0 : index
    %1 = vector.load %arg15[%c0, %c0_0, %c0_1] : memref<1x24x128xf32, #tpu.memory_space<vmem>>, vector<1x8x128xf32>
    tpu.vector_store %arg15[%c0, %c0_0, %c0_1], %0 {strides = array<i32>} : memref<1x24x128xf32, #tpu.memory_space<vmem>>, vector<1x8x128xf32>,
    %c0_2 = arith.constant 0 : index
    %c0_3 = arith.constant 0 : index
    %c0_4 = arith.constant 0 : index
    %2 = vector.load %arg1[%c0_2, %c0_3, %c0_4] : memref<1x16x128xf32, #tpu.memory_space<vmem>>, vector<1x16x128xf32>
    %c0_5 = arith.constant 0 : index
    %c8 = arith.constant 8 : index
    %c0_6 = arith.constant 0 : index
    %3 = vector.load %arg15[%c0_5, %c8, %c0_6] : memref<1x24x128xf32, #tpu.memory_space<vmem>>, vector<1x16x128xf32>
    tpu.vector_store %arg15[%c0_5, %c8, %c0_6], %2 {strides = array<i32>} : memref<1x24x128xf32, #tpu.memory_space<vmem>>, vector<1x16x128xf32>,
    %c0_7 = arith.constant 0 : index
    %c8_8 = arith.constant 8 : index
    %c0_9 = arith.constant 0 : index
    %4 = vector.load %arg15[%c0_7, %c8_8, %c0_9] : memref<1x24x128xf32, #tpu.memory_space<vmem>>, vector<1x16x128xf32>
    %5 = vector.shape_cast %4 : vector<1x16x128xf32> to vector<16x128xf32>
    %6 = arith.truncf %5 : vector<16x128xf32> to vector<16x128xbf16>
    %c0_10 = arith.constant 0 : index
    %c0_11 = arith.constant 0 : index
    %7 = vector.load %arg6[%c0_10, %c0_11] : memref<128x128xbf16, #tpu.memory_space<vmem>>, vector<128x128xbf16>
    %cst_12 = arith.constant dense<0.000000e+00> : vector<16x128xf32>
    %8 = tpu.matmul %6, %7, %cst_12 {dimension_numbers = #tpu.dot_dimension_numbers<[1], [0], [0], [1], [0, 0, 1, 1], [], []>} : vector<16x128xbf16>, vector<128x128xbf16>, vector<16x128xf32> -> vector<16x128xf32>
    %c0_13 = arith.constant 0 : index
    %c0_14 = arith.constant 0 : index
    %9 = vector.load %arg7[%c0_13, %c0_14] : memref<1x128xf32, #tpu.memory_space<vmem>>, vector<1x128xf32>
    %10 = vector.broadcast %9 : vector<1x128xf32> to vector<16x128xf32>
    %11 = arith.addf %8, %10 : vector<16x128xf32>
    %12 = vector.shape_cast %11 : vector<16x128xf32> to vector<1x16x128xf32>
    %c0_15 = arith.constant 0 : index
    %c0_16 = arith.constant 0 : index
    %c0_17 = arith.constant 0 : index
    %13 = vector.load %arg16[%c0_15, %c0_16, %c0_17] : memref<1x16x128xf32, #tpu.memory_space<vmem>>, vector<1x16x128xf32>
    tpu.vector_store %arg16[%c0_15, %c0_16, %c0_17], %12 {strides = array<i32>} : memref<1x16x128xf32, #tpu.memory_space<vmem>>, vector<1x16x128xf32>,
    %c0_18 = arith.constant 0 : index
    %c7 = arith.constant 7 : index
    %c0_19 = arith.constant 0 : index
    %14 = vector.load %arg15[%c0_18, %c7, %c0_19] : memref<1x24x128xf32, #tpu.memory_space<vmem>>, vector<1x16x128xf32>
    %15 = vector.shape_cast %14 : vector<1x16x128xf32> to vector<16x128xf32>
    %16 = arith.truncf %15 : vector<16x128xf32> to vector<16x128xbf16>
    %c0_20 = arith.constant 0 : index
    %c0_21 = arith.constant 0 : index
    %c0_22 = arith.constant 0 : index
    %17 = vector.load %arg2[%c0_20, %c0_21, %c0_22] : memref<2x128x128xbf16, #tpu.memory_space<vmem>>, vector<1x128x128xbf16>
    %18 = vector.shape_cast %17 : vector<1x128x128xbf16> to vector<128x128xbf16>
    %cst_23 = arith.constant dense<0.000000e+00> : vector<16x128xf32>
    %19 = tpu.matmul %16, %18, %cst_23 {dimension_numbers = #tpu.dot_dimension_numbers<[1], [0], [0], [1], [0, 0, 1, 1], [], []>} : vector<16x128xbf16>, vector<128x128xbf16>, vector<16x128xf32> -> vector<16x128xf32>
    %c0_24 = arith.constant 0 : index
    %c8_25 = arith.constant 8 : index
    %c0_26 = arith.constant 0 : index
    %20 = vector.load %arg15[%c0_24, %c8_25, %c0_26] : memref<1x24x128xf32, #tpu.memory_space<vmem>>, vector<1x16x128xf32>
    %21 = vector.shape_cast %20 : vector<1x16x128xf32> to vector<16x128xf32>
    %22 = arith.truncf %21 : vector<16x128xf32> to vector<16x128xbf16>
    %c1 = arith.constant 1 : index
    %c0_27 = arith.constant 0 : index
    %c0_28 = arith.constant 0 : index
    %23 = vector.load %arg2[%c1, %c0_27, %c0_28] : memref<2x128x128xbf16, #tpu.memory_space<vmem>>, vector<1x128x128xbf16>
    %24 = vector.shape_cast %23 : vector<1x128x128xbf16> to vector<128x128xbf16>
    %cst_29 = arith.constant dense<0.000000e+00> : vector<16x128xf32>
    %25 = tpu.matmul %22, %24, %cst_29 {dimension_numbers = #tpu.dot_dimension_numbers<[1], [0], [0], [1], [0, 0, 1, 1], [], []>} : vector<16x128xbf16>, vector<128x128xbf16>, vector<16x128xf32> -> vector<16x128xf32>
    %26 = arith.addf %19, %25 : vector<16x128xf32>
    %c0_30 = arith.constant 0 : index
    %c0_31 = arith.constant 0 : index
    %27 = vector.load %arg3[%c0_30, %c0_31] : memref<1x128xf32, #tpu.memory_space<vmem>>, vector<1x128xf32>
    %28 = vector.broadcast %27 : vector<1x128xf32> to vector<16x128xf32>
    %29 = arith.addf %26, %28 : vector<16x128xf32>
    %cst_32 = arith.constant 0.000000e+00 : f32
    %30 = vector.broadcast %cst_32 : f32 to vector<16x128xf32>
    %31 = arith.maximumf %29, %30 : vector<16x128xf32>
    %32 = vector.shape_cast %31 : vector<16x128xf32> to vector<1x16x128xf32>
    %c0_33 = arith.constant 0 : index
    %c8_34 = arith.constant 8 : index
    %c0_35 = arith.constant 0 : index
    %33 = vector.load %arg15[%c0_33, %c8_34, %c0_35] : memref<1x24x128xf32, #tpu.memory_space<vmem>>, vector<1x16x128xf32>
    tpu.vector_store %arg15[%c0_33, %c8_34, %c0_35], %32 {strides = array<i32>} : memref<1x24x128xf32, #tpu.memory_space<vmem>>, vector<1x16x128xf32>,
    %c0_36 = arith.constant 0 : index
    %c7_37 = arith.constant 7 : index
    %c0_38 = arith.constant 0 : index
    %34 = vector.load %arg15[%c0_36, %c7_37, %c0_38] : memref<1x24x128xf32, #tpu.memory_space<vmem>>, vector<1x16x128xf32>
    %35 = vector.shape_cast %34 : vector<1x16x128xf32> to vector<16x128xf32>
    %36 = arith.truncf %35 : vector<16x128xf32> to vector<16x128xbf16>
    %c0_39 = arith.constant 0 : index
    %c0_40 = arith.constant 0 : index
    %c0_41 = arith.constant 0 : index
    %37 = vector.load %arg4[%c0_39, %c0_40, %c0_41] : memref<2x128x128xbf16, #tpu.memory_space<vmem>>, vector<1x128x128xbf16>
    %38 = vector.shape_cast %37 : vector<1x128x128xbf16> to vector<128x128xbf16>
    %cst_42 = arith.constant dense<0.000000e+00> : vector<16x128xf32>
    %39 = tpu.matmul %36, %38, %cst_42 {dimension_numbers = #tpu.dot_dimension_numbers<[1], [0], [0], [1], [0, 0, 1, 1], [], []>} : vector<16x128xbf16>, vector<128x128xbf16>, vector<16x128xf32> -> vector<16x128xf32>
    %c0_43 = arith.constant 0 : index
    %c8_44 = arith.constant 8 : index
    %c0_45 = arith.constant 0 : index
    %40 = vector.load %arg15[%c0_43, %c8_44, %c0_45] : memref<1x24x128xf32, #tpu.memory_space<vmem>>, vector<1x16x128xf32>
    %41 = vector.shape_cast %40 : vector<1x16x128xf32> to vector<16x128xf32>
    %42 = arith.truncf %41 : vector<16x128xf32> to vector<16x128xbf16>
    %c1_46 = arith.constant 1 : index
    %c0_47 = arith.constant 0 : index
    %c0_48 = arith.constant 0 : index
    %43 = vector.load %arg4[%c1_46, %c0_47, %c0_48] : memref<2x128x128xbf16, #tpu.memory_space<vmem>>, vector<1x128x128xbf16>
    %44 = vector.shape_cast %43 : vector<1x128x128xbf16> to vector<128x128xbf16>
    %cst_49 = arith.constant dense<0.000000e+00> : vector<16x128xf32>
    %45 = tpu.matmul %42, %44, %cst_49 {dimension_numbers = #tpu.dot_dimension_numbers<[1], [0], [0], [1], [0, 0, 1, 1], [], []>} : vector<16x128xbf16>, vector<128x128xbf16>, vector<16x128xf32> -> vector<16x128xf32>
    %46 = arith.addf %39, %45 : vector<16x128xf32>
    %c0_50 = arith.constant 0 : index
    %c0_51 = arith.constant 0 : index
    %47 = vector.load %arg5[%c0_50, %c0_51] : memref<1x128xf32, #tpu.memory_space<vmem>>, vector<1x128xf32>
    %48 = vector.broadcast %47 : vector<1x128xf32> to vector<16x128xf32>
    %49 = arith.addf %46, %48 : vector<16x128xf32>
    %cst_52 = arith.constant 0.000000e+00 : f32
    %50 = vector.broadcast %cst_52 : f32 to vector<16x128xf32>
    %51 = arith.maximumf %49, %50 : vector<16x128xf32>
    %c0_53 = arith.constant 0 : index
    %c0_54 = arith.constant 0 : index
    %c0_55 = arith.constant 0 : index
    %52 = vector.load %arg16[%c0_53, %c0_54, %c0_55] : memref<1x16x128xf32, #tpu.memory_space<vmem>>, vector<1x16x128xf32>
    %53 = vector.shape_cast %52 : vector<1x16x128xf32> to vector<16x128xf32>
    %54 = arith.addf %51, %53 : vector<16x128xf32>
    %cst_56 = arith.constant 0.000000e+00 : f32
    %55 = vector.broadcast %cst_56 : f32 to vector<16x128xf32>
    %56 = arith.maximumf %54, %55 : vector<16x128xf32>
    %57 = vector.shape_cast %56 : vector<16x128xf32> to vector<1x16x128xf32>
    %c0_57 = arith.constant 0 : index
    %c8_58 = arith.constant 8 : index
    %c0_59 = arith.constant 0 : index
    %58 = vector.load %arg15[%c0_57, %c8_58, %c0_59] : memref<1x24x128xf32, #tpu.memory_space<vmem>>, vector<1x16x128xf32>
    tpu.vector_store %arg15[%c0_57, %c8_58, %c0_59], %57 {strides = array<i32>} : memref<1x24x128xf32, #tpu.memory_space<vmem>>, vector<1x16x128xf32>,
    %c0_60 = arith.constant 0 : index
    %c8_61 = arith.constant 8 : index
    %c0_62 = arith.constant 0 : index
    %59 = vector.load %arg15[%c0_60, %c8_61, %c0_62] : memref<1x24x128xf32, #tpu.memory_space<vmem>>, vector<1x16x128xf32>
    %60 = vector.shape_cast %59 : vector<1x16x128xf32> to vector<16x128xf32>
    %61 = vector.shape_cast %60 : vector<16x128xf32> to vector<1x16x128xf32>
    %c0_63 = arith.constant 0 : index
    %c0_64 = arith.constant 0 : index
    %c0_65 = arith.constant 0 : index
    %62 = vector.load %arg16[%c0_63, %c0_64, %c0_65] : memref<1x16x128xf32, #tpu.memory_space<vmem>>, vector<1x16x128xf32>
    tpu.vector_store %arg16[%c0_63, %c0_64, %c0_65], %61 {strides = array<i32>} : memref<1x16x128xf32, #tpu.memory_space<vmem>>, vector<1x16x128xf32>,
    %c0_66 = arith.constant 0 : index
    %c6 = arith.constant 6 : index
    %c0_67 = arith.constant 0 : index
    %63 = vector.load %arg15[%c0_66, %c6, %c0_67] : memref<1x24x128xf32, #tpu.memory_space<vmem>>, vector<1x16x128xf32>
    %64 = vector.shape_cast %63 : vector<1x16x128xf32> to vector<16x128xf32>
    %65 = arith.truncf %64 : vector<16x128xf32> to vector<16x128xbf16>
    %c0_68 = arith.constant 0 : index
    %c0_69 = arith.constant 0 : index
    %c0_70 = arith.constant 0 : index
    %66 = vector.load %arg8[%c0_68, %c0_69, %c0_70] : memref<2x128x128xbf16, #tpu.memory_space<vmem>>, vector<1x128x128xbf16>
    %67 = vector.shape_cast %66 : vector<1x128x128xbf16> to vector<128x128xbf16>
    %cst_71 = arith.constant dense<0.000000e+00> : vector<16x128xf32>
    %68 = tpu.matmul %65, %67, %cst_71 {dimension_numbers = #tpu.dot_dimension_numbers<[1], [0], [0], [1], [0, 0, 1, 1], [], []>} : vector<16x128xbf16>, vector<128x128xbf16>, vector<16x128xf32> -> vector<16x128xf32>
    %c0_72 = arith.constant 0 : index
    %c8_73 = arith.constant 8 : index
    %c0_74 = arith.constant 0 : index
    %69 = vector.load %arg15[%c0_72, %c8_73, %c0_74] : memref<1x24x128xf32, #tpu.memory_space<vmem>>, vector<1x16x128xf32>
    %70 = vector.shape_cast %69 : vector<1x16x128xf32> to vector<16x128xf32>
    %71 = arith.truncf %70 : vector<16x128xf32> to vector<16x128xbf16>
    %c1_75 = arith.constant 1 : index
    %c0_76 = arith.constant 0 : index
    %c0_77 = arith.constant 0 : index
    %72 = vector.load %arg8[%c1_75, %c0_76, %c0_77] : memref<2x128x128xbf16, #tpu.memory_space<vmem>>, vector<1x128x128xbf16>
    %73 = vector.shape_cast %72 : vector<1x128x128xbf16> to vector<128x128xbf16>
    %cst_78 = arith.constant dense<0.000000e+00> : vector<16x128xf32>
    %74 = tpu.matmul %71, %73, %cst_78 {dimension_numbers = #tpu.dot_dimension_numbers<[1], [0], [0], [1], [0, 0, 1, 1], [], []>} : vector<16x128xbf16>, vector<128x128xbf16>, vector<16x128xf32> -> vector<16x128xf32>
    %75 = arith.addf %68, %74 : vector<16x128xf32>
    %c0_79 = arith.constant 0 : index
    %c0_80 = arith.constant 0 : index
    %76 = vector.load %arg9[%c0_79, %c0_80] : memref<1x128xf32, #tpu.memory_space<vmem>>, vector<1x128xf32>
    %77 = vector.broadcast %76 : vector<1x128xf32> to vector<16x128xf32>
    %78 = arith.addf %75, %77 : vector<16x128xf32>
    %cst_81 = arith.constant 0.000000e+00 : f32
    %79 = vector.broadcast %cst_81 : f32 to vector<16x128xf32>
    %80 = arith.maximumf %78, %79 : vector<16x128xf32>
    %81 = vector.shape_cast %80 : vector<16x128xf32> to vector<1x16x128xf32>
    %c0_82 = arith.constant 0 : index
    %c8_83 = arith.constant 8 : index
    %c0_84 = arith.constant 0 : index
    %82 = vector.load %arg15[%c0_82, %c8_83, %c0_84] : memref<1x24x128xf32, #tpu.memory_space<vmem>>, vector<1x16x128xf32>
    tpu.vector_store %arg15[%c0_82, %c8_83, %c0_84], %81 {strides = array<i32>} : memref<1x24x128xf32, #tpu.memory_space<vmem>>, vector<1x16x128xf32>,
    %c0_85 = arith.constant 0 : index
    %c6_86 = arith.constant 6 : index
    %c0_87 = arith.constant 0 : index
    %83 = vector.load %arg15[%c0_85, %c6_86, %c0_87] : memref<1x24x128xf32, #tpu.memory_space<vmem>>, vector<1x16x128xf32>
    %84 = vector.shape_cast %83 : vector<1x16x128xf32> to vector<16x128xf32>
    %85 = arith.truncf %84 : vector<16x128xf32> to vector<16x128xbf16>
    %c0_88 = arith.constant 0 : index
    %c0_89 = arith.constant 0 : index
    %c0_90 = arith.constant 0 : index
    %86 = vector.load %arg10[%c0_88, %c0_89, %c0_90] : memref<2x128x128xbf16, #tpu.memory_space<vmem>>, vector<1x128x128xbf16>
    %87 = vector.shape_cast %86 : vector<1x128x128xbf16> to vector<128x128xbf16>
    %cst_91 = arith.constant dense<0.000000e+00> : vector<16x128xf32>
    %88 = tpu.matmul %85, %87, %cst_91 {dimension_numbers = #tpu.dot_dimension_numbers<[1], [0], [0], [1], [0, 0, 1, 1], [], []>} : vector<16x128xbf16>, vector<128x128xbf16>, vector<16x128xf32> -> vector<16x128xf32>
    %c0_92 = arith.constant 0 : index
    %c8_93 = arith.constant 8 : index
    %c0_94 = arith.constant 0 : index
    %89 = vector.load %arg15[%c0_92, %c8_93, %c0_94] : memref<1x24x128xf32, #tpu.memory_space<vmem>>, vector<1x16x128xf32>
    %90 = vector.shape_cast %89 : vector<1x16x128xf32> to vector<16x128xf32>
    %91 = arith.truncf %90 : vector<16x128xf32> to vector<16x128xbf16>
    %c1_95 = arith.constant 1 : index
    %c0_96 = arith.constant 0 : index
    %c0_97 = arith.constant 0 : index
    %92 = vector.load %arg10[%c1_95, %c0_96, %c0_97] : memref<2x128x128xbf16, #tpu.memory_space<vmem>>, vector<1x128x128xbf16>
    %93 = vector.shape_cast %92 : vector<1x128x128xbf16> to vector<128x128xbf16>
    %cst_98 = arith.constant dense<0.000000e+00> : vector<16x128xf32>
    %94 = tpu.matmul %91, %93, %cst_98 {dimension_numbers = #tpu.dot_dimension_numbers<[1], [0], [0], [1], [0, 0, 1, 1], [], []>} : vector<16x128xbf16>, vector<128x128xbf16>, vector<16x128xf32> -> vector<16x128xf32>
    %95 = arith.addf %88, %94 : vector<16x128xf32>
    %c0_99 = arith.constant 0 : index
    %c0_100 = arith.constant 0 : index
    %96 = vector.load %arg11[%c0_99, %c0_100] : memref<1x128xf32, #tpu.memory_space<vmem>>, vector<1x128xf32>
    %97 = vector.broadcast %96 : vector<1x128xf32> to vector<16x128xf32>
    %98 = arith.addf %95, %97 : vector<16x128xf32>
    %cst_101 = arith.constant 0.000000e+00 : f32
    %99 = vector.broadcast %cst_101 : f32 to vector<16x128xf32>
    %100 = arith.maximumf %98, %99 : vector<16x128xf32>
    %c0_102 = arith.constant 0 : index
    %c0_103 = arith.constant 0 : index
    %c0_104 = arith.constant 0 : index
    %101 = vector.load %arg16[%c0_102, %c0_103, %c0_104] : memref<1x16x128xf32, #tpu.memory_space<vmem>>, vector<1x16x128xf32>
    %102 = vector.shape_cast %101 : vector<1x16x128xf32> to vector<16x128xf32>
    %103 = arith.addf %100, %102 : vector<16x128xf32>
    %cst_105 = arith.constant 0.000000e+00 : f32
    %104 = vector.broadcast %cst_105 : f32 to vector<16x128xf32>
    %105 = arith.maximumf %103, %104 : vector<16x128xf32>
    %106 = vector.shape_cast %105 : vector<16x128xf32> to vector<1x16x128xf32>
    %c0_106 = arith.constant 0 : index
    %c8_107 = arith.constant 8 : index
    %c0_108 = arith.constant 0 : index
    %107 = vector.load %arg15[%c0_106, %c8_107, %c0_108] : memref<1x24x128xf32, #tpu.memory_space<vmem>>, vector<1x16x128xf32>
    tpu.vector_store %arg15[%c0_106, %c8_107, %c0_108], %106 {strides = array<i32>} : memref<1x24x128xf32, #tpu.memory_space<vmem>>, vector<1x16x128xf32>,
    %c0_109 = arith.constant 0 : index
    %c8_110 = arith.constant 8 : index
    %c0_111 = arith.constant 0 : index
    %108 = vector.load %arg15[%c0_109, %c8_110, %c0_111] : memref<1x24x128xf32, #tpu.memory_space<vmem>>, vector<1x16x128xf32>
    %109 = vector.shape_cast %108 : vector<1x16x128xf32> to vector<16x128xf32>
    %110 = arith.truncf %109 : vector<16x128xf32> to vector<16x128xbf16>
    %c0_112 = arith.constant 0 : index
    %c0_113 = arith.constant 0 : index
    %111 = vector.load %arg12[%c0_112, %c0_113] : memref<128x128xbf16, #tpu.memory_space<vmem>>, vector<128x128xbf16>
    %cst_114 = arith.constant dense<0.000000e+00> : vector<16x128xf32>
    %112 = tpu.matmul %110, %111, %cst_114 {dimension_numbers = #tpu.dot_dimension_numbers<[1], [0], [0], [1], [0, 0, 1, 1], [], []>} : vector<16x128xbf16>, vector<128x128xbf16>, vector<16x128xf32> -> vector<16x128xf32>
    %c0_115 = arith.constant 0 : index
    %c0_116 = arith.constant 0 : index
    %113 = vector.load %arg13[%c0_115, %c0_116] : memref<1x128xf32, #tpu.memory_space<vmem>>, vector<1x128xf32>
    %114 = vector.broadcast %113 : vector<1x128xf32> to vector<16x128xf32>
    %115 = arith.addf %112, %114 : vector<16x128xf32>
    %cst_117 = arith.constant 5.000000e-01 : f32
    %116 = vector.broadcast %cst_117 : f32 to vector<16x128xf32>
    %117 = arith.mulf %116, %115 : vector<16x128xf32>
    %118 = math.tanh %117 : vector<16x128xf32>
    %cst_118 = arith.constant 5.000000e-01 : f32
    %119 = vector.broadcast %cst_118 : f32 to vector<16x128xf32>
    %120 = arith.mulf %119, %118 : vector<16x128xf32>
    %cst_119 = arith.constant 5.000000e-01 : f32
    %121 = vector.broadcast %cst_119 : f32 to vector<16x128xf32>
    %122 = arith.addf %120, %121 : vector<16x128xf32>
    %123 = vector.shape_cast %122 : vector<16x128xf32> to vector<1x16x128xf32>
    %c0_120 = arith.constant 0 : index
    %c0_121 = arith.constant 0 : index
    %c0_122 = arith.constant 0 : index
    %124 = vector.load %arg14[%c0_120, %c0_121, %c0_122] : memref<1x16x128xf32, #tpu.memory_space<vmem>>, vector<1x16x128xf32>
    tpu.vector_store %arg14[%c0_120, %c0_121, %c0_122], %123 {strides = array<i32>} : memref<1x16x128xf32, #tpu.memory_space<vmem>>, vector<1x16x128xf32>,
    return
  }
  func.func @transform_0(%arg0: i32) -> (i32, i32, i32) {
    %c0_i32 = arith.constant 0 : i32
    %c0_i32_0 = arith.constant 0 : i32
    %c0_i32_1 = arith.constant 0 : i32
    return %arg0, %c0_i32, %c0_i32_0 : i32, i32, i32
  }
  func.func @transform_1(%arg0: i32) -> (i32, i32, i32) {
    %c0_i32 = arith.constant 0 : i32
    %c0_i32_0 = arith.constant 0 : i32
    %c0_i32_1 = arith.constant 0 : i32
    %c0_i32_2 = arith.constant 0 : i32
    return %c0_i32, %c0_i32_0, %c0_i32_1 : i32, i32, i32
  }
  func.func @transform_2(%arg0: i32) -> (i32, i32) {
    %c0_i32 = arith.constant 0 : i32
    %c0_i32_0 = arith.constant 0 : i32
    %c0_i32_1 = arith.constant 0 : i32
    return %c0_i32, %c0_i32_0 : i32, i32
  }
  func.func @transform_3(%arg0: i32) -> (i32, i32, i32) {
    %c0_i32 = arith.constant 0 : i32
    %c0_i32_0 = arith.constant 0 : i32
    %c0_i32_1 = arith.constant 0 : i32
    %c0_i32_2 = arith.constant 0 : i32
    return %c0_i32, %c0_i32_0, %c0_i32_1 : i32, i32, i32
  }
  func.func @transform_4(%arg0: i32) -> (i32, i32) {
    %c0_i32 = arith.constant 0 : i32
    %c0_i32_0 = arith.constant 0 : i32
    %c0_i32_1 = arith.constant 0 : i32
    return %c0_i32, %c0_i32_0 : i32, i32
  }
  func.func @transform_5(%arg0: i32) -> (i32, i32) {
    %c0_i32 = arith.constant 0 : i32
    %c0_i32_0 = arith.constant 0 : i32
    %c0_i32_1 = arith.constant 0 : i32
    return %c0_i32, %c0_i32_0 : i32, i32
  }
  func.func @transform_6(%arg0: i32) -> (i32, i32) {
    %c0_i32 = arith.constant 0 : i32
    %c0_i32_0 = arith.constant 0 : i32
    %c0_i32_1 = arith.constant 0 : i32
    return %c0_i32, %c0_i32_0 : i32, i32
  }
  func.func @transform_7(%arg0: i32) -> (i32, i32, i32) {
    %c0_i32 = arith.constant 0 : i32
    %c0_i32_0 = arith.constant 0 : i32
    %c0_i32_1 = arith.constant 0 : i32
    %c0_i32_2 = arith.constant 0 : i32
    return %c0_i32, %c0_i32_0, %c0_i32_1 : i32, i32, i32
  }
  func.func @transform_8(%arg0: i32) -> (i32, i32) {
    %c0_i32 = arith.constant 0 : i32
    %c0_i32_0 = arith.constant 0 : i32
    %c0_i32_1 = arith.constant 0 : i32
    return %c0_i32, %c0_i32_0 : i32, i32
  }
  func.func @transform_9(%arg0: i32) -> (i32, i32, i32) {
    %c0_i32 = arith.constant 0 : i32
    %c0_i32_0 = arith.constant 0 : i32
    %c0_i32_1 = arith.constant 0 : i32
    %c0_i32_2 = arith.constant 0 : i32
    return %c0_i32, %c0_i32_0, %c0_i32_1 : i32, i32, i32
  }
  func.func @transform_10(%arg0: i32) -> (i32, i32) {
    %c0_i32 = arith.constant 0 : i32
    %c0_i32_0 = arith.constant 0 : i32
    %c0_i32_1 = arith.constant 0 : i32
    return %c0_i32, %c0_i32_0 : i32, i32
  }
  func.func @transform_11(%arg0: i32) -> (i32, i32) {
    %c0_i32 = arith.constant 0 : i32
    %c0_i32_0 = arith.constant 0 : i32
    %c0_i32_1 = arith.constant 0 : i32
    return %c0_i32, %c0_i32_0 : i32, i32
  }
  func.func @transform_12(%arg0: i32) -> (i32, i32) {
    %c0_i32 = arith.constant 0 : i32
    %c0_i32_0 = arith.constant 0 : i32
    %c0_i32_1 = arith.constant 0 : i32
    return %c0_i32, %c0_i32_0 : i32, i32
  }
  func.func @transform_13(%arg0: i32) -> (i32, i32, i32) {
    %c0_i32 = arith.constant 0 : i32
    %c0_i32_0 = arith.constant 0 : i32
    %c0_i32_1 = arith.constant 0 : i32
    return %arg0, %c0_i32, %c0_i32_0 : i32, i32, i32
  }
}

module attributes {stable_mosaic.version = 11 : i64} {
  func.func @kernel(%arg0: i32, %arg1: memref<1x16x128xf32, #tpu.memory_space<vmem>>, %arg2: memref<2x128x128xbf16, #tpu.memory_space<vmem>>, %arg3: memref<1x128xf32, #tpu.memory_space<vmem>>, %arg4: memref<2x128x128xbf16, #tpu.memory_space<vmem>>, %arg5: memref<1x128xf32, #tpu.memory_space<vmem>>, %arg6: memref<128x128xbf16, #tpu.memory_space<vmem>>, %arg7: memref<1x128xf32, #tpu.memory_space<vmem>>, %arg8: memref<2x128x128xbf16, #tpu.memory_space<vmem>>, %arg9: memref<1x128xf32, #tpu.memory_space<vmem>>, %arg10: memref<2x128x128xbf16, #tpu.memory_space<vmem>>, %arg11: memref<1x128xf32, #tpu.memory_space<vmem>>, %arg12: memref<128x128xbf16, #tpu.memory_space<vmem>>, %arg13: memref<1x128xf32, #tpu.memory_space<vmem>>, %arg14: memref<1x16x128xf32, #tpu.memory_space<vmem>>, %arg15: memref<1x24x128xf32, #tpu.memory_space<vmem>>, %arg16: memref<1x16x128xf32, #tpu.memory_space<vmem>>) attributes {dimension_semantics = [#tpu.dimension_semantics<parallel>], iteration_bounds = array<i64: 2>, scalar_prefetch = 0 : i64, scratch_operands = 2 : i64, tpu.core_type = #tpu.core_type<tc>, window_params = [{transform_indices = @transform_0, window_bounds = array<i64: 1, 16, 128>}, {pipeline_mode = #tpu.pipeline_mode<synchronous>, transform_indices = @transform_1, window_bounds = array<i64: 2, 128, 128>}, {pipeline_mode = #tpu.pipeline_mode<synchronous>, transform_indices = @transform_2, window_bounds = array<i64: 1, 128>}, {pipeline_mode = #tpu.pipeline_mode<synchronous>, transform_indices = @transform_3, window_bounds = array<i64: 2, 128, 128>}, {pipeline_mode = #tpu.pipeline_mode<synchronous>, transform_indices = @transform_4, window_bounds = array<i64: 1, 128>}, {pipeline_mode = #tpu.pipeline_mode<synchronous>, transform_indices = @transform_5, window_bounds = array<i64: 128, 128>}, {pipeline_mode = #tpu.pipeline_mode<synchronous>, transform_indices = @transform_6, window_bounds = array<i64: 1, 128>}, {pipeline_mode = #tpu.pipeline_mode<synchronous>, transform_indices = @transform_7, window_bounds = array<i64: 2, 128, 128>}, {pipeline_mode = #tpu.pipeline_mode<synchronous>, transform_indices = @transform_8, window_bounds = array<i64: 1, 128>}, {pipeline_mode = #tpu.pipeline_mode<synchronous>, transform_indices = @transform_9, window_bounds = array<i64: 2, 128, 128>}, {pipeline_mode = #tpu.pipeline_mode<synchronous>, transform_indices = @transform_10, window_bounds = array<i64: 1, 128>}, {pipeline_mode = #tpu.pipeline_mode<synchronous>, transform_indices = @transform_11, window_bounds = array<i64: 128, 128>}, {pipeline_mode = #tpu.pipeline_mode<synchronous>, transform_indices = @transform_12, window_bounds = array<i64: 1, 128>}, {transform_indices = @transform_13, window_bounds = array<i64: 1, 16, 128>}]} {
    %cst = arith.constant 0.000000e+00 : f32
    %0 = vector.broadcast %cst : f32 to vector<1x8x128xf32>
    %c0 = arith.constant 0 : index
    %c0_0 = arith.constant 0 : index
    %c0_1 = arith.constant 0 : index
    %1 = vector.load %arg15[%c0, %c0_0, %c0_1] : memref<1x24x128xf32, #tpu.memory_space<vmem>>, vector<1x8x128xf32>
    tpu.vector_store %arg15[%c0, %c0_0, %c0_1], %0 {strides = array<i32>} : memref<1x24x128xf32, #tpu.memory_space<vmem>>, vector<1x8x128xf32>,
    %c0_2 = arith.constant 0 : index
    %c0_3 = arith.constant 0 : index
    %c0_4 = arith.constant 0 : index
    %2 = vector.load %arg1[%c0_2, %c0_3, %c0_4] : memref<1x16x128xf32, #tpu.memory_space<vmem>>, vector<1x16x128xf32>
    %c0_5 = arith.constant 0 : index
    %c8 = arith.constant 8 : index
    %c0_6 = arith.constant 0 : index
    %3 = vector.load %arg15[%c0_5, %c8, %c0_6] : memref<1x24x128xf32, #tpu.memory_space<vmem>>, vector<1x16x128xf32>
    tpu.vector_store %arg15[%c0_5, %c8, %c0_6], %2 {strides = array<i32>} : memref<1x24x128xf32, #tpu.memory_space<vmem>>, vector<1x16x128xf32>,
    %c0_7 = arith.constant 0 : index
    %c8_8 = arith.constant 8 : index
    %c0_9 = arith.constant 0 : index
    %4 = vector.load %arg15[%c0_7, %c8_8, %c0_9] : memref<1x24x128xf32, #tpu.memory_space<vmem>>, vector<1x16x128xf32>
    %5 = vector.shape_cast %4 : vector<1x16x128xf32> to vector<16x128xf32>
    %6 = arith.truncf %5 : vector<16x128xf32> to vector<16x128xbf16>
    %c0_10 = arith.constant 0 : index
    %c0_11 = arith.constant 0 : index
    %7 = vector.load %arg6[%c0_10, %c0_11] : memref<128x128xbf16, #tpu.memory_space<vmem>>, vector<128x128xbf16>
    %cst_12 = arith.constant dense<0.000000e+00> : vector<16x128xf32>
    %8 = tpu.matmul %6, %7, %cst_12 {dimension_numbers = #tpu.dot_dimension_numbers<[1], [0], [0], [1], [0, 0, 1, 1], [], []>} : vector<16x128xbf16>, vector<128x128xbf16>, vector<16x128xf32> -> vector<16x128xf32>
    %c0_13 = arith.constant 0 : index
    %c0_14 = arith.constant 0 : index
    %9 = vector.load %arg7[%c0_13, %c0_14] : memref<1x128xf32, #tpu.memory_space<vmem>>, vector<1x128xf32>
    %10 = vector.broadcast %9 : vector<1x128xf32> to vector<16x128xf32>
    %11 = arith.addf %8, %10 : vector<16x128xf32>
    %12 = vector.shape_cast %11 : vector<16x128xf32> to vector<1x16x128xf32>
    %c0_15 = arith.constant 0 : index
    %c0_16 = arith.constant 0 : index
    %c0_17 = arith.constant 0 : index
    %13 = vector.load %arg16[%c0_15, %c0_16, %c0_17] : memref<1x16x128xf32, #tpu.memory_space<vmem>>, vector<1x16x128xf32>
    tpu.vector_store %arg16[%c0_15, %c0_16, %c0_17], %12 {strides = array<i32>} : memref<1x16x128xf32, #tpu.memory_space<vmem>>, vector<1x16x128xf32>,
    %c0_18 = arith.constant 0 : index
    %c7 = arith.constant 7 : index
    %c0_19 = arith.constant 0 : index
    %14 = vector.load %arg15[%c0_18, %c7, %c0_19] : memref<1x24x128xf32, #tpu.memory_space<vmem>>, vector<1x16x128xf32>
    %15 = vector.shape_cast %14 : vector<1x16x128xf32> to vector<16x128xf32>
    %16 = arith.truncf %15 : vector<16x128xf32> to vector<16x128xbf16>
    %c0_20 = arith.constant 0 : index
    %c0_21 = arith.constant 0 : index
    %c0_22 = arith.constant 0 : index
    %17 = vector.load %arg2[%c0_20, %c0_21, %c0_22] : memref<2x128x128xbf16, #tpu.memory_space<vmem>>, vector<1x128x128xbf16>
    %18 = vector.shape_cast %17 : vector<1x128x128xbf16> to vector<128x128xbf16>
    %cst_23 = arith.constant dense<0.000000e+00> : vector<16x128xf32>
    %19 = tpu.matmul %16, %18, %cst_23 {dimension_numbers = #tpu.dot_dimension_numbers<[1], [0], [0], [1], [0, 0, 1, 1], [], []>} : vector<16x128xbf16>, vector<128x128xbf16>, vector<16x128xf32> -> vector<16x128xf32>
    %c0_24 = arith.constant 0 : index
    %c8_25 = arith.constant 8 : index
    %c0_26 = arith.constant 0 : index
    %20 = vector.load %arg15[%c0_24, %c8_25, %c0_26] : memref<1x24x128xf32, #tpu.memory_space<vmem>>, vector<1x16x128xf32>
    %21 = vector.shape_cast %20 : vector<1x16x128xf32> to vector<16x128xf32>
    %22 = arith.truncf %21 : vector<16x128xf32> to vector<16x128xbf16>
    %c1 = arith.constant 1 : index
    %c0_27 = arith.constant 0 : index
    %c0_28 = arith.constant 0 : index
    %23 = vector.load %arg2[%c1, %c0_27, %c0_28] : memref<2x128x128xbf16, #tpu.memory_space<vmem>>, vector<1x128x128xbf16>
    %24 = vector.shape_cast %23 : vector<1x128x128xbf16> to vector<128x128xbf16>
    %cst_29 = arith.constant dense<0.000000e+00> : vector<16x128xf32>
    %25 = tpu.matmul %22, %24, %cst_29 {dimension_numbers = #tpu.dot_dimension_numbers<[1], [0], [0], [1], [0, 0, 1, 1], [], []>} : vector<16x128xbf16>, vector<128x128xbf16>, vector<16x128xf32> -> vector<16x128xf32>
    %26 = arith.addf %19, %25 : vector<16x128xf32>
    %c0_30 = arith.constant 0 : index
    %c0_31 = arith.constant 0 : index
    %27 = vector.load %arg3[%c0_30, %c0_31] : memref<1x128xf32, #tpu.memory_space<vmem>>, vector<1x128xf32>
    %28 = vector.broadcast %27 : vector<1x128xf32> to vector<16x128xf32>
    %29 = arith.addf %26, %28 : vector<16x128xf32>
    %cst_32 = arith.constant 0.000000e+00 : f32
    %30 = vector.broadcast %cst_32 : f32 to vector<16x128xf32>
    %31 = arith.maximumf %29, %30 : vector<16x128xf32>
    %32 = vector.shape_cast %31 : vector<16x128xf32> to vector<1x16x128xf32>
    %c0_33 = arith.constant 0 : index
    %c8_34 = arith.constant 8 : index
    %c0_35 = arith.constant 0 : index
    %33 = vector.load %arg15[%c0_33, %c8_34, %c0_35] : memref<1x24x128xf32, #tpu.memory_space<vmem>>, vector<1x16x128xf32>
    tpu.vector_store %arg15[%c0_33, %c8_34, %c0_35], %32 {strides = array<i32>} : memref<1x24x128xf32, #tpu.memory_space<vmem>>, vector<1x16x128xf32>,
    %c0_36 = arith.constant 0 : index
    %c7_37 = arith.constant 7 : index
    %c0_38 = arith.constant 0 : index
    %34 = vector.load %arg15[%c0_36, %c7_37, %c0_38] : memref<1x24x128xf32, #tpu.memory_space<vmem>>, vector<1x16x128xf32>
    %35 = vector.shape_cast %34 : vector<1x16x128xf32> to vector<16x128xf32>
    %36 = arith.truncf %35 : vector<16x128xf32> to vector<16x128xbf16>
    %c0_39 = arith.constant 0 : index
    %c0_40 = arith.constant 0 : index
    %c0_41 = arith.constant 0 : index
    %37 = vector.load %arg4[%c0_39, %c0_40, %c0_41] : memref<2x128x128xbf16, #tpu.memory_space<vmem>>, vector<1x128x128xbf16>
    %38 = vector.shape_cast %37 : vector<1x128x128xbf16> to vector<128x128xbf16>
    %cst_42 = arith.constant dense<0.000000e+00> : vector<16x128xf32>
    %39 = tpu.matmul %36, %38, %cst_42 {dimension_numbers = #tpu.dot_dimension_numbers<[1], [0], [0], [1], [0, 0, 1, 1], [], []>} : vector<16x128xbf16>, vector<128x128xbf16>, vector<16x128xf32> -> vector<16x128xf32>
    %c0_43 = arith.constant 0 : index
    %c8_44 = arith.constant 8 : index
    %c0_45 = arith.constant 0 : index
    %40 = vector.load %arg15[%c0_43, %c8_44, %c0_45] : memref<1x24x128xf32, #tpu.memory_space<vmem>>, vector<1x16x128xf32>
    %41 = vector.shape_cast %40 : vector<1x16x128xf32> to vector<16x128xf32>
    %42 = arith.truncf %41 : vector<16x128xf32> to vector<16x128xbf16>
    %c1_46 = arith.constant 1 : index
    %c0_47 = arith.constant 0 : index
    %c0_48 = arith.constant 0 : index
    %43 = vector.load %arg4[%c1_46, %c0_47, %c0_48] : memref<2x128x128xbf16, #tpu.memory_space<vmem>>, vector<1x128x128xbf16>
    %44 = vector.shape_cast %43 : vector<1x128x128xbf16> to vector<128x128xbf16>
    %cst_49 = arith.constant dense<0.000000e+00> : vector<16x128xf32>
    %45 = tpu.matmul %42, %44, %cst_49 {dimension_numbers = #tpu.dot_dimension_numbers<[1], [0], [0], [1], [0, 0, 1, 1], [], []>} : vector<16x128xbf16>, vector<128x128xbf16>, vector<16x128xf32> -> vector<16x128xf32>
    %46 = arith.addf %39, %45 : vector<16x128xf32>
    %c0_50 = arith.constant 0 : index
    %c0_51 = arith.constant 0 : index
    %47 = vector.load %arg5[%c0_50, %c0_51] : memref<1x128xf32, #tpu.memory_space<vmem>>, vector<1x128xf32>
    %48 = vector.broadcast %47 : vector<1x128xf32> to vector<16x128xf32>
    %49 = arith.addf %46, %48 : vector<16x128xf32>
    %cst_52 = arith.constant 0.000000e+00 : f32
    %50 = vector.broadcast %cst_52 : f32 to vector<16x128xf32>
    %51 = arith.maximumf %49, %50 : vector<16x128xf32>
    %c0_53 = arith.constant 0 : index
    %c0_54 = arith.constant 0 : index
    %c0_55 = arith.constant 0 : index
    %52 = vector.load %arg16[%c0_53, %c0_54, %c0_55] : memref<1x16x128xf32, #tpu.memory_space<vmem>>, vector<1x16x128xf32>
    %53 = vector.shape_cast %52 : vector<1x16x128xf32> to vector<16x128xf32>
    %54 = arith.addf %51, %53 : vector<16x128xf32>
    %cst_56 = arith.constant 0.000000e+00 : f32
    %55 = vector.broadcast %cst_56 : f32 to vector<16x128xf32>
    %56 = arith.maximumf %54, %55 : vector<16x128xf32>
    %57 = vector.shape_cast %56 : vector<16x128xf32> to vector<1x16x128xf32>
    %c0_57 = arith.constant 0 : index
    %c8_58 = arith.constant 8 : index
    %c0_59 = arith.constant 0 : index
    %58 = vector.load %arg15[%c0_57, %c8_58, %c0_59] : memref<1x24x128xf32, #tpu.memory_space<vmem>>, vector<1x16x128xf32>
    tpu.vector_store %arg15[%c0_57, %c8_58, %c0_59], %57 {strides = array<i32>} : memref<1x24x128xf32, #tpu.memory_space<vmem>>, vector<1x16x128xf32>,
    %c0_60 = arith.constant 0 : index
    %c8_61 = arith.constant 8 : index
    %c0_62 = arith.constant 0 : index
    %59 = vector.load %arg15[%c0_60, %c8_61, %c0_62] : memref<1x24x128xf32, #tpu.memory_space<vmem>>, vector<1x16x128xf32>
    %60 = vector.shape_cast %59 : vector<1x16x128xf32> to vector<16x128xf32>
    %61 = vector.shape_cast %60 : vector<16x128xf32> to vector<1x16x128xf32>
    %c0_63 = arith.constant 0 : index
    %c0_64 = arith.constant 0 : index
    %c0_65 = arith.constant 0 : index
    %62 = vector.load %arg16[%c0_63, %c0_64, %c0_65] : memref<1x16x128xf32, #tpu.memory_space<vmem>>, vector<1x16x128xf32>
    tpu.vector_store %arg16[%c0_63, %c0_64, %c0_65], %61 {strides = array<i32>} : memref<1x16x128xf32, #tpu.memory_space<vmem>>, vector<1x16x128xf32>,
    %c0_66 = arith.constant 0 : index
    %c6 = arith.constant 6 : index
    %c0_67 = arith.constant 0 : index
    %63 = vector.load %arg15[%c0_66, %c6, %c0_67] : memref<1x24x128xf32, #tpu.memory_space<vmem>>, vector<1x16x128xf32>
    %64 = vector.shape_cast %63 : vector<1x16x128xf32> to vector<16x128xf32>
    %65 = arith.truncf %64 : vector<16x128xf32> to vector<16x128xbf16>
    %c0_68 = arith.constant 0 : index
    %c0_69 = arith.constant 0 : index
    %c0_70 = arith.constant 0 : index
    %66 = vector.load %arg8[%c0_68, %c0_69, %c0_70] : memref<2x128x128xbf16, #tpu.memory_space<vmem>>, vector<1x128x128xbf16>
    %67 = vector.shape_cast %66 : vector<1x128x128xbf16> to vector<128x128xbf16>
    %cst_71 = arith.constant dense<0.000000e+00> : vector<16x128xf32>
    %68 = tpu.matmul %65, %67, %cst_71 {dimension_numbers = #tpu.dot_dimension_numbers<[1], [0], [0], [1], [0, 0, 1, 1], [], []>} : vector<16x128xbf16>, vector<128x128xbf16>, vector<16x128xf32> -> vector<16x128xf32>
    %c0_72 = arith.constant 0 : index
    %c8_73 = arith.constant 8 : index
    %c0_74 = arith.constant 0 : index
    %69 = vector.load %arg15[%c0_72, %c8_73, %c0_74] : memref<1x24x128xf32, #tpu.memory_space<vmem>>, vector<1x16x128xf32>
    %70 = vector.shape_cast %69 : vector<1x16x128xf32> to vector<16x128xf32>
    %71 = arith.truncf %70 : vector<16x128xf32> to vector<16x128xbf16>
    %c1_75 = arith.constant 1 : index
    %c0_76 = arith.constant 0 : index
    %c0_77 = arith.constant 0 : index
    %72 = vector.load %arg8[%c1_75, %c0_76, %c0_77] : memref<2x128x128xbf16, #tpu.memory_space<vmem>>, vector<1x128x128xbf16>
    %73 = vector.shape_cast %72 : vector<1x128x128xbf16> to vector<128x128xbf16>
    %cst_78 = arith.constant dense<0.000000e+00> : vector<16x128xf32>
    %74 = tpu.matmul %71, %73, %cst_78 {dimension_numbers = #tpu.dot_dimension_numbers<[1], [0], [0], [1], [0, 0, 1, 1], [], []>} : vector<16x128xbf16>, vector<128x128xbf16>, vector<16x128xf32> -> vector<16x128xf32>
    %75 = arith.addf %68, %74 : vector<16x128xf32>
    %c0_79 = arith.constant 0 : index
    %c0_80 = arith.constant 0 : index
    %76 = vector.load %arg9[%c0_79, %c0_80] : memref<1x128xf32, #tpu.memory_space<vmem>>, vector<1x128xf32>
    %77 = vector.broadcast %76 : vector<1x128xf32> to vector<16x128xf32>
    %78 = arith.addf %75, %77 : vector<16x128xf32>
    %cst_81 = arith.constant 0.000000e+00 : f32
    %79 = vector.broadcast %cst_81 : f32 to vector<16x128xf32>
    %80 = arith.maximumf %78, %79 : vector<16x128xf32>
    %81 = vector.shape_cast %80 : vector<16x128xf32> to vector<1x16x128xf32>
    %c0_82 = arith.constant 0 : index
    %c8_83 = arith.constant 8 : index
    %c0_84 = arith.constant 0 : index
    %82 = vector.load %arg15[%c0_82, %c8_83, %c0_84] : memref<1x24x128xf32, #tpu.memory_space<vmem>>, vector<1x16x128xf32>
    tpu.vector_store %arg15[%c0_82, %c8_83, %c0_84], %81 {strides = array<i32>} : memref<1x24x128xf32, #tpu.memory_space<vmem>>, vector<1x16x128xf32>,
    %c0_85 = arith.constant 0 : index
    %c6_86 = arith.constant 6 : index
    %c0_87 = arith.constant 0 : index
    %83 = vector.load %arg15[%c0_85, %c6_86, %c0_87] : memref<1x24x128xf32, #tpu.memory_space<vmem>>, vector<1x16x128xf32>
    %84 = vector.shape_cast %83 : vector<1x16x128xf32> to vector<16x128xf32>
    %85 = arith.truncf %84 : vector<16x128xf32> to vector<16x128xbf16>
    %c0_88 = arith.constant 0 : index
    %c0_89 = arith.constant 0 : index
    %c0_90 = arith.constant 0 : index
    %86 = vector.load %arg10[%c0_88, %c0_89, %c0_90] : memref<2x128x128xbf16, #tpu.memory_space<vmem>>, vector<1x128x128xbf16>
    %87 = vector.shape_cast %86 : vector<1x128x128xbf16> to vector<128x128xbf16>
    %cst_91 = arith.constant dense<0.000000e+00> : vector<16x128xf32>
    %88 = tpu.matmul %85, %87, %cst_91 {dimension_numbers = #tpu.dot_dimension_numbers<[1], [0], [0], [1], [0, 0, 1, 1], [], []>} : vector<16x128xbf16>, vector<128x128xbf16>, vector<16x128xf32> -> vector<16x128xf32>
    %c0_92 = arith.constant 0 : index
    %c8_93 = arith.constant 8 : index
    %c0_94 = arith.constant 0 : index
    %89 = vector.load %arg15[%c0_92, %c8_93, %c0_94] : memref<1x24x128xf32, #tpu.memory_space<vmem>>, vector<1x16x128xf32>
    %90 = vector.shape_cast %89 : vector<1x16x128xf32> to vector<16x128xf32>
    %91 = arith.truncf %90 : vector<16x128xf32> to vector<16x128xbf16>
    %c1_95 = arith.constant 1 : index
    %c0_96 = arith.constant 0 : index
    %c0_97 = arith.constant 0 : index
    %92 = vector.load %arg10[%c1_95, %c0_96, %c0_97] : memref<2x128x128xbf16, #tpu.memory_space<vmem>>, vector<1x128x128xbf16>
    %93 = vector.shape_cast %92 : vector<1x128x128xbf16> to vector<128x128xbf16>
    %cst_98 = arith.constant dense<0.000000e+00> : vector<16x128xf32>
    %94 = tpu.matmul %91, %93, %cst_98 {dimension_numbers = #tpu.dot_dimension_numbers<[1], [0], [0], [1], [0, 0, 1, 1], [], []>} : vector<16x128xbf16>, vector<128x128xbf16>, vector<16x128xf32> -> vector<16x128xf32>
    %95 = arith.addf %88, %94 : vector<16x128xf32>
    %c0_99 = arith.constant 0 : index
    %c0_100 = arith.constant 0 : index
    %96 = vector.load %arg11[%c0_99, %c0_100] : memref<1x128xf32, #tpu.memory_space<vmem>>, vector<1x128xf32>
    %97 = vector.broadcast %96 : vector<1x128xf32> to vector<16x128xf32>
    %98 = arith.addf %95, %97 : vector<16x128xf32>
    %cst_101 = arith.constant 0.000000e+00 : f32
    %99 = vector.broadcast %cst_101 : f32 to vector<16x128xf32>
    %100 = arith.maximumf %98, %99 : vector<16x128xf32>
    %c0_102 = arith.constant 0 : index
    %c0_103 = arith.constant 0 : index
    %c0_104 = arith.constant 0 : index
    %101 = vector.load %arg16[%c0_102, %c0_103, %c0_104] : memref<1x16x128xf32, #tpu.memory_space<vmem>>, vector<1x16x128xf32>
    %102 = vector.shape_cast %101 : vector<1x16x128xf32> to vector<16x128xf32>
    %103 = arith.addf %100, %102 : vector<16x128xf32>
    %cst_105 = arith.constant 0.000000e+00 : f32
    %104 = vector.broadcast %cst_105 : f32 to vector<16x128xf32>
    %105 = arith.maximumf %103, %104 : vector<16x128xf32>
    %106 = vector.shape_cast %105 : vector<16x128xf32> to vector<1x16x128xf32>
    %c0_106 = arith.constant 0 : index
    %c8_107 = arith.constant 8 : index
    %c0_108 = arith.constant 0 : index
    %107 = vector.load %arg15[%c0_106, %c8_107, %c0_108] : memref<1x24x128xf32, #tpu.memory_space<vmem>>, vector<1x16x128xf32>
    tpu.vector_store %arg15[%c0_106, %c8_107, %c0_108], %106 {strides = array<i32>} : memref<1x24x128xf32, #tpu.memory_space<vmem>>, vector<1x16x128xf32>,
    %c0_109 = arith.constant 0 : index
    %c8_110 = arith.constant 8 : index
    %c0_111 = arith.constant 0 : index
    %108 = vector.load %arg15[%c0_109, %c8_110, %c0_111] : memref<1x24x128xf32, #tpu.memory_space<vmem>>, vector<1x16x128xf32>
    %109 = vector.shape_cast %108 : vector<1x16x128xf32> to vector<16x128xf32>
    %110 = arith.truncf %109 : vector<16x128xf32> to vector<16x128xbf16>
    %c0_112 = arith.constant 0 : index
    %c0_113 = arith.constant 0 : index
    %111 = vector.load %arg12[%c0_112, %c0_113] : memref<128x128xbf16, #tpu.memory_space<vmem>>, vector<128x128xbf16>
    %cst_114 = arith.constant dense<0.000000e+00> : vector<16x128xf32>
    %112 = tpu.matmul %110, %111, %cst_114 {dimension_numbers = #tpu.dot_dimension_numbers<[1], [0], [0], [1], [0, 0, 1, 1], [], []>} : vector<16x128xbf16>, vector<128x128xbf16>, vector<16x128xf32> -> vector<16x128xf32>
    %c0_115 = arith.constant 0 : index
    %c0_116 = arith.constant 0 : index
    %113 = vector.load %arg13[%c0_115, %c0_116] : memref<1x128xf32, #tpu.memory_space<vmem>>, vector<1x128xf32>
    %114 = vector.broadcast %113 : vector<1x128xf32> to vector<16x128xf32>
    %115 = arith.addf %112, %114 : vector<16x128xf32>
    %cst_117 = arith.constant 5.000000e-01 : f32
    %116 = vector.broadcast %cst_117 : f32 to vector<16x128xf32>
    %117 = arith.mulf %116, %115 : vector<16x128xf32>
    %118 = math.tanh %117 : vector<16x128xf32>
    %cst_118 = arith.constant 5.000000e-01 : f32
    %119 = vector.broadcast %cst_118 : f32 to vector<16x128xf32>
    %120 = arith.mulf %119, %118 : vector<16x128xf32>
    %cst_119 = arith.constant 5.000000e-01 : f32
    %121 = vector.broadcast %cst_119 : f32 to vector<16x128xf32>
    %122 = arith.addf %120, %121 : vector<16x128xf32>
    %123 = vector.shape_cast %122 : vector<16x128xf32> to vector<1x16x128xf32>
    %c0_120 = arith.constant 0 : index
    %c0_121 = arith.constant 0 : index
    %c0_122 = arith.constant 0 : index
    %124 = vector.load %arg14[%c0_120, %c0_121, %c0_122] : memref<1x16x128xf32, #tpu.memory_space<vmem>>, vector<1x16x128xf32>
    tpu.vector_store %arg14[%c0_120, %c0_121, %c0_122], %123 {strides = array<i32>} : memref<1x16x128xf32, #tpu.memory_space<vmem>>, vector<1x16x128xf32>,
    return
  }
  func.func @transform_0(%arg0: i32) -> (i32, i32, i32) {
    %c0_i32 = arith.constant 0 : i32
    %c0_i32_0 = arith.constant 0 : i32
    %c0_i32_1 = arith.constant 0 : i32
    return %arg0, %c0_i32, %c0_i32_0 : i32, i32, i32
  }
  func.func @transform_1(%arg0: i32) -> (i32, i32, i32) {
    %c0_i32 = arith.constant 0 : i32
    %c0_i32_0 = arith.constant 0 : i32
    %c0_i32_1 = arith.constant 0 : i32
    %c0_i32_2 = arith.constant 0 : i32
    return %c0_i32, %c0_i32_0, %c0_i32_1 : i32, i32, i32
  }
  func.func @transform_2(%arg0: i32) -> (i32, i32) {
    %c0_i32 = arith.constant 0 : i32
    %c0_i32_0 = arith.constant 0 : i32
    %c0_i32_1 = arith.constant 0 : i32
    return %c0_i32, %c0_i32_0 : i32, i32
  }
  func.func @transform_3(%arg0: i32) -> (i32, i32, i32) {
    %c0_i32 = arith.constant 0 : i32
    %c0_i32_0 = arith.constant 0 : i32
    %c0_i32_1 = arith.constant 0 : i32
    %c0_i32_2 = arith.constant 0 : i32
    return %c0_i32, %c0_i32_0, %c0_i32_1 : i32, i32, i32
  }
  func.func @transform_4(%arg0: i32) -> (i32, i32) {
    %c0_i32 = arith.constant 0 : i32
    %c0_i32_0 = arith.constant 0 : i32
    %c0_i32_1 = arith.constant 0 : i32
    return %c0_i32, %c0_i32_0 : i32, i32
  }
  func.func @transform_5(%arg0: i32) -> (i32, i32) {
    %c0_i32 = arith.constant 0 : i32
    %c0_i32_0 = arith.constant 0 : i32
    %c0_i32_1 = arith.constant 0 : i32
    return %c0_i32, %c0_i32_0 : i32, i32
  }
  func.func @transform_6(%arg0: i32) -> (i32, i32) {
    %c0_i32 = arith.constant 0 : i32
    %c0_i32_0 = arith.constant 0 : i32
    %c0_i32_1 = arith.constant 0 : i32
    return %c0_i32, %c0_i32_0 : i32, i32
  }
  func.func @transform_7(%arg0: i32) -> (i32, i32, i32) {
    %c0_i32 = arith.constant 0 : i32
    %c0_i32_0 = arith.constant 0 : i32
    %c0_i32_1 = arith.constant 0 : i32
    %c0_i32_2 = arith.constant 0 : i32
    return %c0_i32, %c0_i32_0, %c0_i32_1 : i32, i32, i32
  }
  func.func @transform_8(%arg0: i32) -> (i32, i32) {
    %c0_i32 = arith.constant 0 : i32
    %c0_i32_0 = arith.constant 0 : i32
    %c0_i32_1 = arith.constant 0 : i32
    return %c0_i32, %c0_i32_0 : i32, i32
  }
  func.func @transform_9(%arg0: i32) -> (i32, i32, i32) {
    %c0_i32 = arith.constant 0 : i32
    %c0_i32_0 = arith.constant 0 : i32
    %c0_i32_1 = arith.constant 0 : i32
    %c0_i32_2 = arith.constant 0 : i32
    return %c0_i32, %c0_i32_0, %c0_i32_1 : i32, i32, i32
  }
  func.func @transform_10(%arg0: i32) -> (i32, i32) {
    %c0_i32 = arith.constant 0 : i32
    %c0_i32_0 = arith.constant 0 : i32
    %c0_i32_1 = arith.constant 0 : i32
    return %c0_i32, %c0_i32_0 : i32, i32
  }
  func.func @transform_11(%arg0: i32) -> (i32, i32) {
    %c0_i32 = arith.constant 0 : i32
    %c0_i32_0 = arith.constant 0 : i32
    %c0_i32_1 = arith.constant 0 : i32
    return %c0_i32, %c0_i32_0 : i32, i32
  }
  func.func @transform_12(%arg0: i32) -> (i32, i32) {
    %c0_i32 = arith.constant 0 : i32
    %c0_i32_0 = arith.constant 0 : i32
    %c0_i32_1 = arith.constant 0 : i32
    return %c0_i32, %c0_i32_0 : i32, i32
  }
  func.func @transform_13(%arg0: i32) -> (i32, i32, i32) {
    %c0_i32 = arith.constant 0 : i32
    %c0_i32_0 = arith.constant 0 : i32
    %c0_i32_1 = arith.constant 0 : i32
    return %arg0, %c0_i32, %c0_i32_0 : i32, i32, i32
  }
}

</mosaic_0001>

<llo_original>
// kernel: tpu_custom_call.1
$region0: #{tpu_custom_call.1}
  #allocation0 [shape = 'u32[]', space=smem, size = 0x4, offset = 0x4, fixed_abs, tag = 'smem constant byte address 0x4 - core index']
  #allocation1 [shape = 'u32[72,128]{1,0:T(1,128)}', space=vmem, size = 0x9000, scoped, tag = 'internal scratch']
  #allocation2 [shape = 'f32[1,24,128]{2,1,0:T(8,128)}', space=vmem, size = 0x3000, scoped, tag = 'scratch operand']
  #allocation3 [shape = 'f32[1,16,128]{2,1,0:T(8,128)}', space=vmem, size = 0x2000, scoped, tag = 'scratch operand']
  %s0 = inlined_call_operand.hbm [shape: f32[2,16,128], index: 0, kind: input, shape index: {}]
  %s1 = inlined_call_operand.hbm [shape: bf16[2,128,128], index: 1, kind: input, shape index: {}]
  %s2 = inlined_call_operand.vmem [shape: f32[1,128], index: 2, kind: input, shape index: {}]
  %s3 = inlined_call_operand.hbm [shape: bf16[2,128,128], index: 3, kind: input, shape index: {}]
  %s4 = inlined_call_operand.vmem [shape: f32[1,128], index: 4, kind: input, shape index: {}]
  %s5 = inlined_call_operand.hbm [shape: bf16[128,128], index: 5, kind: input, shape index: {}]
  %s6 = inlined_call_operand.vmem [shape: f32[1,128], index: 6, kind: input, shape index: {}]
  %s7 = inlined_call_operand.hbm [shape: bf16[2,128,128], index: 7, kind: input, shape index: {}]
  %s8 = inlined_call_operand.vmem [shape: f32[1,128], index: 8, kind: input, shape index: {}]
  %s9 = inlined_call_operand.hbm [shape: bf16[2,128,128], index: 9, kind: input, shape index: {}]
  %s10 = inlined_call_operand.vmem [shape: f32[1,128], index: 10, kind: input, shape index: {}]
  %s11 = inlined_call_operand.hbm [shape: bf16[128,128], index: 11, kind: input, shape index: {}]
  %s12 = inlined_call_operand.vmem [shape: f32[1,128], index: 12, kind: input, shape index: {}]
  %s13 = inlined_call_operand.hbm [shape: f32[2,16,128], index: 13, kind: output, shape index: {}]
  %s14 = sld [smem:[#allocation0]]
  $region113: #{tpu_custom_call.1} parent=0
    _
  %s16 = ssub.s32 1, %s14
  %s17 = scalar_select 0, %s16, %s14
  $region1: #{tpu_custom_call.1} parent=0
    #allocation4 [shape = 'u8[16384]{0}', space=vmem, size = 0x4000, scoped, tag = 'input window, operand 0']
    #allocation5 [shape = 's32[2]{0}', space=sflag, size = 0x8, scoped, tag = 'scoped memory for tpu_custom_call.1']
    #allocation6 [shape = 's32[2]{0}', space=sflag, size = 0x8, scoped, tag = 'scoped memory for tpu_custom_call.1']
    #allocation7 [shape = 'u8[65536]{0}', space=vmem, size = 0x10000, scoped, tag = 'input window, operand 1, single buffered']
    #allocation8 [shape = 's32[1]{0}', space=sflag, size = 0x4, scoped, tag = 'scoped memory for tpu_custom_call.1']
    #allocation9 [shape = 'u8[65536]{0}', space=vmem, size = 0x10000, scoped, tag = 'input window, operand 3, single buffered']
    #allocation10 [shape = 'u8[32768]{0}', space=vmem, size = 0x8000, scoped, tag = 'input window, operand 5, single buffered']
    #allocation11 [shape = 's32[1]{0}', space=sflag, size = 0x4, scoped, tag = 'scoped memory for tpu_custom_call.1']
    #allocation12 [shape = 'u8[65536]{0}', space=vmem, size = 0x10000, scoped, tag = 'input window, operand 7, single buffered']
    #allocation13 [shape = 'u8[65536]{0}', space=vmem, size = 0x10000, scoped, tag = 'input window, operand 9, single buffered']
    #allocation14 [shape = 's32[1]{0}', space=sflag, size = 0x4, scoped, tag = 'scoped memory for tpu_custom_call.1']
    #allocation15 [shape = 'u8[32768]{0}', space=vmem, size = 0x8000, scoped, tag = 'input window, operand 11, single buffered']
    #allocation16 [shape = 'u8[16384]{0}', space=vmem, size = 0x4000, scoped, tag = 'output window, operand 0']
    %18 = vsyncpa [#allocation5], 0
    %s19 = scalar_lea.sflag [#allocation5], 1
    %20 = vsyncpa %s19, 0
    %21 = vsyncpa [#allocation8], 0
    %22 = vsyncpa [#allocation11], 0
    %23 = vsyncpa [#allocation14], 0
    %24 = vsyncpa [#allocation6], 0
    %s25 = scalar_lea.sflag [#allocation6], 1
    %26 = vsyncpa %s25, 0
    loop: start=0, step=1, limit=4
    $region2: #{tpu_custom_call.1} parent=1 // loop_pre_header
      _
    $region3: #{tpu_custom_call.1} parent=1 // loop_header
      %s28 = sphi 0, %s32
      %p29 = scmp.ge.s32.totalorder %s28, 4
      %s38 = sphi 0, %s40
      %s41 = sphi 0, %s38
      %s42 = sphi 0, %s41
      %s58 = sphi 0, %s42
      %s62 = sphi 0, %s62
      %s64 = sphi 0, %s62
      %s65 = sphi 0, %s64
      %s79 = sphi 0, %s65
      %s83 = sphi 0, %s83
      %s85 = sphi 0, %s83
      %s86 = sphi 0, %s85
      %s100 = sphi 0, %s86
      %s104 = sphi 0, %s104
      %s106 = sphi 0, %s104
      %s107 = sphi 0, %s106
      %s121 = sphi 0, %s107
      %s125 = sphi 0, %s125
      %s127 = sphi 0, %s125
      %s128 = sphi 0, %s127
      %s142 = sphi 0, %s128
      %s146 = sphi 0, %s146
      %s148 = sphi 0, %s146
      %s149 = sphi 0, %s148
      %s163 = sphi 0, %s149
      %s167 = sphi 0, %s167
      %s169 = sphi 0, %s167
      %s170 = sphi 0, %s169
      %s184 = sphi 0, %s170
      %s188 = sphi 0, %s188
      %s190 = sphi 0, %s188
      %s191 = sphi 0, %s190
      %s205 = sphi 0, %s191
      %s209 = sphi 0, %s209
      %s211 = sphi 0, %s209
      %s212 = sphi 0, %s211
      %s226 = sphi 0, %s212
      %s230 = sphi 0, %s230
      %s232 = sphi 0, %s230
      %s233 = sphi 0, %s232
      %s247 = sphi 0, %s233
      %s251 = sphi 0, %s251
      %s253 = sphi 0, %s251
      %s254 = sphi 0, %s253
      %s268 = sphi 0, %s254
      %s272 = sphi 0, %s272
      %s274 = sphi 0, %s272
      %s275 = sphi 0, %s274
      %s289 = sphi 0, %s275
      %s293 = sphi 0, %s293
      %s295 = sphi 0, %s293
      %s296 = sphi 0, %s295
      %s310 = sphi 0, %s296
      %s316 = sphi 0, %s318
      %s319 = sphi 0, %s316
      %s320 = sphi 0, %s319
      %s336 = sphi 0, %s320
    $region4: #{tpu_custom_call.1} parent=1 // loop_header_branch
      %31 = sbr.rel (%p29) target = $region8
    $region5: #{tpu_custom_call.1} parent=1 // loop_body
      %s33 = ssub.s32 %s28, 1
      %s34 = ssub.s32 %s28, 2
      %s35 = sadd.s32 %s28, 1
      %s36 = ssub.s32 %s28, %s35
      %p37 = scmp.eq.s32.totalorder %s36, 0
      %s39 = sadd.s32 %s38, 1
      %s40 = scalar_select %p37, %s38, %s39
      %p43 = pneg %p37
      %p44 = scmp.eq.s32.totalorder %s28, 1
      %p45 = por %p43, %p44
      %p46 = scmp.ne.s32.totalorder %s38, %s41
      %p47 = scmp.eq.s32.totalorder %s28, 0
      %p48 = por %p46, %p47
      %p49 = scmp.ne.s32.totalorder %s38, %s41
      %p50 = scmp.eq.s32.totalorder %s33, 1
      %p51 = por %p49, %p50
      %p52 = scmp.ne.s32.totalorder %s41, %s42
      %p53 = scmp.eq.s32.totalorder %s33, 0
      %p54 = por %p52, %p53
      %p55 = scmp.ne.s32.totalorder %s41, %s42
      %p56 = scmp.eq.s32.totalorder %s34, 1
      %p57 = por %p55, %p56
      %p59 = scmp.ne.s32.totalorder %s42, %s58
      %p60 = scmp.eq.s32.totalorder %s34, 0
      %p61 = por %p59, %p60
      %s63 = sadd.s32 %s62, 1
      %p66 = scmp.eq.s32.totalorder %s28, 1
      %p67 = scmp.ne.s32.totalorder %s62, %s64
      %p68 = scmp.eq.s32.totalorder %s28, 0
      %p69 = por %p67, %p68
      %p70 = scmp.ne.s32.totalorder %s62, %s64
      %p71 = scmp.eq.s32.totalorder %s33, 1
      %p72 = por %p70, %p71
      %p73 = scmp.ne.s32.totalorder %s64, %s65
      %p74 = scmp.eq.s32.totalorder %s33, 0
      %p75 = por %p73, %p74
      %p76 = scmp.ne.s32.totalorder %s64, %s65
      %p77 = scmp.eq.s32.totalorder %s34, 1
      %p78 = por %p76, %p77
      %p80 = scmp.ne.s32.totalorder %s65, %s79
      %p81 = scmp.eq.s32.totalorder %s34, 0
      %p82 = por %p80, %p81
      %s84 = sadd.s32 %s83, 1
      %p87 = scmp.eq.s32.totalorder %s28, 1
      %p88 = scmp.ne.s32.totalorder %s83, %s85
      %p89 = scmp.eq.s32.totalorder %s28, 0
      %p90 = por %p88, %p89
      %p91 = scmp.ne.s32.totalorder %s83, %s85
      %p92 = scmp.eq.s32.totalorder %s33, 1
      %p93 = por %p91, %p92
      %p94 = scmp.ne.s32.totalorder %s85, %s86
      %p95 = scmp.eq.s32.totalorder %s33, 0
      %p96 = por %p94, %p95
      %p97 = scmp.ne.s32.totalorder %s85, %s86
      %p98 = scmp.eq.s32.totalorder %s34, 1
      %p99 = por %p97, %p98
      %p101 = scmp.ne.s32.totalorder %s86, %s100
      %p102 = scmp.eq.s32.totalorder %s34, 0
      %p103 = por %p101, %p102
      %s105 = sadd.s32 %s104, 1
      %p108 = scmp.eq.s32.totalorder %s28, 1
      %p109 = scmp.ne.s32.totalorder %s104, %s106
      %p110 = scmp.eq.s32.totalorder %s28, 0
      %p111 = por %p109, %p110
      %p112 = scmp.ne.s32.totalorder %s104, %s106
      %p113 = scmp.eq.s32.totalorder %s33, 1
      %p114 = por %p112, %p113
      %p115 = scmp.ne.s32.totalorder %s106, %s107
      %p116 = scmp.eq.s32.totalorder %s33, 0
      %p117 = por %p115, %p116
      %p118 = scmp.ne.s32.totalorder %s106, %s107
      %p119 = scmp.eq.s32.totalorder %s34, 1
      %p120 = por %p118, %p119
      %p122 = scmp.ne.s32.totalorder %s107, %s121
      %p123 = scmp.eq.s32.totalorder %s34, 0
      %p124 = por %p122, %p123
      %s126 = sadd.s32 %s125, 1
      %p129 = scmp.eq.s32.totalorder %s28, 1
      %p130 = scmp.ne.s32.totalorder %s125, %s127
      %p131 = scmp.eq.s32.totalorder %s28, 0
      %p132 = por %p130, %p131
      %p133 = scmp.ne.s32.totalorder %s125, %s127
      %p134 = scmp.eq.s32.totalorder %s33, 1
      %p135 = por %p133, %p134
      %p136 = scmp.ne.s32.totalorder %s127, %s128
      %p137 = scmp.eq.s32.totalorder %s33, 0
      %p138 = por %p136, %p137
      %p139 = scmp.ne.s32.totalorder %s127, %s128
      %p140 = scmp.eq.s32.totalorder %s34, 1
      %p141 = por %p139, %p140
      %p143 = scmp.ne.s32.totalorder %s128, %s142
      %p144 = scmp.eq.s32.totalorder %s34, 0
      %p145 = por %p143, %p144
      %s147 = sadd.s32 %s146, 1
      %p150 = scmp.eq.s32.totalorder %s28, 1
      %p151 = scmp.ne.s32.totalorder %s146, %s148
      %p152 = scmp.eq.s32.totalorder %s28, 0
      %p153 = por %p151, %p152
      %p154 = scmp.ne.s32.totalorder %s146, %s148
      %p155 = scmp.eq.s32.totalorder %s33, 1
      %p156 = por %p154, %p155
      %p157 = scmp.ne.s32.totalorder %s148, %s149
      %p158 = scmp.eq.s32.totalorder %s33, 0
      %p159 = por %p157, %p158
      %p160 = scmp.ne.s32.totalorder %s148, %s149
      %p161 = scmp.eq.s32.totalorder %s34, 1
      %p162 = por %p160, %p161
      %p164 = scmp.ne.s32.totalorder %s149, %s163
      %p165 = scmp.eq.s32.totalorder %s34, 0
      %p166 = por %p164, %p165
      %s168 = sadd.s32 %s167, 1
      %p171 = scmp.eq.s32.totalorder %s28, 1
      %p172 = scmp.ne.s32.totalorder %s167, %s169
      %p173 = scmp.eq.s32.totalorder %s28, 0
      %p174 = por %p172, %p173
      %p175 = scmp.ne.s32.totalorder %s167, %s169
      %p176 = scmp.eq.s32.totalorder %s33, 1
      %p177 = por %p175, %p176
      %p178 = scmp.ne.s32.totalorder %s169, %s170
      %p179 = scmp.eq.s32.totalorder %s33, 0
      %p180 = por %p178, %p179
      %p181 = scmp.ne.s32.totalorder %s169, %s170
      %p182 = scmp.eq.s32.totalorder %s34, 1
      %p183 = por %p181, %p182
      %p185 = scmp.ne.s32.totalorder %s170, %s184
      %p186 = scmp.eq.s32.totalorder %s34, 0
      %p187 = por %p185, %p186
      %s189 = sadd.s32 %s188, 1
      %p192 = scmp.eq.s32.totalorder %s28, 1
      %p193 = scmp.ne.s32.totalorder %s188, %s190
      %p194 = scmp.eq.s32.totalorder %s28, 0
      %p195 = por %p193, %p194
      %p196 = scmp.ne.s32.totalorder %s188, %s190
      %p197 = scmp.eq.s32.totalorder %s33, 1
      %p198 = por %p196, %p197
      %p199 = scmp.ne.s32.totalorder %s190, %s191
      %p200 = scmp.eq.s32.totalorder %s33, 0
      %p201 = por %p199, %p200
      %p202 = scmp.ne.s32.totalorder %s190, %s191
      %p203 = scmp.eq.s32.totalorder %s34, 1
      %p204 = por %p202, %p203
      %p206 = scmp.ne.s32.totalorder %s191, %s205
      %p207 = scmp.eq.s32.totalorder %s34, 0
      %p208 = por %p206, %p207
      %s210 = sadd.s32 %s209, 1
      %p213 = scmp.eq.s32.totalorder %s28, 1
      %p214 = scmp.ne.s32.totalorder %s209, %s211
      %p215 = scmp.eq.s32.totalorder %s28, 0
      %p216 = por %p214, %p215
      %p217 = scmp.ne.s32.totalorder %s209, %s211
      %p218 = scmp.eq.s32.totalorder %s33, 1
      %p219 = por %p217, %p218
      %p220 = scmp.ne.s32.totalorder %s211, %s212
      %p221 = scmp.eq.s32.totalorder %s33, 0
      %p222 = por %p220, %p221
      %p223 = scmp.ne.s32.totalorder %s211, %s212
      %p224 = scmp.eq.s32.totalorder %s34, 1
      %p225 = por %p223, %p224
      %p227 = scmp.ne.s32.totalorder %s212, %s226
      %p228 = scmp.eq.s32.totalorder %s34, 0
      %p229 = por %p227, %p228
      %s231 = sadd.s32 %s230, 1
      %p234 = scmp.eq.s32.totalorder %s28, 1
      %p235 = scmp.ne.s32.totalorder %s230, %s232
      %p236 = scmp.eq.s32.totalorder %s28, 0
      %p237 = por %p235, %p236
      %p238 = scmp.ne.s32.totalorder %s230, %s232
      %p239 = scmp.eq.s32.totalorder %s33, 1
      %p240 = por %p238, %p239
      %p241 = scmp.ne.s32.totalorder %s232, %s233
      %p242 = scmp.eq.s32.totalorder %s33, 0
      %p243 = por %p241, %p242
      %p244 = scmp.ne.s32.totalorder %s232, %s233
      %p245 = scmp.eq.s32.totalorder %s34, 1
      %p246 = por %p244, %p245
      %p248 = scmp.ne.s32.totalorder %s233, %s247
      %p249 = scmp.eq.s32.totalorder %s34, 0
      %p250 = por %p248, %p249
      %s252 = sadd.s32 %s251, 1
      %p255 = scmp.eq.s32.totalorder %s28, 1
      %p256 = scmp.ne.s32.totalorder %s251, %s253
      %p257 = scmp.eq.s32.totalorder %s28, 0
      %p258 = por %p256, %p257
      %p259 = scmp.ne.s32.totalorder %s251, %s253
      %p260 = scmp.eq.s32.totalorder %s33, 1
      %p261 = por %p259, %p260
      %p262 = scmp.ne.s32.totalorder %s253, %s254
      %p263 = scmp.eq.s32.totalorder %s33, 0
      %p264 = por %p262, %p263
      %p265 = scmp.ne.s32.totalorder %s253, %s254
      %p266 = scmp.eq.s32.totalorder %s34, 1
      %p267 = por %p265, %p266
      %p269 = scmp.ne.s32.totalorder %s254, %s268
      %p270 = scmp.eq.s32.totalorder %s34, 0
      %p271 = por %p269, %p270
      %s273 = sadd.s32 %s272, 1
      %p276 = scmp.eq.s32.totalorder %s28, 1
      %p277 = scmp.ne.s32.totalorder %s272, %s274
      %p278 = scmp.eq.s32.totalorder %s28, 0
      %p279 = por %p277, %p278
      %p280 = scmp.ne.s32.totalorder %s272, %s274
      %p281 = scmp.eq.s32.totalorder %s33, 1
      %p282 = por %p280, %p281
      %p283 = scmp.ne.s32.totalorder %s274, %s275
      %p284 = scmp.eq.s32.totalorder %s33, 0
      %p285 = por %p283, %p284
      %p286 = scmp.ne.s32.totalorder %s274, %s275
      %p287 = scmp.eq.s32.totalorder %s34, 1
      %p288 = por %p286, %p287
      %p290 = scmp.ne.s32.totalorder %s275, %s289
      %p291 = scmp.eq.s32.totalorder %s34, 0
      %p292 = por %p290, %p291
      %s294 = sadd.s32 %s293, 1
      %p297 = scmp.eq.s32.totalorder %s28, 1
      %p298 = scmp.ne.s32.totalorder %s293, %s295
      %p299 = scmp.eq.s32.totalorder %s28, 0
      %p300 = por %p298, %p299
      %p301 = scmp.ne.s32.totalorder %s293, %s295
      %p302 = scmp.eq.s32.totalorder %s33, 1
      %p303 = por %p301, %p302
      %p304 = scmp.ne.s32.totalorder %s295, %s296
      %p305 = scmp.eq.s32.totalorder %s33, 0
      %p306 = por %p304, %p305
      %p307 = scmp.ne.s32.totalorder %s295, %s296
      %p308 = scmp.eq.s32.totalorder %s34, 1
      %p309 = por %p307, %p308
      %p311 = scmp.ne.s32.totalorder %s296, %s310
      %p312 = scmp.eq.s32.totalorder %s34, 0
      %p313 = por %p311, %p312
      %s314 = ssub.s32 %s28, %s35
      %p315 = scmp.eq.s32.totalorder %s314, 0
      %s317 = sadd.s32 %s316, 1
      %s318 = scalar_select %p315, %s316, %s317
      %p321 = pneg %p315
      %p322 = scmp.eq.s32.totalorder %s28, 1
      %p323 = por %p321, %p322
      %p324 = scmp.ne.s32.totalorder %s316, %s319
      %p325 = scmp.eq.s32.totalorder %s28, 0
      %p326 = por %p324, %p325
      %p327 = scmp.ne.s32.totalorder %s316, %s319
      %p328 = scmp.eq.s32.totalorder %s33, 1
      %p329 = por %p327, %p328
      %p330 = scmp.ne.s32.totalorder %s319, %s320
      %p331 = scmp.eq.s32.totalorder %s33, 0
      %p332 = por %p330, %p331
      %p333 = scmp.ne.s32.totalorder %s319, %s320
      %p334 = scmp.eq.s32.totalorder %s34, 1
      %p335 = por %p333, %p334
      %p337 = scmp.ne.s32.totalorder %s320, %s336
      %p338 = scmp.eq.s32.totalorder %s34, 0
      %p339 = por %p337, %p338
      %p340 = scmp.le.s32.totalorder 1, %s28
      %p341 = scmp.lt.s32.totalorder %s28, 3
      %p342 = pnand %p340, %p341
      %p343 = pneg %p342
      // Predicated region
      $region9: #{tpu_custom_call.1} parent=5 // pred_check
        _
      $region10: #{tpu_custom_call.1} parent=5 // pred_check_branch
        %345 = sbr.rel (%p342) target = $region12
      $region11: #{tpu_custom_call.1} parent=5 // pred_region
        %s346 = ssub.s32 %s28, 1
        // Predicated region
        $region13: #{tpu_custom_call.1} parent=11 // pred_check
          %p347 = pneg %p75
        $region14: #{tpu_custom_call.1} parent=11 // pred_check_branch
          %349 = sbr.rel (%p347) target = $region16
        $region15: #{tpu_custom_call.1} parent=11 // pred_region
          %351 = vsyncadd [#allocation8], 0
          %s352 = sshll.u32 %s1, 4
          %s353 = int_to_ptr.hbm [resolvable:$true] %s352
          %s354 = sshll.u32 [#allocation7], 4
          %s355 = int_to_ptr.vmem [resolvable:$true] %s354
          %360 = dma.hbm_to_vmem [thread:$0]  %s353, 2048, %s355, [#allocation8], 64, 64, 4
        $region16: #{tpu_custom_call.1} parent=11 // pred_fallthru
          _
        // Predicated region
        $region17: #{tpu_custom_call.1} parent=11 // pred_check
          %p361 = pneg %p96
        $region18: #{tpu_custom_call.1} parent=11 // pred_check_branch
          %363 = sbr.rel (%p361) target = $region20
        $region19: #{tpu_custom_call.1} parent=11 // pred_region
          _
        $region20: #{tpu_custom_call.1} parent=11 // pred_fallthru
          _
        // Predicated region
        $region21: #{tpu_custom_call.1} parent=11 // pred_check
          %p364 = pneg %p117
        $region22: #{tpu_custom_call.1} parent=11 // pred_check_branch
          %366 = sbr.rel (%p364) target = $region24
        $region23: #{tpu_custom_call.1} parent=11 // pred_region
          %368 = vsyncadd [#allocation8], 0
          %s369 = sshll.u32 %s3, 4
          %s370 = int_to_ptr.hbm [resolvable:$true] %s369
          %s371 = sshll.u32 [#allocation9], 4
          %s372 = int_to_ptr.vmem [resolvable:$true] %s371
          %377 = dma.hbm_to_vmem [thread:$0]  %s370, 2048, %s372, [#allocation8], 64, 64, 4
        $region24: #{tpu_custom_call.1} parent=11 // pred_fallthru
          _
        // Predicated region
        $region25: #{tpu_custom_call.1} parent=11 // pred_check
          %p378 = pneg %p138
        $region26: #{tpu_custom_call.1} parent=11 // pred_check_branch
          %380 = sbr.rel (%p378) target = $region28
        $region27: #{tpu_custom_call.1} parent=11 // pred_region
          _
        $region28: #{tpu_custom_call.1} parent=11 // pred_fallthru
          _
        // Predicated region
        $region29: #{tpu_custom_call.1} parent=11 // pred_check
          %p381 = pneg %p159
        $region30: #{tpu_custom_call.1} parent=11 // pred_check_branch
          %383 = sbr.rel (%p381) target = $region32
        $region31: #{tpu_custom_call.1} parent=11 // pred_region
          %385 = vsyncadd [#allocation11], 0
          %s386 = sshll.u32 %s5, 4
          %s387 = int_to_ptr.hbm [resolvable:$true] %s386
          %s388 = sshll.u32 [#allocation10], 4
          %s389 = int_to_ptr.vmem [resolvable:$true] %s388
          %394 = dma.hbm_to_vmem [thread:$0]  %s387, 1024, %s389, [#allocation11], 64, 64, 4
        $region32: #{tpu_custom_call.1} parent=11 // pred_fallthru
          _
        // Predicated region
        $region33: #{tpu_custom_call.1} parent=11 // pred_check
          %p395 = pneg %p180
        $region34: #{tpu_custom_call.1} parent=11 // pred_check_branch
          %397 = sbr.rel (%p395) target = $region36
        $region35: #{tpu_custom_call.1} parent=11 // pred_region
          _
        $region36: #{tpu_custom_call.1} parent=11 // pred_fallthru
          _
        // Predicated region
        $region37: #{tpu_custom_call.1} parent=11 // pred_check
          %p398 = pneg %p201
        $region38: #{tpu_custom_call.1} parent=11 // pred_check_branch
          %400 = sbr.rel (%p398) target = $region40
        $region39: #{tpu_custom_call.1} parent=11 // pred_region
          %402 = vsyncadd [#allocation11], 0
          %s403 = sshll.u32 %s7, 4
          %s404 = int_to_ptr.hbm [resolvable:$true] %s403
          %s405 = sshll.u32 [#allocation12], 4
          %s406 = int_to_ptr.vmem [resolvable:$true] %s405
          %411 = dma.hbm_to_vmem [thread:$0]  %s404, 2048, %s406, [#allocation11], 64, 64, 4
        $region40: #{tpu_custom_call.1} parent=11 // pred_fallthru
          _
        // Predicated region
        $region41: #{tpu_custom_call.1} parent=11 // pred_check
          %p412 = pneg %p222
        $region42: #{tpu_custom_call.1} parent=11 // pred_check_branch
          %414 = sbr.rel (%p412) target = $region44
        $region43: #{tpu_custom_call.1} parent=11 // pred_region
          _
        $region44: #{tpu_custom_call.1} parent=11 // pred_fallthru
          _
        // Predicated region
        $region45: #{tpu_custom_call.1} parent=11 // pred_check
          %p415 = pneg %p243
        $region46: #{tpu_custom_call.1} parent=11 // pred_check_branch
          %417 = sbr.rel (%p415) target = $region48
        $region47: #{tpu_custom_call.1} parent=11 // pred_region
          %419 = vsyncadd [#allocation14], 0
          %s420 = sshll.u32 %s9, 4
          %s421 = int_to_ptr.hbm [resolvable:$true] %s420
          %s422 = sshll.u32 [#allocation13], 4
          %s423 = int_to_ptr.vmem [resolvable:$true] %s422
          %428 = dma.hbm_to_vmem [thread:$0]  %s421, 2048, %s423, [#allocation14], 64, 64, 4
        $region48: #{tpu_custom_call.1} parent=11 // pred_fallthru
          _
        // Predicated region
        $region49: #{tpu_custom_call.1} parent=11 // pred_check
          %p429 = pneg %p264
        $region50: #{tpu_custom_call.1} parent=11 // pred_check_branch
          %431 = sbr.rel (%p429) target = $region52
        $region51: #{tpu_custom_call.1} parent=11 // pred_region
          _
        $region52: #{tpu_custom_call.1} parent=11 // pred_fallthru
          _
        // Predicated region
        $region53: #{tpu_custom_call.1} parent=11 // pred_check
          %p432 = pneg %p285
        $region54: #{tpu_custom_call.1} parent=11 // pred_check_branch
          %434 = sbr.rel (%p432) target = $region56
        $region55: #{tpu_custom_call.1} parent=11 // pred_region
          %436 = vsyncadd [#allocation14], 0
          %s437 = sshll.u32 %s11, 4
          %s438 = int_to_ptr.hbm [resolvable:$true] %s437
          %s439 = sshll.u32 [#allocation15], 4
          %s440 = int_to_ptr.vmem [resolvable:$true] %s439
          %445 = dma.hbm_to_vmem [thread:$0]  %s438, 1024, %s440, [#allocation14], 64, 64, 4
        $region56: #{tpu_custom_call.1} parent=11 // pred_fallthru
          _
        // Predicated region
        $region57: #{tpu_custom_call.1} parent=11 // pred_check
          %p446 = pneg %p306
        $region58: #{tpu_custom_call.1} parent=11 // pred_check_branch
          %448 = sbr.rel (%p446) target = $region60
        $region59: #{tpu_custom_call.1} parent=11 // pred_region
          _
        $region60: #{tpu_custom_call.1} parent=11 // pred_fallthru
          _
      $region12: #{tpu_custom_call.1} parent=5 // pred_fallthru
        _
      %p449 = scmp.lt.s32.totalorder %s28, 2
      // Predicated region
      $region61: #{tpu_custom_call.1} parent=5 // pred_check
        %p450 = pneg %p449
      $region62: #{tpu_custom_call.1} parent=5 // pred_check_branch
        %452 = sbr.rel (%p450) target = $region64
      $region63: #{tpu_custom_call.1} parent=5 // pred_region
        // Predicated region
        $region65: #{tpu_custom_call.1} parent=63 // pred_check
          %p453 = pneg %p48
        $region66: #{tpu_custom_call.1} parent=63 // pred_check_branch
          %455 = sbr.rel (%p453) target = $region68
        $region67: #{tpu_custom_call.1} parent=63 // pred_region
          %s456 = sand.u32 %s38, 1
          %s457 = scalar_lea.sflag [#allocation5], %s456
          %s458 = sand.u32 %s38, 1
          %s459 = smul.addr %s458, 16
          %s460 = scalar_lea.vmem [#allocation4], %s459
          %462 = vsyncadd %s457, 0
          %s463 = smul.addr %s28, 2
          %s464 = smul.addr %s463, 8
          %s465 = scalar_lea.hbm %s0, %s464
          %s466 = sshll.u32 %s465, 4
          %s467 = int_to_ptr.hbm [resolvable:$true] %s466
          %s468 = sshll.u32 %s460, 4
          %s469 = int_to_ptr.vmem [resolvable:$true] %s468
          %474 = dma.hbm_to_vmem [thread:$0]  %s467, 256, %s469, %s457, 128, 128, 8
        $region68: #{tpu_custom_call.1} parent=63 // pred_fallthru
          _
      $region64: #{tpu_custom_call.1} parent=5 // pred_fallthru
        _
      %p475 = scmp.le.s32.totalorder 1, %s28
      %p476 = scmp.lt.s32.totalorder %s28, 3
      %p477 = pnand %p475, %p476
      %p478 = pneg %p477
      // Predicated region
      $region69: #{tpu_custom_call.1} parent=5 // pred_check
        _
      $region70: #{tpu_custom_call.1} parent=5 // pred_check_branch
        %480 = sbr.rel (%p477) target = $region72
      $region71: #{tpu_custom_call.1} parent=5 // pred_region
        %s481 = ssub.s32 %s28, 1
        %s482 = sand.u32 %s41, 1
        %s483 = scalar_lea.sflag [#allocation5], %s482
        %s484 = sand.u32 %s41, 1
        %s485 = smul.addr %s484, 16
        %s486 = scalar_lea.vmem [#allocation4], %s485
        // Predicated region
        $region73: #{tpu_custom_call.1} parent=71 // pred_check
          %p487 = pneg %p54
        $region74: #{tpu_custom_call.1} parent=71 // pred_check_branch
          %489 = sbr.rel (%p487) target = $region76
        $region75: #{tpu_custom_call.1} parent=71 // pred_region
          %491 = dma.done %s483, 256
        $region76: #{tpu_custom_call.1} parent=71 // pred_fallthru
          _
        // Predicated region
        $region77: #{tpu_custom_call.1} parent=71 // pred_check
          %p492 = pneg %p75
        $region78: #{tpu_custom_call.1} parent=71 // pred_check_branch
          %494 = sbr.rel (%p492) target = $region80
        $region79: #{tpu_custom_call.1} parent=71 // pred_region
          %496 = dma.done [#allocation8], 2048
        $region80: #{tpu_custom_call.1} parent=71 // pred_fallthru
          _
        // Predicated region
        $region81: #{tpu_custom_call.1} parent=71 // pred_check
          %p497 = pneg %p117
        $region82: #{tpu_custom_call.1} parent=71 // pred_check_branch
          %499 = sbr.rel (%p497) target = $region84
        $region83: #{tpu_custom_call.1} parent=71 // pred_region
          %501 = dma.done [#allocation8], 2048
        $region84: #{tpu_custom_call.1} parent=71 // pred_fallthru
          _
        // Predicated region
        $region85: #{tpu_custom_call.1} parent=71 // pred_check
          %p502 = pneg %p159
        $region86: #{tpu_custom_call.1} parent=71 // pred_check_branch
          %504 = sbr.rel (%p502) target = $region88
        $region87: #{tpu_custom_call.1} parent=71 // pred_region
          %506 = dma.done [#allocation11], 1024
        $region88: #{tpu_custom_call.1} parent=71 // pred_fallthru
          _
        // Predicated region
        $region89: #{tpu_custom_call.1} parent=71 // pred_check
          %p507 = pneg %p201
        $region90: #{tpu_custom_call.1} parent=71 // pred_check_branch
          %509 = sbr.rel (%p507) target = $region92
        $region91: #{tpu_custom_call.1} parent=71 // pred_region
          %511 = dma.done [#allocation11], 2048
        $region92: #{tpu_custom_call.1} parent=71 // pred_fallthru
          _
        // Predicated region
        $region93: #{tpu_custom_call.1} parent=71 // pred_check
          %p512 = pneg %p243
        $region94: #{tpu_custom_call.1} parent=71 // pred_check_branch
          %514 = sbr.rel (%p512) target = $region96
        $region95: #{tpu_custom_call.1} parent=71 // pred_region
          %516 = dma.done [#allocation14], 2048
        $region96: #{tpu_custom_call.1} parent=71 // pred_fallthru
          _
        // Predicated region
        $region97: #{tpu_custom_call.1} parent=71 // pred_check
          %p517 = pneg %p285
        $region98: #{tpu_custom_call.1} parent=71 // pred_check_branch
          %519 = sbr.rel (%p517) target = $region100
        $region99: #{tpu_custom_call.1} parent=71 // pred_region
          %521 = dma.done [#allocation14], 1024
        $region100: #{tpu_custom_call.1} parent=71 // pred_fallthru
          _
        %s522 = sand.u32 %s41, 1
        %s523 = scalar_lea.sflag [#allocation5], %s522
        %s524 = sand.u32 %s41, 1
        %s525 = smul.addr %s524, 16
        %s526 = scalar_lea.vmem [#allocation4], %s525
        %p527 = pneg %p54
        %p528 = pneg %p51
        %p529 = pneg %p75
        %p530 = pneg %p72
        %p531 = pneg %p96
        %p532 = pneg %p93
        %p533 = pneg %p117
        %p534 = pneg %p114
        %p535 = pneg %p138
        %p536 = pneg %p135
        %p537 = pneg %p159
        %p538 = pneg %p156
        %p539 = pneg %p180
        %p540 = pneg %p177
        %p541 = pneg %p201
        %p542 = pneg %p198
        %p543 = pneg %p222
        %p544 = pneg %p219
        %p545 = pneg %p243
        %p546 = pneg %p240
        %p547 = pneg %p264
        %p548 = pneg %p261
        %p549 = pneg %p285
        %p550 = pneg %p282
        %p551 = pneg %p306
        %p552 = pneg %p303
        %p553 = pneg %p332
        %p554 = pneg %p329
        %s555 = sand.u32 %s319, 1
        %s556 = scalar_lea.sflag [#allocation6], %s555
        %s557 = sand.u32 %s319, 1
        %s558 = smul.addr %s557, 16
        %s559 = scalar_lea.vmem [#allocation16], %s558
        %560 = vst [vmem:[#allocation2] sm:$0xff] 0.0
        %v561 = vld [vmem:[%s486] sm:$0xff]
        %v562 = vld [vmem:[%s486 + $0x8] sm:$0xff]
        %563 = vst [vmem:[#allocation2 + $0x8] sm:$0xff] %v561
        %564 = vst [vmem:[#allocation2 + $0x10] sm:$0xff] %v562
        %v565 = vld [vmem:[#allocation2 + $0x8] sm:$0xff]
        %v566 = vld [vmem:[#allocation2 + $0x10] sm:$0xff]
        %v567 = vpack.c.bf16 %v566, %v565
        %v568 = vld [vmem:[#allocation10] sm:$0xf]
        %v569 = vld [vmem:[#allocation10 + $0x4] sm:$0xf]
        %v570 = vld [vmem:[#allocation10 + $0x8] sm:$0xf]
        %v571 = vld [vmem:[#allocation10 + $0xc] sm:$0xf]
        %v572 = vld [vmem:[#allocation10 + $0x10] sm:$0xf]
        %v573 = vld [vmem:[#allocation10 + $0x14] sm:$0xf]
        %v574 = vld [vmem:[#allocation10 + $0x18] sm:$0xf]
        %v575 = vld [vmem:[#allocation10 + $0x1c] sm:$0xf]
        %v576 = vld [vmem:[#allocation10 + $0x20] sm:$0xf]
        %v577 = vld [vmem:[#allocation10 + $0x24] sm:$0xf]
        %v578 = vld [vmem:[#allocation10 + $0x28] sm:$0xf]
        %v579 = vld [vmem:[#allocation10 + $0x2c] sm:$0xf]
        %v580 = vld [vmem:[#allocation10 + $0x30] sm:$0xf]
        %v581 = vld [vmem:[#allocation10 + $0x34] sm:$0xf]
        %v582 = vld [vmem:[#allocation10 + $0x38] sm:$0xf]
        %v583 = vld [vmem:[#allocation10 + $0x3c] sm:$0xf]
        %v584 = vld [vmem:[%s6] sm:$0x1]
        %v586 = vperm.slane %v584, 0
        %v604 = vunpack.c.l.b16 %v568
        %v605 = vunpack.c.l.b16 %v569
        %v606 = vunpack.c.l.b16 %v570
        %v607 = vunpack.c.l.b16 %v571
        %v608 = vunpack.c.l.b16 %v572
        %v609 = vunpack.c.l.b16 %v573
        %v610 = vunpack.c.l.b16 %v574
        %v611 = vunpack.c.l.b16 %v575
        %v612 = vunpack.c.l.b16 %v576
        %v613 = vunpack.c.l.b16 %v577
        %v614 = vunpack.c.l.b16 %v578
        %v615 = vunpack.c.l.b16 %v579
        %v616 = vunpack.c.l.b16 %v580
        %v617 = vunpack.c.l.b16 %v581
        %v618 = vunpack.c.l.b16 %v582
        %v619 = vunpack.c.l.b16 %v583
        %v620 = vpack.c.b16 %v605, %v604
        %v621 = vpack.c.b16 %v607, %v606
        %v622 = vpack.c.b16 %v609, %v608
        %v623 = vpack.c.b16 %v611, %v610
        %v624 = vpack.c.b16 %v613, %v612
        %v625 = vpack.c.b16 %v615, %v614
        %v626 = vpack.c.b16 %v617, %v616
        %v627 = vpack.c.b16 %v619, %v618
        %636 = vmatpush.bf16.msra.mxu0 %v627
        %637 = vmatpush.bf16.msra.mxu0 %v626
        %638 = vmatpush.bf16.msra.mxu0 %v625
        %639 = vmatpush.bf16.msra.mxu0 %v624
        %640 = vmatpush.bf16.msra.mxu0 %v623
        %641 = vmatpush.bf16.msra.mxu0 %v622
        %642 = vmatpush.bf16.msra.mxu0 %v621
        %643 = vmatpush.bf16.msra.mxu0 %v620
        %644 = vmatmul.bf16.gmra.mxu0 %v567
        %v645 = vpop.f32.mrf.mxu0
        %v646 = vadd.f32 %v586, %v645
        %v647 = vpop.f32.mrf.mxu0
        %v648 = vadd.f32 %v586, %v647
        %649 = vdwg.mxu0
        %650 = vst [vmem:[#allocation3] sm:$0xff] %v646
        %651 = vst [vmem:[#allocation3 + $0x8] sm:$0xff] %v648
        %v652 = vld [vmem:[#allocation2 + $0x7] sm:$0xff]
        %v653 = vld [vmem:[#allocation2 + $0xf] sm:$0xff]
        %v654 = vpack.c.bf16 %v653, %v652
        %v655 = vld [vmem:[#allocation7] sm:$0xf]
        %v656 = vld [vmem:[#allocation7 + $0x4] sm:$0xf]
        %v657 = vld [vmem:[#allocation7 + $0x8] sm:$0xf]
        %v658 = vld [vmem:[#allocation7 + $0xc] sm:$0xf]
        %v659 = vld [vmem:[#allocation7 + $0x10] sm:$0xf]
        %v660 = vld [vmem:[#allocation7 + $0x14] sm:$0xf]
        %v661 = vld [vmem:[#allocation7 + $0x18] sm:$0xf]
        %v662 = vld [vmem:[#allocation7 + $0x1c] sm:$0xf]
        %v663 = vld [vmem:[#allocation7 + $0x20] sm:$0xf]
        %v664 = vld [vmem:[#allocation7 + $0x24] sm:$0xf]
        %v665 = vld [vmem:[#allocation7 + $0x28] sm:$0xf]
        %v666 = vld [vmem:[#allocation7 + $0x2c] sm:$0xf]
        %v667 = vld [vmem:[#allocation7 + $0x30] sm:$0xf]
        %v668 = vld [vmem:[#allocation7 + $0x34] sm:$0xf]
        %v669 = vld [vmem:[#allocation7 + $0x38] sm:$0xf]
        %v670 = vld [vmem:[#allocation7 + $0x3c] sm:$0xf]
        %v671 = vld [vmem:[#allocation2 + $0x8] sm:$0xff]
        %v672 = vld [vmem:[#allocation2 + $0x10] sm:$0xff]
        %v673 = vpack.c.bf16 %v672, %v671
        %s674 = scalar_lea.vmem [#allocation7], 64
        %v675 = vld [vmem:[%s674] sm:$0xf]
        %v676 = vld [vmem:[%s674 + $0x4] sm:$0xf]
        %v677 = vld [vmem:[%s674 + $0x8] sm:$0xf]
        %v678 = vld [vmem:[%s674 + $0xc] sm:$0xf]
        %v679 = vld [vmem:[%s674 + $0x10] sm:$0xf]
        %v680 = vld [vmem:[%s674 + $0x14] sm:$0xf]
        %v681 = vld [vmem:[%s674 + $0x18] sm:$0xf]
        %v682 = vld [vmem:[%s674 + $0x1c] sm:$0xf]
        %v683 = vld [vmem:[%s674 + $0x20] sm:$0xf]
        %v684 = vld [vmem:[%s674 + $0x24] sm:$0xf]
        %v685 = vld [vmem:[%s674 + $0x28] sm:$0xf]
        %v686 = vld [vmem:[%s674 + $0x2c] sm:$0xf]
        %v687 = vld [vmem:[%s674 + $0x30] sm:$0xf]
        %v688 = vld [vmem:[%s674 + $0x34] sm:$0xf]
        %v689 = vld [vmem:[%s674 + $0x38] sm:$0xf]
        %v690 = vld [vmem:[%s674 + $0x3c] sm:$0xf]
        %v707 = vunpack.c.l.b16 %v675
        %v708 = vunpack.c.l.b16 %v676
        %v709 = vunpack.c.l.b16 %v677
        %v710 = vunpack.c.l.b16 %v678
        %v711 = vunpack.c.l.b16 %v679
        %v712 = vunpack.c.l.b16 %v680
        %v713 = vunpack.c.l.b16 %v681
        %v714 = vunpack.c.l.b16 %v682
        %v715 = vunpack.c.l.b16 %v683
        %v716 = vunpack.c.l.b16 %v684
        %v717 = vunpack.c.l.b16 %v685
        %v718 = vunpack.c.l.b16 %v686
        %v719 = vunpack.c.l.b16 %v687
        %v720 = vunpack.c.l.b16 %v688
        %v721 = vunpack.c.l.b16 %v689
        %v722 = vunpack.c.l.b16 %v690
        %v723 = vpack.c.b16 %v708, %v707
        %v724 = vpack.c.b16 %v710, %v709
        %v725 = vpack.c.b16 %v712, %v711
        %v726 = vpack.c.b16 %v714, %v713
        %v727 = vpack.c.b16 %v716, %v715
        %v728 = vpack.c.b16 %v718, %v717
        %v729 = vpack.c.b16 %v720, %v719
        %v730 = vpack.c.b16 %v722, %v721
        %739 = vmatpush.bf16.msra.mxu0 %v730
        %740 = vmatpush.bf16.msra.mxu0 %v729
        %741 = vmatpush.bf16.msra.mxu0 %v728
        %742 = vmatpush.bf16.msra.mxu0 %v727
        %743 = vmatpush.bf16.msra.mxu0 %v726
        %744 = vmatpush.bf16.msra.mxu0 %v725
        %745 = vmatpush.bf16.msra.mxu0 %v724
        %746 = vmatpush.bf16.msra.mxu0 %v723
        %747 = vmatmul.bf16.gmra.mxu0 %v673
        %v748 = vpop.f32.mrf.mxu0
        %v749 = vadd.f32 0.0, %v748
        %v750 = vpop.f32.mrf.mxu0
        %v751 = vadd.f32 0.0, %v750
        %752 = vdwg.mxu0
        %v769 = vunpack.c.l.b16 %v655
        %v770 = vunpack.c.l.b16 %v656
        %v771 = vunpack.c.l.b16 %v657
        %v772 = vunpack.c.l.b16 %v658
        %v773 = vunpack.c.l.b16 %v659
        %v774 = vunpack.c.l.b16 %v660
        %v775 = vunpack.c.l.b16 %v661
        %v776 = vunpack.c.l.b16 %v662
        %v777 = vunpack.c.l.b16 %v663
        %v778 = vunpack.c.l.b16 %v664
        %v779 = vunpack.c.l.b16 %v665
        %v780 = vunpack.c.l.b16 %v666
        %v781 = vunpack.c.l.b16 %v667
        %v782 = vunpack.c.l.b16 %v668
        %v783 = vunpack.c.l.b16 %v669
        %v784 = vunpack.c.l.b16 %v670
        %v785 = vpack.c.b16 %v770, %v769
        %v786 = vpack.c.b16 %v772, %v771
        %v787 = vpack.c.b16 %v774, %v773
        %v788 = vpack.c.b16 %v776, %v775
        %v789 = vpack.c.b16 %v778, %v777
        %v790 = vpack.c.b16 %v780, %v779
        %v791 = vpack.c.b16 %v782, %v781
        %v792 = vpack.c.b16 %v784, %v783
        %801 = vmatpush.bf16.msra.mxu0 %v792
        %802 = vmatpush.bf16.msra.mxu0 %v791
        %803 = vmatpush.bf16.msra.mxu0 %v790
        %804 = vmatpush.bf16.msra.mxu0 %v789
        %805 = vmatpush.bf16.msra.mxu0 %v788
        %806 = vmatpush.bf16.msra.mxu0 %v787
        %807 = vmatpush.bf16.msra.mxu0 %v786
        %808 = vmatpush.bf16.msra.mxu0 %v785
        %809 = vmatmul.bf16.gmra.mxu0 %v654
        %v810 = vpop.f32.mrf.mxu0
        %v811 = vadd.f32 %v749, %v810
        %v812 = vpop.f32.mrf.mxu0
        %v813 = vadd.f32 %v751, %v812
        %814 = vdwg.mxu0
        %v815 = vld [vmem:[%s2] sm:$0x1]
        %v817 = vperm.slane %v815, 0
        %v819 = vadd.f32 %v811, %v817
        %v820 = vadd.f32 %v813, %v817
        %v821 = vmax.f32 %v819, 0.0
        %v822 = vmax.f32 %v820, 0.0
        %823 = vst [vmem:[#allocation2 + $0x8] sm:$0xff] %v821
        %824 = vst [vmem:[#allocation2 + $0x10] sm:$0xff] %v822
        %v825 = vld [vmem:[#allocation2 + $0x7] sm:$0xff]
        %v826 = vld [vmem:[#allocation2 + $0xf] sm:$0xff]
        %v827 = vpack.c.bf16 %v826, %v825
        %v828 = vld [vmem:[#allocation9] sm:$0xf]
        %v829 = vld [vmem:[#allocation9 + $0x4] sm:$0xf]
        %v830 = vld [vmem:[#allocation9 + $0x8] sm:$0xf]
        %v831 = vld [vmem:[#allocation9 + $0xc] sm:$0xf]
        %v832 = vld [vmem:[#allocation9 + $0x10] sm:$0xf]
        %v833 = vld [vmem:[#allocation9 + $0x14] sm:$0xf]
        %v834 = vld [vmem:[#allocation9 + $0x18] sm:$0xf]
        %v835 = vld [vmem:[#allocation9 + $0x1c] sm:$0xf]
        %v836 = vld [vmem:[#allocation9 + $0x20] sm:$0xf]
        %v837 = vld [vmem:[#allocation9 + $0x24] sm:$0xf]
        %v838 = vld [vmem:[#allocation9 + $0x28] sm:$0xf]
        %v839 = vld [vmem:[#allocation9 + $0x2c] sm:$0xf]
        %v840 = vld [vmem:[#allocation9 + $0x30] sm:$0xf]
        %v841 = vld [vmem:[#allocation9 + $0x34] sm:$0xf]
        %v842 = vld [vmem:[#allocation9 + $0x38] sm:$0xf]
        %v843 = vld [vmem:[#allocation9 + $0x3c] sm:$0xf]
        %v844 = vld [vmem:[#allocation2 + $0x8] sm:$0xff]
        %v845 = vld [vmem:[#allocation2 + $0x10] sm:$0xff]
        %v846 = vpack.c.bf16 %v845, %v844
        %s847 = scalar_lea.vmem [#allocation9], 64
        %v848 = vld [vmem:[%s847] sm:$0xf]
        %v849 = vld [vmem:[%s847 + $0x4] sm:$0xf]
        %v850 = vld [vmem:[%s847 + $0x8] sm:$0xf]
        %v851 = vld [vmem:[%s847 + $0xc] sm:$0xf]
        %v852 = vld [vmem:[%s847 + $0x10] sm:$0xf]
        %v853 = vld [vmem:[%s847 + $0x14] sm:$0xf]
        %v854 = vld [vmem:[%s847 + $0x18] sm:$0xf]
        %v855 = vld [vmem:[%s847 + $0x1c] sm:$0xf]
        %v856 = vld [vmem:[%s847 + $0x20] sm:$0xf]
        %v857 = vld [vmem:[%s847 + $0x24] sm:$0xf]
        %v858 = vld [vmem:[%s847 + $0x28] sm:$0xf]
        %v859 = vld [vmem:[%s847 + $0x2c] sm:$0xf]
        %v860 = vld [vmem:[%s847 + $0x30] sm:$0xf]
        %v861 = vld [vmem:[%s847 + $0x34] sm:$0xf]
        %v862 = vld [vmem:[%s847 + $0x38] sm:$0xf]
        %v863 = vld [vmem:[%s847 + $0x3c] sm:$0xf]
        %v880 = vunpack.c.l.b16 %v848
        %v881 = vunpack.c.l.b16 %v849
        %v882 = vunpack.c.l.b16 %v850
        %v883 = vunpack.c.l.b16 %v851
        %v884 = vunpack.c.l.b16 %v852
        %v885 = vunpack.c.l.b16 %v853
        %v886 = vunpack.c.l.b16 %v854
        %v887 = vunpack.c.l.b16 %v855
        %v888 = vunpack.c.l.b16 %v856
        %v889 = vunpack.c.l.b16 %v857
        %v890 = vunpack.c.l.b16 %v858
        %v891 = vunpack.c.l.b16 %v859
        %v892 = vunpack.c.l.b16 %v860
        %v893 = vunpack.c.l.b16 %v861
        %v894 = vunpack.c.l.b16 %v862
        %v895 = vunpack.c.l.b16 %v863
        %v896 = vpack.c.b16 %v881, %v880
        %v897 = vpack.c.b16 %v883, %v882
        %v898 = vpack.c.b16 %v885, %v884
        %v899 = vpack.c.b16 %v887, %v886
        %v900 = vpack.c.b16 %v889, %v888
        %v901 = vpack.c.b16 %v891, %v890
        %v902 = vpack.c.b16 %v893, %v892
        %v903 = vpack.c.b16 %v895, %v894
        %912 = vmatpush.bf16.msra.mxu0 %v903
        %913 = vmatpush.bf16.msra.mxu0 %v902
        %914 = vmatpush.bf16.msra.mxu0 %v901
        %915 = vmatpush.bf16.msra.mxu0 %v900
        %916 = vmatpush.bf16.msra.mxu0 %v899
        %917 = vmatpush.bf16.msra.mxu0 %v898
        %918 = vmatpush.bf16.msra.mxu0 %v897
        %919 = vmatpush.bf16.msra.mxu0 %v896
        %920 = vmatmul.bf16.gmra.mxu0 %v846
        %v921 = vpop.f32.mrf.mxu0
        %v922 = vadd.f32 0.0, %v921
        %v923 = vpop.f32.mrf.mxu0
        %v924 = vadd.f32 0.0, %v923
        %925 = vdwg.mxu0
        %v942 = vunpack.c.l.b16 %v828
        %v943 = vunpack.c.l.b16 %v829
        %v944 = vunpack.c.l.b16 %v830
        %v945 = vunpack.c.l.b16 %v831
        %v946 = vunpack.c.l.b16 %v832
        %v947 = vunpack.c.l.b16 %v833
        %v948 = vunpack.c.l.b16 %v834
        %v949 = vunpack.c.l.b16 %v835
        %v950 = vunpack.c.l.b16 %v836
        %v951 = vunpack.c.l.b16 %v837
        %v952 = vunpack.c.l.b16 %v838
        %v953 = vunpack.c.l.b16 %v839
        %v954 = vunpack.c.l.b16 %v840
        %v955 = vunpack.c.l.b16 %v841
        %v956 = vunpack.c.l.b16 %v842
        %v957 = vunpack.c.l.b16 %v843
        %v958 = vpack.c.b16 %v943, %v942
        %v959 = vpack.c.b16 %v945, %v944
        %v960 = vpack.c.b16 %v947, %v946
        %v961 = vpack.c.b16 %v949, %v948
        %v962 = vpack.c.b16 %v951, %v950
        %v963 = vpack.c.b16 %v953, %v952
        %v964 = vpack.c.b16 %v955, %v954
        %v965 = vpack.c.b16 %v957, %v956
        %974 = vmatpush.bf16.msra.mxu0 %v965
        %975 = vmatpush.bf16.msra.mxu0 %v964
        %976 = vmatpush.bf16.msra.mxu0 %v963
        %977 = vmatpush.bf16.msra.mxu0 %v962
        %978 = vmatpush.bf16.msra.mxu0 %v961
        %979 = vmatpush.bf16.msra.mxu0 %v960
        %980 = vmatpush.bf16.msra.mxu0 %v959
        %981 = vmatpush.bf16.msra.mxu0 %v958
        %982 = vmatmul.bf16.gmra.mxu0 %v827
        %v983 = vpop.f32.mrf.mxu0
        %v984 = vadd.f32 %v922, %v983
        %v985 = vpop.f32.mrf.mxu0
        %v986 = vadd.f32 %v924, %v985
        %987 = vdwg.mxu0
        %v988 = vld [vmem:[%s4] sm:$0x1]
        %v990 = vperm.slane %v988, 0
        %v992 = vadd.f32 %v984, %v990
        %v993 = vadd.f32 %v986, %v990
        %v994 = vmax.f32 %v992, 0.0
        %v995 = vmax.f32 %v993, 0.0
        %v996 = vld [vmem:[#allocation3] sm:$0xff]
        %v997 = vld [vmem:[#allocation3 + $0x8] sm:$0xff]
        %v998 = vadd.f32 %v994, %v996
        %v999 = vadd.f32 %v995, %v997
        %v1000 = vmax.f32 %v998, 0.0
        %v1001 = vmax.f32 %v999, 0.0
        %1002 = vst [vmem:[#allocation2 + $0x8] sm:$0xff] %v1000
        %1003 = vst [vmem:[#allocation2 + $0x10] sm:$0xff] %v1001
        %v1004 = vld [vmem:[#allocation2 + $0x8] sm:$0xff]
        %v1005 = vld [vmem:[#allocation2 + $0x10] sm:$0xff]
        %1006 = vst [vmem:[#allocation3] sm:$0xff] %v1004
        %1007 = vst [vmem:[#allocation3 + $0x8] sm:$0xff] %v1005
        %v1008 = vld [vmem:[#allocation2 + $0x6] sm:$0xff]
        %v1009 = vld [vmem:[#allocation2 + $0xe] sm:$0xff]
        %v1010 = vpack.c.bf16 %v1009, %v1008
        %v1011 = vld [vmem:[#allocation12] sm:$0xf]
        %v1012 = vld [vmem:[#allocation12 + $0x4] sm:$0xf]
        %v1013 = vld [vmem:[#allocation12 + $0x8] sm:$0xf]
        %v1014 = vld [vmem:[#allocation12 + $0xc] sm:$0xf]
        %v1015 = vld [vmem:[#allocation12 + $0x10] sm:$0xf]
        %v1016 = vld [vmem:[#allocation12 + $0x14] sm:$0xf]
        %v1017 = vld [vmem:[#allocation12 + $0x18] sm:$0xf]
        %v1018 = vld [vmem:[#allocation12 + $0x1c] sm:$0xf]
        %v1019 = vld [vmem:[#allocation12 + $0x20] sm:$0xf]
        %v1020 = vld [vmem:[#allocation12 + $0x24] sm:$0xf]
        %v1021 = vld [vmem:[#allocation12 + $0x28] sm:$0xf]
        %v1022 = vld [vmem:[#allocation12 + $0x2c] sm:$0xf]
        %v1023 = vld [vmem:[#allocation12 + $0x30] sm:$0xf]
        %v1024 = vld [vmem:[#allocation12 + $0x34] sm:$0xf]
        %v1025 = vld [vmem:[#allocation12 + $0x38] sm:$0xf]
        %v1026 = vld [vmem:[#allocation12 + $0x3c] sm:$0xf]
        %v1027 = vld [vmem:[#allocation2 + $0x8] sm:$0xff]
        %v1028 = vld [vmem:[#allocation2 + $0x10] sm:$0xff]
        %v1029 = vpack.c.bf16 %v1028, %v1027
        %s1030 = scalar_lea.vmem [#allocation12], 64
        %v1031 = vld [vmem:[%s1030] sm:$0xf]
        %v1032 = vld [vmem:[%s1030 + $0x4] sm:$0xf]
        %v1033 = vld [vmem:[%s1030 + $0x8] sm:$0xf]
        %v1034 = vld [vmem:[%s1030 + $0xc] sm:$0xf]
        %v1035 = vld [vmem:[%s1030 + $0x10] sm:$0xf]
        %v1036 = vld [vmem:[%s1030 + $0x14] sm:$0xf]
        %v1037 = vld [vmem:[%s1030 + $0x18] sm:$0xf]
        %v1038 = vld [vmem:[%s1030 + $0x1c] sm:$0xf]
        %v1039 = vld [vmem:[%s1030 + $0x20] sm:$0xf]
        %v1040 = vld [vmem:[%s1030 + $0x24] sm:$0xf]
        %v1041 = vld [vmem:[%s1030 + $0x28] sm:$0xf]
        %v1042 = vld [vmem:[%s1030 + $0x2c] sm:$0xf]
        %v1043 = vld [vmem:[%s1030 + $0x30] sm:$0xf]
        %v1044 = vld [vmem:[%s1030 + $0x34] sm:$0xf]
        %v1045 = vld [vmem:[%s1030 + $0x38] sm:$0xf]
        %v1046 = vld [vmem:[%s1030 + $0x3c] sm:$0xf]
        %v1063 = vunpack.c.l.b16 %v1031
        %v1064 = vunpack.c.l.b16 %v1032
        %v1065 = vunpack.c.l.b16 %v1033
        %v1066 = vunpack.c.l.b16 %v1034
        %v1067 = vunpack.c.l.b16 %v1035
        %v1068 = vunpack.c.l.b16 %v1036
        %v1069 = vunpack.c.l.b16 %v1037
        %v1070 = vunpack.c.l.b16 %v1038
        %v1071 = vunpack.c.l.b16 %v1039
        %v1072 = vunpack.c.l.b16 %v1040
        %v1073 = vunpack.c.l.b16 %v1041
        %v1074 = vunpack.c.l.b16 %v1042
        %v1075 = vunpack.c.l.b16 %v1043
        %v1076 = vunpack.c.l.b16 %v1044
        %v1077 = vunpack.c.l.b16 %v1045
        %v1078 = vunpack.c.l.b16 %v1046
        %v1079 = vpack.c.b16 %v1064, %v1063
        %v1080 = vpack.c.b16 %v1066, %v1065
        %v1081 = vpack.c.b16 %v1068, %v1067
        %v1082 = vpack.c.b16 %v1070, %v1069
        %v1083 = vpack.c.b16 %v1072, %v1071
        %v1084 = vpack.c.b16 %v1074, %v1073
        %v1085 = vpack.c.b16 %v1076, %v1075
        %v1086 = vpack.c.b16 %v1078, %v1077
        %1095 = vmatpush.bf16.msra.mxu0 %v1086
        %1096 = vmatpush.bf16.msra.mxu0 %v1085
        %1097 = vmatpush.bf16.msra.mxu0 %v1084
        %1098 = vmatpush.bf16.msra.mxu0 %v1083
        %1099 = vmatpush.bf16.msra.mxu0 %v1082
        %1100 = vmatpush.bf16.msra.mxu0 %v1081
        %1101 = vmatpush.bf16.msra.mxu0 %v1080
        %1102 = vmatpush.bf16.msra.mxu0 %v1079
        %1103 = vmatmul.bf16.gmra.mxu0 %v1029
        %v1104 = vpop.f32.mrf.mxu0
        %v1105 = vadd.f32 0.0, %v1104
        %v1106 = vpop.f32.mrf.mxu0
        %v1107 = vadd.f32 0.0, %v1106
        %1108 = vdwg.mxu0
        %v1125 = vunpack.c.l.b16 %v1011
        %v1126 = vunpack.c.l.b16 %v1012
        %v1127 = vunpack.c.l.b16 %v1013
        %v1128 = vunpack.c.l.b16 %v1014
        %v1129 = vunpack.c.l.b16 %v1015
        %v1130 = vunpack.c.l.b16 %v1016
        %v1131 = vunpack.c.l.b16 %v1017
        %v1132 = vunpack.c.l.b16 %v1018
        %v1133 = vunpack.c.l.b16 %v1019
        %v1134 = vunpack.c.l.b16 %v1020
        %v1135 = vunpack.c.l.b16 %v1021
        %v1136 = vunpack.c.l.b16 %v1022
        %v1137 = vunpack.c.l.b16 %v1023
        %v1138 = vunpack.c.l.b16 %v1024
        %v1139 = vunpack.c.l.b16 %v1025
        %v1140 = vunpack.c.l.b16 %v1026
        %v1141 = vpack.c.b16 %v1126, %v1125
        %v1142 = vpack.c.b16 %v1128, %v1127
        %v1143 = vpack.c.b16 %v1130, %v1129
        %v1144 = vpack.c.b16 %v1132, %v1131
        %v1145 = vpack.c.b16 %v1134, %v1133
        %v1146 = vpack.c.b16 %v1136, %v1135
        %v1147 = vpack.c.b16 %v1138, %v1137
        %v1148 = vpack.c.b16 %v1140, %v1139
        %1157 = vmatpush.bf16.msra.mxu0 %v1148
        %1158 = vmatpush.bf16.msra.mxu0 %v1147
        %1159 = vmatpush.bf16.msra.mxu0 %v1146
        %1160 = vmatpush.bf16.msra.mxu0 %v1145
        %1161 = vmatpush.bf16.msra.mxu0 %v1144
        %1162 = vmatpush.bf16.msra.mxu0 %v1143
        %1163 = vmatpush.bf16.msra.mxu0 %v1142
        %1164 = vmatpush.bf16.msra.mxu0 %v1141
        %1165 = vmatmul.bf16.gmra.mxu0 %v1010
        %v1166 = vpop.f32.mrf.mxu0
        %v1167 = vadd.f32 %v1105, %v1166
        %v1168 = vpop.f32.mrf.mxu0
        %v1169 = vadd.f32 %v1107, %v1168
        %1170 = vdwg.mxu0
        %v1171 = vld [vmem:[%s8] sm:$0x1]
        %v1173 = vperm.slane %v1171, 0
        %v1175 = vadd.f32 %v1167, %v1173
        %v1176 = vadd.f32 %v1169, %v1173
        %v1177 = vmax.f32 %v1175, 0.0
        %v1178 = vmax.f32 %v1176, 0.0
        %1179 = vst [vmem:[#allocation2 + $0x8] sm:$0xff] %v1177
        %1180 = vst [vmem:[#allocation2 + $0x10] sm:$0xff] %v1178
        %v1181 = vld [vmem:[#allocation2 + $0x6] sm:$0xff]
        %v1182 = vld [vmem:[#allocation2 + $0xe] sm:$0xff]
        %v1183 = vpack.c.bf16 %v1182, %v1181
        %v1184 = vld [vmem:[#allocation13] sm:$0xf]
        %v1185 = vld [vmem:[#allocation13 + $0x4] sm:$0xf]
        %v1186 = vld [vmem:[#allocation13 + $0x8] sm:$0xf]
        %v1187 = vld [vmem:[#allocation13 + $0xc] sm:$0xf]
        %v1188 = vld [vmem:[#allocation13 + $0x10] sm:$0xf]
        %v1189 = vld [vmem:[#allocation13 + $0x14] sm:$0xf]
        %v1190 = vld [vmem:[#allocation13 + $0x18] sm:$0xf]
        %v1191 = vld [vmem:[#allocation13 + $0x1c] sm:$0xf]
        %v1192 = vld [vmem:[#allocation13 + $0x20] sm:$0xf]
        %v1193 = vld [vmem:[#allocation13 + $0x24] sm:$0xf]
        %v1194 = vld [vmem:[#allocation13 + $0x28] sm:$0xf]
        %v1195 = vld [vmem:[#allocation13 + $0x2c] sm:$0xf]
        %v1196 = vld [vmem:[#allocation13 + $0x30] sm:$0xf]
        %v1197 = vld [vmem:[#allocation13 + $0x34] sm:$0xf]
        %v1198 = vld [vmem:[#allocation13 + $0x38] sm:$0xf]
        %v1199 = vld [vmem:[#allocation13 + $0x3c] sm:$0xf]
        %v1200 = vld [vmem:[#allocation2 + $0x8] sm:$0xff]
        %v1201 = vld [vmem:[#allocation2 + $0x10] sm:$0xff]
        %v1202 = vpack.c.bf16 %v1201, %v1200
        %s1203 = scalar_lea.vmem [#allocation13], 64
        %v1204 = vld [vmem:[%s1203] sm:$0xf]
        %v1205 = vld [vmem:[%s1203 + $0x4] sm:$0xf]
        %v1206 = vld [vmem:[%s1203 + $0x8] sm:$0xf]
        %v1207 = vld [vmem:[%s1203 + $0xc] sm:$0xf]
        %v1208 = vld [vmem:[%s1203 + $0x10] sm:$0xf]
        %v1209 = vld [vmem:[%s1203 + $0x14] sm:$0xf]
        %v1210 = vld [vmem:[%s1203 + $0x18] sm:$0xf]
        %v1211 = vld [vmem:[%s1203 + $0x1c] sm:$0xf]
        %v1212 = vld [vmem:[%s1203 + $0x20] sm:$0xf]
        %v1213 = vld [vmem:[%s1203 + $0x24] sm:$0xf]
        %v1214 = vld [vmem:[%s1203 + $0x28] sm:$0xf]
        %v1215 = vld [vmem:[%s1203 + $0x2c] sm:$0xf]
        %v1216 = vld [vmem:[%s1203 + $0x30] sm:$0xf]
        %v1217 = vld [vmem:[%s1203 + $0x34] sm:$0xf]
        %v1218 = vld [vmem:[%s1203 + $0x38] sm:$0xf]
        %v1219 = vld [vmem:[%s1203 + $0x3c] sm:$0xf]
        %v1236 = vunpack.c.l.b16 %v1204
        %v1237 = vunpack.c.l.b16 %v1205
        %v1238 = vunpack.c.l.b16 %v1206
        %v1239 = vunpack.c.l.b16 %v1207
        %v1240 = vunpack.c.l.b16 %v1208
        %v1241 = vunpack.c.l.b16 %v1209
        %v1242 = vunpack.c.l.b16 %v1210
        %v1243 = vunpack.c.l.b16 %v1211
        %v1244 = vunpack.c.l.b16 %v1212
        %v1245 = vunpack.c.l.b16 %v1213
        %v1246 = vunpack.c.l.b16 %v1214
        %v1247 = vunpack.c.l.b16 %v1215
        %v1248 = vunpack.c.l.b16 %v1216
        %v1249 = vunpack.c.l.b16 %v1217
        %v1250 = vunpack.c.l.b16 %v1218
        %v1251 = vunpack.c.l.b16 %v1219
        %v1252 = vpack.c.b16 %v1237, %v1236
        %v1253 = vpack.c.b16 %v1239, %v1238
        %v1254 = vpack.c.b16 %v1241, %v1240
        %v1255 = vpack.c.b16 %v1243, %v1242
        %v1256 = vpack.c.b16 %v1245, %v1244
        %v1257 = vpack.c.b16 %v1247, %v1246
        %v1258 = vpack.c.b16 %v1249, %v1248
        %v1259 = vpack.c.b16 %v1251, %v1250
        %1268 = vmatpush.bf16.msra.mxu0 %v1259
        %1269 = vmatpush.bf16.msra.mxu0 %v1258
        %1270 = vmatpush.bf16.msra.mxu0 %v1257
        %1271 = vmatpush.bf16.msra.mxu0 %v1256
        %1272 = vmatpush.bf16.msra.mxu0 %v1255
        %1273 = vmatpush.bf16.msra.mxu0 %v1254
        %1274 = vmatpush.bf16.msra.mxu0 %v1253
        %1275 = vmatpush.bf16.msra.mxu0 %v1252
        %1276 = vmatmul.bf16.gmra.mxu0 %v1202
        %v1277 = vpop.f32.mrf.mxu0
        %v1278 = vadd.f32 0.0, %v1277
        %v1279 = vpop.f32.mrf.mxu0
        %v1280 = vadd.f32 0.0, %v1279
        %1281 = vdwg.mxu0
        %v1298 = vunpack.c.l.b16 %v1184
        %v1299 = vunpack.c.l.b16 %v1185
        %v1300 = vunpack.c.l.b16 %v1186
        %v1301 = vunpack.c.l.b16 %v1187
        %v1302 = vunpack.c.l.b16 %v1188
        %v1303 = vunpack.c.l.b16 %v1189
        %v1304 = vunpack.c.l.b16 %v1190
        %v1305 = vunpack.c.l.b16 %v1191
        %v1306 = vunpack.c.l.b16 %v1192
        %v1307 = vunpack.c.l.b16 %v1193
        %v1308 = vunpack.c.l.b16 %v1194
        %v1309 = vunpack.c.l.b16 %v1195
        %v1310 = vunpack.c.l.b16 %v1196
        %v1311 = vunpack.c.l.b16 %v1197
        %v1312 = vunpack.c.l.b16 %v1198
        %v1313 = vunpack.c.l.b16 %v1199
        %v1314 = vpack.c.b16 %v1299, %v1298
        %v1315 = vpack.c.b16 %v1301, %v1300
        %v1316 = vpack.c.b16 %v1303, %v1302
        %v1317 = vpack.c.b16 %v1305, %v1304
        %v1318 = vpack.c.b16 %v1307, %v1306
        %v1319 = vpack.c.b16 %v1309, %v1308
        %v1320 = vpack.c.b16 %v1311, %v1310
        %v1321 = vpack.c.b16 %v1313, %v1312
        %1330 = vmatpush.bf16.msra.mxu0 %v1321
        %1331 = vmatpush.bf16.msra.mxu0 %v1320
        %1332 = vmatpush.bf16.msra.mxu0 %v1319
        %1333 = vmatpush.bf16.msra.mxu0 %v1318
        %1334 = vmatpush.bf16.msra.mxu0 %v1317
        %1335 = vmatpush.bf16.msra.mxu0 %v1316
        %1336 = vmatpush.bf16.msra.mxu0 %v1315
        %1337 = vmatpush.bf16.msra.mxu0 %v1314
        %1338 = vmatmul.bf16.gmra.mxu0 %v1183
        %v1339 = vpop.f32.mrf.mxu0
        %v1340 = vadd.f32 %v1278, %v1339
        %v1341 = vpop.f32.mrf.mxu0
        %v1342 = vadd.f32 %v1280, %v1341
        %1343 = vdwg.mxu0
        %v1344 = vld [vmem:[%s10] sm:$0x1]
        %v1346 = vperm.slane %v1344, 0
        %v1348 = vadd.f32 %v1340, %v1346
        %v1349 = vadd.f32 %v1342, %v1346
        %v1350 = vmax.f32 %v1348, 0.0
        %v1351 = vmax.f32 %v1349, 0.0
        %v1352 = vld [vmem:[#allocation3] sm:$0xff]
        %v1353 = vld [vmem:[#allocation3 + $0x8] sm:$0xff]
        %v1354 = vadd.f32 %v1350, %v1352
        %v1355 = vadd.f32 %v1351, %v1353
        %v1356 = vmax.f32 %v1354, 0.0
        %v1357 = vmax.f32 %v1355, 0.0
        %1358 = vst [vmem:[#allocation2 + $0x8] sm:$0xff] %v1356
        %1359 = vst [vmem:[#allocation2 + $0x10] sm:$0xff] %v1357
        %v1360 = vld [vmem:[#allocation2 + $0x8] sm:$0xff]
        %v1361 = vld [vmem:[#allocation2 + $0x10] sm:$0xff]
        %v1362 = vpack.c.bf16 %v1361, %v1360
        %v1363 = vld [vmem:[#allocation15] sm:$0xf]
        %v1364 = vld [vmem:[#allocation15 + $0x4] sm:$0xf]
        %v1365 = vld [vmem:[#allocation15 + $0x8] sm:$0xf]
        %v1366 = vld [vmem:[#allocation15 + $0xc] sm:$0xf]
        %v1367 = vld [vmem:[#allocation15 + $0x10] sm:$0xf]
        %v1368 = vld [vmem:[#allocation15 + $0x14] sm:$0xf]
        %v1369 = vld [vmem:[#allocation15 + $0x18] sm:$0xf]
        %v1370 = vld [vmem:[#allocation15 + $0x1c] sm:$0xf]
        %v1371 = vld [vmem:[#allocation15 + $0x20] sm:$0xf]
        %v1372 = vld [vmem:[#allocation15 + $0x24] sm:$0xf]
        %v1373 = vld [vmem:[#allocation15 + $0x28] sm:$0xf]
        %v1374 = vld [vmem:[#allocation15 + $0x2c] sm:$0xf]
        %v1375 = vld [vmem:[#allocation15 + $0x30] sm:$0xf]
        %v1376 = vld [vmem:[#allocation15 + $0x34] sm:$0xf]
        %v1377 = vld [vmem:[#allocation15 + $0x38] sm:$0xf]
        %v1378 = vld [vmem:[#allocation15 + $0x3c] sm:$0xf]
        %v1379 = vld [vmem:[%s12] sm:$0x1]
        %v1381 = vperm.slane %v1379, 0
        %v1399 = vunpack.c.l.b16 %v1363
        %v1400 = vunpack.c.l.b16 %v1364
        %v1401 = vunpack.c.l.b16 %v1365
        %v1402 = vunpack.c.l.b16 %v1366
        %v1403 = vunpack.c.l.b16 %v1367
        %v1404 = vunpack.c.l.b16 %v1368
        %v1405 = vunpack.c.l.b16 %v1369
        %v1406 = vunpack.c.l.b16 %v1370
        %v1407 = vunpack.c.l.b16 %v1371
        %v1408 = vunpack.c.l.b16 %v1372
        %v1409 = vunpack.c.l.b16 %v1373
        %v1410 = vunpack.c.l.b16 %v1374
        %v1411 = vunpack.c.l.b16 %v1375
        %v1412 = vunpack.c.l.b16 %v1376
        %v1413 = vunpack.c.l.b16 %v1377
        %v1414 = vunpack.c.l.b16 %v1378
        %v1415 = vpack.c.b16 %v1400, %v1399
        %v1416 = vpack.c.b16 %v1402, %v1401
        %v1417 = vpack.c.b16 %v1404, %v1403
        %v1418 = vpack.c.b16 %v1406, %v1405
        %v1419 = vpack.c.b16 %v1408, %v1407
        %v1420 = vpack.c.b16 %v1410, %v1409
        %v1421 = vpack.c.b16 %v1412, %v1411
        %v1422 = vpack.c.b16 %v1414, %v1413
        %1431 = vmatpush.bf16.msra.mxu0 %v1422
        %1432 = vmatpush.bf16.msra.mxu0 %v1421
        %1433 = vmatpush.bf16.msra.mxu0 %v1420
        %1434 = vmatpush.bf16.msra.mxu0 %v1419
        %1435 = vmatpush.bf16.msra.mxu0 %v1418
        %1436 = vmatpush.bf16.msra.mxu0 %v1417
        %1437 = vmatpush.bf16.msra.mxu0 %v1416
        %1438 = vmatpush.bf16.msra.mxu0 %v1415
        %1439 = vmatmul.bf16.gmra.mxu0 %v1362
        %v1440 = vpop.f32.mrf.mxu0
        %v1441 = vadd.f32 %v1381, %v1440
        %v1442 = vpop.f32.mrf.mxu0
        %v1443 = vadd.f32 %v1381, %v1442
        %1444 = vdwg.mxu0
        %v1445 = vmul.f32 %v1441, 0.5
        %v1446 = vmul.f32 %v1443, 0.5
        %v1447 = vtanh.pop %v1445
        %v1448 = vtanh.pop %v1446
        %v1449 = vmul.f32 %v1447, 0.5
        %v1450 = vmul.f32 %v1448, 0.5
        %v1451 = vadd.f32 %v1449, 0.5
        %v1452 = vadd.f32 %v1450, 0.5
        %1453 = vst [vmem:[%s559] sm:$0xff] %v1451
        %1454 = vst [vmem:[%s559 + $0x8] sm:$0xff] %v1452
        %s1455 = sand.u32 %s319, 1
        %s1456 = scalar_lea.sflag [#allocation6], %s1455
        %s1457 = sand.u32 %s319, 1
        %s1458 = smul.addr %s1457, 16
        %s1459 = scalar_lea.vmem [#allocation16], %s1458
        // Predicated region
        $region101: #{tpu_custom_call.1} parent=71 // pred_check
          %p1460 = pneg %p329
        $region102: #{tpu_custom_call.1} parent=71 // pred_check_branch
          %1462 = sbr.rel (%p1460) target = $region104
        $region103: #{tpu_custom_call.1} parent=71 // pred_region
          %1464 = vsyncadd %s1456, 0
          %s1465 = smul.addr %s33, 2
          %s1466 = smul.addr %s1465, 8
          %s1467 = scalar_lea.hbm %s13, %s1466
          %s1468 = sshll.u32 %s1459, 4
          %s1469 = int_to_ptr.vmem [resolvable:$true] %s1468
          %s1470 = sshll.u32 %s1467, 4
          %s1471 = int_to_ptr.hbm [resolvable:$true] %s1470
          %1476 = dma.vmem_to_hbm [thread:$0]  %s1469, 256, %s1471, %s1456, 128, 128, 8
        $region104: #{tpu_custom_call.1} parent=71 // pred_fallthru
          _
      $region72: #{tpu_custom_call.1} parent=5 // pred_fallthru
        _
      %p1477 = scmp.le.s32.totalorder 2, %s28
      // Predicated region
      $region105: #{tpu_custom_call.1} parent=5 // pred_check
        %p1478 = pneg %p1477
      $region106: #{tpu_custom_call.1} parent=5 // pred_check_branch
        %1480 = sbr.rel (%p1478) target = $region108
      $region107: #{tpu_custom_call.1} parent=5 // pred_region
        %s1481 = ssub.s32 %s28, 2
        // Predicated region
        $region109: #{tpu_custom_call.1} parent=107 // pred_check
          %p1482 = pneg %p335
        $region110: #{tpu_custom_call.1} parent=107 // pred_check_branch
          %1484 = sbr.rel (%p1482) target = $region112
        $region111: #{tpu_custom_call.1} parent=107 // pred_region
          %s1485 = sand.u32 %s320, 1
          %s1486 = scalar_lea.sflag [#allocation6], %s1485
          %s1487 = sand.u32 %s320, 1
          %s1488 = smul.addr %s1487, 16
          %s1489 = scalar_lea.vmem [#allocation16], %s1488
          %1491 = dma.done %s1486, 256
        $region112: #{tpu_custom_call.1} parent=107 // pred_fallthru
          _
      $region108: #{tpu_custom_call.1} parent=5 // pred_fallthru
        _
    $region6: #{tpu_custom_call.1} parent=1 // loop_footer
      %s32 = sadd.s32 1, %s28
    $region7: #{tpu_custom_call.1} parent=1 // loop_footer_branch
      %27 = sbr.rel target = $region3
    $region8: #{tpu_custom_call.1} parent=1 // loop_exit
      _
    %1492 = vsyncpa [#allocation5], 1
    %s1493 = scalar_lea.sflag [#allocation5], 1
    %1494 = vsyncpa %s1493, 1
    %1495 = vsyncpa [#allocation8], 1
    %1496 = vsyncpa [#allocation11], 1
    %1497 = vsyncpa [#allocation14], 1
    %1498 = vsyncpa [#allocation6], 1
    %s1499 = scalar_lea.sflag [#allocation6], 1
    %1500 = vsyncpa %s1499, 1

// kernel: tpu_custom_call.1
$region0: #{tpu_custom_call.1}
  #allocation0 [shape = 'u32[]', space=smem, size = 0x4, offset = 0x4, fixed_abs, tag = 'smem constant byte address 0x4 - core index']
  #allocation1 [shape = 'u32[72,128]{1,0:T(1,128)}', space=vmem, size = 0x9000, scoped, tag = 'internal scratch']
  #allocation2 [shape = 'f32[1,24,128]{2,1,0:T(8,128)}', space=vmem, size = 0x3000, scoped, tag = 'scratch operand']
  #allocation3 [shape = 'f32[1,16,128]{2,1,0:T(8,128)}', space=vmem, size = 0x2000, scoped, tag = 'scratch operand']
  %s0 = inlined_call_operand.hbm [shape: f32[2,16,128], index: 0, kind: input, shape index: {}]
  %s1 = inlined_call_operand.hbm [shape: bf16[2,128,128], index: 1, kind: input, shape index: {}]
  %s2 = inlined_call_operand.vmem [shape: f32[1,128], index: 2, kind: input, shape index: {}]
  %s3 = inlined_call_operand.hbm [shape: bf16[2,128,128], index: 3, kind: input, shape index: {}]
  %s4 = inlined_call_operand.vmem [shape: f32[1,128], index: 4, kind: input, shape index: {}]
  %s5 = inlined_call_operand.hbm [shape: bf16[128,128], index: 5, kind: input, shape index: {}]
  %s6 = inlined_call_operand.vmem [shape: f32[1,128], index: 6, kind: input, shape index: {}]
  %s7 = inlined_call_operand.hbm [shape: bf16[2,128,128], index: 7, kind: input, shape index: {}]
  %s8 = inlined_call_operand.vmem [shape: f32[1,128], index: 8, kind: input, shape index: {}]
  %s9 = inlined_call_operand.hbm [shape: bf16[2,128,128], index: 9, kind: input, shape index: {}]
  %s10 = inlined_call_operand.vmem [shape: f32[1,128], index: 10, kind: input, shape index: {}]
  %s11 = inlined_call_operand.hbm [shape: bf16[128,128], index: 11, kind: input, shape index: {}]
  %s12 = inlined_call_operand.vmem [shape: f32[1,128], index: 12, kind: input, shape index: {}]
  %s13 = inlined_call_operand.hbm [shape: f32[2,16,128], index: 13, kind: output, shape index: {}]
  %s14 = sld [smem:[#allocation0]]
  $region113: #{tpu_custom_call.1} parent=0
    _
  %s16 = ssub.s32 1, %s14
  %s17 = scalar_select 0, %s16, %s14
  $region1: #{tpu_custom_call.1} parent=0
    #allocation4 [shape = 'u8[16384]{0}', space=vmem, size = 0x4000, scoped, tag = 'input window, operand 0']
    #allocation5 [shape = 's32[2]{0}', space=sflag, size = 0x8, scoped, tag = 'scoped memory for tpu_custom_call.1']
    #allocation6 [shape = 's32[2]{0}', space=sflag, size = 0x8, scoped, tag = 'scoped memory for tpu_custom_call.1']
    #allocation7 [shape = 'u8[65536]{0}', space=vmem, size = 0x10000, scoped, tag = 'input window, operand 1, single buffered']
    #allocation8 [shape = 's32[1]{0}', space=sflag, size = 0x4, scoped, tag = 'scoped memory for tpu_custom_call.1']
    #allocation9 [shape = 'u8[65536]{0}', space=vmem, size = 0x10000, scoped, tag = 'input window, operand 3, single buffered']
    #allocation10 [shape = 'u8[32768]{0}', space=vmem, size = 0x8000, scoped, tag = 'input window, operand 5, single buffered']
    #allocation11 [shape = 's32[1]{0}', space=sflag, size = 0x4, scoped, tag = 'scoped memory for tpu_custom_call.1']
    #allocation12 [shape = 'u8[65536]{0}', space=vmem, size = 0x10000, scoped, tag = 'input window, operand 7, single buffered']
    #allocation13 [shape = 'u8[65536]{0}', space=vmem, size = 0x10000, scoped, tag = 'input window, operand 9, single buffered']
    #allocation14 [shape = 's32[1]{0}', space=sflag, size = 0x4, scoped, tag = 'scoped memory for tpu_custom_call.1']
    #allocation15 [shape = 'u8[32768]{0}', space=vmem, size = 0x8000, scoped, tag = 'input window, operand 11, single buffered']
    #allocation16 [shape = 'u8[16384]{0}', space=vmem, size = 0x4000, scoped, tag = 'output window, operand 0']
    %18 = vsyncpa [#allocation5], 0
    %s19 = scalar_lea.sflag [#allocation5], 1
    %20 = vsyncpa %s19, 0
    %21 = vsyncpa [#allocation8], 0
    %22 = vsyncpa [#allocation11], 0
    %23 = vsyncpa [#allocation14], 0
    %24 = vsyncpa [#allocation6], 0
    %s25 = scalar_lea.sflag [#allocation6], 1
    %26 = vsyncpa %s25, 0
    loop: start=0, step=1, limit=4
    $region2: #{tpu_custom_call.1} parent=1 // loop_pre_header
      _
    $region3: #{tpu_custom_call.1} parent=1 // loop_header
      %s28 = sphi 0, %s32
      %p29 = scmp.ge.s32.totalorder %s28, 4
      %s38 = sphi 0, %s40
      %s41 = sphi 0, %s38
      %s42 = sphi 0, %s41
      %s58 = sphi 0, %s42
      %s62 = sphi 0, %s62
      %s64 = sphi 0, %s62
      %s65 = sphi 0, %s64
      %s79 = sphi 0, %s65
      %s83 = sphi 0, %s83
      %s85 = sphi 0, %s83
      %s86 = sphi 0, %s85
      %s100 = sphi 0, %s86
      %s104 = sphi 0, %s104
      %s106 = sphi 0, %s104
      %s107 = sphi 0, %s106
      %s121 = sphi 0, %s107
      %s125 = sphi 0, %s125
      %s127 = sphi 0, %s125
      %s128 = sphi 0, %s127
      %s142 = sphi 0, %s128
      %s146 = sphi 0, %s146
      %s148 = sphi 0, %s146
      %s149 = sphi 0, %s148
      %s163 = sphi 0, %s149
      %s167 = sphi 0, %s167
      %s169 = sphi 0, %s167
      %s170 = sphi 0, %s169
      %s184 = sphi 0, %s170
      %s188 = sphi 0, %s188
      %s190 = sphi 0, %s188
      %s191 = sphi 0, %s190
      %s205 = sphi 0, %s191
      %s209 = sphi 0, %s209
      %s211 = sphi 0, %s209
      %s212 = sphi 0, %s211
      %s226 = sphi 0, %s212
      %s230 = sphi 0, %s230
      %s232 = sphi 0, %s230
      %s233 = sphi 0, %s232
      %s247 = sphi 0, %s233
      %s251 = sphi 0, %s251
      %s253 = sphi 0, %s251
      %s254 = sphi 0, %s253
      %s268 = sphi 0, %s254
      %s272 = sphi 0, %s272
      %s274 = sphi 0, %s272
      %s275 = sphi 0, %s274
      %s289 = sphi 0, %s275
      %s293 = sphi 0, %s293
      %s295 = sphi 0, %s293
      %s296 = sphi 0, %s295
      %s310 = sphi 0, %s296
      %s316 = sphi 0, %s318
      %s319 = sphi 0, %s316
      %s320 = sphi 0, %s319
      %s336 = sphi 0, %s320
    $region4: #{tpu_custom_call.1} parent=1 // loop_header_branch
      %31 = sbr.rel (%p29) target = $region8
    $region5: #{tpu_custom_call.1} parent=1 // loop_body
      %s33 = ssub.s32 %s28, 1
      %s34 = ssub.s32 %s28, 2
      %s35 = sadd.s32 %s28, 1
      %s36 = ssub.s32 %s28, %s35
      %p37 = scmp.eq.s32.totalorder %s36, 0
      %s39 = sadd.s32 %s38, 1
      %s40 = scalar_select %p37, %s38, %s39
      %p43 = pneg %p37
      %p44 = scmp.eq.s32.totalorder %s28, 1
      %p45 = por %p43, %p44
      %p46 = scmp.ne.s32.totalorder %s38, %s41
      %p47 = scmp.eq.s32.totalorder %s28, 0
      %p48 = por %p46, %p47
      %p49 = scmp.ne.s32.totalorder %s38, %s41
      %p50 = scmp.eq.s32.totalorder %s33, 1
      %p51 = por %p49, %p50
      %p52 = scmp.ne.s32.totalorder %s41, %s42
      %p53 = scmp.eq.s32.totalorder %s33, 0
      %p54 = por %p52, %p53
      %p55 = scmp.ne.s32.totalorder %s41, %s42
      %p56 = scmp.eq.s32.totalorder %s34, 1
      %p57 = por %p55, %p56
      %p59 = scmp.ne.s32.totalorder %s42, %s58
      %p60 = scmp.eq.s32.totalorder %s34, 0
      %p61 = por %p59, %p60
      %s63 = sadd.s32 %s62, 1
      %p66 = scmp.eq.s32.totalorder %s28, 1
      %p67 = scmp.ne.s32.totalorder %s62, %s64
      %p68 = scmp.eq.s32.totalorder %s28, 0
      %p69 = por %p67, %p68
      %p70 = scmp.ne.s32.totalorder %s62, %s64
      %p71 = scmp.eq.s32.totalorder %s33, 1
      %p72 = por %p70, %p71
      %p73 = scmp.ne.s32.totalorder %s64, %s65
      %p74 = scmp.eq.s32.totalorder %s33, 0
      %p75 = por %p73, %p74
      %p76 = scmp.ne.s32.totalorder %s64, %s65
      %p77 = scmp.eq.s32.totalorder %s34, 1
      %p78 = por %p76, %p77
      %p80 = scmp.ne.s32.totalorder %s65, %s79
      %p81 = scmp.eq.s32.totalorder %s34, 0
      %p82 = por %p80, %p81
      %s84 = sadd.s32 %s83, 1
      %p87 = scmp.eq.s32.totalorder %s28, 1
      %p88 = scmp.ne.s32.totalorder %s83, %s85
      %p89 = scmp.eq.s32.totalorder %s28, 0
      %p90 = por %p88, %p89
      %p91 = scmp.ne.s32.totalorder %s83, %s85
      %p92 = scmp.eq.s32.totalorder %s33, 1
      %p93 = por %p91, %p92
      %p94 = scmp.ne.s32.totalorder %s85, %s86
      %p95 = scmp.eq.s32.totalorder %s33, 0
      %p96 = por %p94, %p95
      %p97 = scmp.ne.s32.totalorder %s85, %s86
      %p98 = scmp.eq.s32.totalorder %s34, 1
      %p99 = por %p97, %p98
      %p101 = scmp.ne.s32.totalorder %s86, %s100
      %p102 = scmp.eq.s32.totalorder %s34, 0
      %p103 = por %p101, %p102
      %s105 = sadd.s32 %s104, 1
      %p108 = scmp.eq.s32.totalorder %s28, 1
      %p109 = scmp.ne.s32.totalorder %s104, %s106
      %p110 = scmp.eq.s32.totalorder %s28, 0
      %p111 = por %p109, %p110
      %p112 = scmp.ne.s32.totalorder %s104, %s106
      %p113 = scmp.eq.s32.totalorder %s33, 1
      %p114 = por %p112, %p113
      %p115 = scmp.ne.s32.totalorder %s106, %s107
      %p116 = scmp.eq.s32.totalorder %s33, 0
      %p117 = por %p115, %p116
      %p118 = scmp.ne.s32.totalorder %s106, %s107
      %p119 = scmp.eq.s32.totalorder %s34, 1
      %p120 = por %p118, %p119
      %p122 = scmp.ne.s32.totalorder %s107, %s121
      %p123 = scmp.eq.s32.totalorder %s34, 0
      %p124 = por %p122, %p123
      %s126 = sadd.s32 %s125, 1
      %p129 = scmp.eq.s32.totalorder %s28, 1
      %p130 = scmp.ne.s32.totalorder %s125, %s127
      %p131 = scmp.eq.s32.totalorder %s28, 0
      %p132 = por %p130, %p131
      %p133 = scmp.ne.s32.totalorder %s125, %s127
      %p134 = scmp.eq.s32.totalorder %s33, 1
      %p135 = por %p133, %p134
      %p136 = scmp.ne.s32.totalorder %s127, %s128
      %p137 = scmp.eq.s32.totalorder %s33, 0
      %p138 = por %p136, %p137
      %p139 = scmp.ne.s32.totalorder %s127, %s128
      %p140 = scmp.eq.s32.totalorder %s34, 1
      %p141 = por %p139, %p140
      %p143 = scmp.ne.s32.totalorder %s128, %s142
      %p144 = scmp.eq.s32.totalorder %s34, 0
      %p145 = por %p143, %p144
      %s147 = sadd.s32 %s146, 1
      %p150 = scmp.eq.s32.totalorder %s28, 1
      %p151 = scmp.ne.s32.totalorder %s146, %s148
      %p152 = scmp.eq.s32.totalorder %s28, 0
      %p153 = por %p151, %p152
      %p154 = scmp.ne.s32.totalorder %s146, %s148
      %p155 = scmp.eq.s32.totalorder %s33, 1
      %p156 = por %p154, %p155
      %p157 = scmp.ne.s32.totalorder %s148, %s149
      %p158 = scmp.eq.s32.totalorder %s33, 0
      %p159 = por %p157, %p158
      %p160 = scmp.ne.s32.totalorder %s148, %s149
      %p161 = scmp.eq.s32.totalorder %s34, 1
      %p162 = por %p160, %p161
      %p164 = scmp.ne.s32.totalorder %s149, %s163
      %p165 = scmp.eq.s32.totalorder %s34, 0
      %p166 = por %p164, %p165
      %s168 = sadd.s32 %s167, 1
      %p171 = scmp.eq.s32.totalorder %s28, 1
      %p172 = scmp.ne.s32.totalorder %s167, %s169
      %p173 = scmp.eq.s32.totalorder %s28, 0
      %p174 = por %p172, %p173
      %p175 = scmp.ne.s32.totalorder %s167, %s169
      %p176 = scmp.eq.s32.totalorder %s33, 1
      %p177 = por %p175, %p176
      %p178 = scmp.ne.s32.totalorder %s169, %s170
      %p179 = scmp.eq.s32.totalorder %s33, 0
      %p180 = por %p178, %p179
      %p181 = scmp.ne.s32.totalorder %s169, %s170
      %p182 = scmp.eq.s32.totalorder %s34, 1
      %p183 = por %p181, %p182
      %p185 = scmp.ne.s32.totalorder %s170, %s184
      %p186 = scmp.eq.s32.totalorder %s34, 0
      %p187 = por %p185, %p186
      %s189 = sadd.s32 %s188, 1
      %p192 = scmp.eq.s32.totalorder %s28, 1
      %p193 = scmp.ne.s32.totalorder %s188, %s190
      %p194 = scmp.eq.s32.totalorder %s28, 0
      %p195 = por %p193, %p194
      %p196 = scmp.ne.s32.totalorder %s188, %s190
      %p197 = scmp.eq.s32.totalorder %s33, 1
      %p198 = por %p196, %p197
      %p199 = scmp.ne.s32.totalorder %s190, %s191
      %p200 = scmp.eq.s32.totalorder %s33, 0
      %p201 = por %p199, %p200
      %p202 = scmp.ne.s32.totalorder %s190, %s191
      %p203 = scmp.eq.s32.totalorder %s34, 1
      %p204 = por %p202, %p203
      %p206 = scmp.ne.s32.totalorder %s191, %s205
      %p207 = scmp.eq.s32.totalorder %s34, 0
      %p208 = por %p206, %p207
      %s210 = sadd.s32 %s209, 1
      %p213 = scmp.eq.s32.totalorder %s28, 1
      %p214 = scmp.ne.s32.totalorder %s209, %s211
      %p215 = scmp.eq.s32.totalorder %s28, 0
      %p216 = por %p214, %p215
      %p217 = scmp.ne.s32.totalorder %s209, %s211
      %p218 = scmp.eq.s32.totalorder %s33, 1
      %p219 = por %p217, %p218
      %p220 = scmp.ne.s32.totalorder %s211, %s212
      %p221 = scmp.eq.s32.totalorder %s33, 0
      %p222 = por %p220, %p221
      %p223 = scmp.ne.s32.totalorder %s211, %s212
      %p224 = scmp.eq.s32.totalorder %s34, 1
      %p225 = por %p223, %p224
      %p227 = scmp.ne.s32.totalorder %s212, %s226
      %p228 = scmp.eq.s32.totalorder %s34, 0
      %p229 = por %p227, %p228
      %s231 = sadd.s32 %s230, 1
      %p234 = scmp.eq.s32.totalorder %s28, 1
      %p235 = scmp.ne.s32.totalorder %s230, %s232
      %p236 = scmp.eq.s32.totalorder %s28, 0
      %p237 = por %p235, %p236
      %p238 = scmp.ne.s32.totalorder %s230, %s232
      %p239 = scmp.eq.s32.totalorder %s33, 1
      %p240 = por %p238, %p239
      %p241 = scmp.ne.s32.totalorder %s232, %s233
      %p242 = scmp.eq.s32.totalorder %s33, 0
      %p243 = por %p241, %p242
      %p244 = scmp.ne.s32.totalorder %s232, %s233
      %p245 = scmp.eq.s32.totalorder %s34, 1
      %p246 = por %p244, %p245
      %p248 = scmp.ne.s32.totalorder %s233, %s247
      %p249 = scmp.eq.s32.totalorder %s34, 0
      %p250 = por %p248, %p249
      %s252 = sadd.s32 %s251, 1
      %p255 = scmp.eq.s32.totalorder %s28, 1
      %p256 = scmp.ne.s32.totalorder %s251, %s253
      %p257 = scmp.eq.s32.totalorder %s28, 0
      %p258 = por %p256, %p257
      %p259 = scmp.ne.s32.totalorder %s251, %s253
      %p260 = scmp.eq.s32.totalorder %s33, 1
      %p261 = por %p259, %p260
      %p262 = scmp.ne.s32.totalorder %s253, %s254
      %p263 = scmp.eq.s32.totalorder %s33, 0
      %p264 = por %p262, %p263
      %p265 = scmp.ne.s32.totalorder %s253, %s254
      %p266 = scmp.eq.s32.totalorder %s34, 1
      %p267 = por %p265, %p266
      %p269 = scmp.ne.s32.totalorder %s254, %s268
      %p270 = scmp.eq.s32.totalorder %s34, 0
      %p271 = por %p269, %p270
      %s273 = sadd.s32 %s272, 1
      %p276 = scmp.eq.s32.totalorder %s28, 1
      %p277 = scmp.ne.s32.totalorder %s272, %s274
      %p278 = scmp.eq.s32.totalorder %s28, 0
      %p279 = por %p277, %p278
      %p280 = scmp.ne.s32.totalorder %s272, %s274
      %p281 = scmp.eq.s32.totalorder %s33, 1
      %p282 = por %p280, %p281
      %p283 = scmp.ne.s32.totalorder %s274, %s275
      %p284 = scmp.eq.s32.totalorder %s33, 0
      %p285 = por %p283, %p284
      %p286 = scmp.ne.s32.totalorder %s274, %s275
      %p287 = scmp.eq.s32.totalorder %s34, 1
      %p288 = por %p286, %p287
      %p290 = scmp.ne.s32.totalorder %s275, %s289
      %p291 = scmp.eq.s32.totalorder %s34, 0
      %p292 = por %p290, %p291
      %s294 = sadd.s32 %s293, 1
      %p297 = scmp.eq.s32.totalorder %s28, 1
      %p298 = scmp.ne.s32.totalorder %s293, %s295
      %p299 = scmp.eq.s32.totalorder %s28, 0
      %p300 = por %p298, %p299
      %p301 = scmp.ne.s32.totalorder %s293, %s295
      %p302 = scmp.eq.s32.totalorder %s33, 1
      %p303 = por %p301, %p302
      %p304 = scmp.ne.s32.totalorder %s295, %s296
      %p305 = scmp.eq.s32.totalorder %s33, 0
      %p306 = por %p304, %p305
      %p307 = scmp.ne.s32.totalorder %s295, %s296
      %p308 = scmp.eq.s32.totalorder %s34, 1
      %p309 = por %p307, %p308
      %p311 = scmp.ne.s32.totalorder %s296, %s310
      %p312 = scmp.eq.s32.totalorder %s34, 0
      %p313 = por %p311, %p312
      %s314 = ssub.s32 %s28, %s35
      %p315 = scmp.eq.s32.totalorder %s314, 0
      %s317 = sadd.s32 %s316, 1
      %s318 = scalar_select %p315, %s316, %s317
      %p321 = pneg %p315
      %p322 = scmp.eq.s32.totalorder %s28, 1
      %p323 = por %p321, %p322
      %p324 = scmp.ne.s32.totalorder %s316, %s319
      %p325 = scmp.eq.s32.totalorder %s28, 0
      %p326 = por %p324, %p325
      %p327 = scmp.ne.s32.totalorder %s316, %s319
      %p328 = scmp.eq.s32.totalorder %s33, 1
      %p329 = por %p327, %p328
      %p330 = scmp.ne.s32.totalorder %s319, %s320
      %p331 = scmp.eq.s32.totalorder %s33, 0
      %p332 = por %p330, %p331
      %p333 = scmp.ne.s32.totalorder %s319, %s320
      %p334 = scmp.eq.s32.totalorder %s34, 1
      %p335 = por %p333, %p334
      %p337 = scmp.ne.s32.totalorder %s320, %s336
      %p338 = scmp.eq.s32.totalorder %s34, 0
      %p339 = por %p337, %p338
      %p340 = scmp.le.s32.totalorder 1, %s28
      %p341 = scmp.lt.s32.totalorder %s28, 3
      %p342 = pnand %p340, %p341
      %p343 = pneg %p342
      // Predicated region
      $region9: #{tpu_custom_call.1} parent=5 // pred_check
        _
      $region10: #{tpu_custom_call.1} parent=5 // pred_check_branch
        %345 = sbr.rel (%p342) target = $region12
      $region11: #{tpu_custom_call.1} parent=5 // pred_region
        %s346 = ssub.s32 %s28, 1
        // Predicated region
        $region13: #{tpu_custom_call.1} parent=11 // pred_check
          %p347 = pneg %p75
        $region14: #{tpu_custom_call.1} parent=11 // pred_check_branch
          %349 = sbr.rel (%p347) target = $region16
        $region15: #{tpu_custom_call.1} parent=11 // pred_region
          %351 = vsyncadd [#allocation8], 0
          %s352 = sshll.u32 %s1, 4
          %s353 = int_to_ptr.hbm [resolvable:$true] %s352
          %s354 = sshll.u32 [#allocation7], 4
          %s355 = int_to_ptr.vmem [resolvable:$true] %s354
          %360 = dma.hbm_to_vmem [thread:$0]  %s353, 2048, %s355, [#allocation8], 64, 64, 4
        $region16: #{tpu_custom_call.1} parent=11 // pred_fallthru
          _
        // Predicated region
        $region17: #{tpu_custom_call.1} parent=11 // pred_check
          %p361 = pneg %p96
        $region18: #{tpu_custom_call.1} parent=11 // pred_check_branch
          %363 = sbr.rel (%p361) target = $region20
        $region19: #{tpu_custom_call.1} parent=11 // pred_region
          _
        $region20: #{tpu_custom_call.1} parent=11 // pred_fallthru
          _
        // Predicated region
        $region21: #{tpu_custom_call.1} parent=11 // pred_check
          %p364 = pneg %p117
        $region22: #{tpu_custom_call.1} parent=11 // pred_check_branch
          %366 = sbr.rel (%p364) target = $region24
        $region23: #{tpu_custom_call.1} parent=11 // pred_region
          %368 = vsyncadd [#allocation8], 0
          %s369 = sshll.u32 %s3, 4
          %s370 = int_to_ptr.hbm [resolvable:$true] %s369
          %s371 = sshll.u32 [#allocation9], 4
          %s372 = int_to_ptr.vmem [resolvable:$true] %s371
          %377 = dma.hbm_to_vmem [thread:$0]  %s370, 2048, %s372, [#allocation8], 64, 64, 4
        $region24: #{tpu_custom_call.1} parent=11 // pred_fallthru
          _
        // Predicated region
        $region25: #{tpu_custom_call.1} parent=11 // pred_check
          %p378 = pneg %p138
        $region26: #{tpu_custom_call.1} parent=11 // pred_check_branch
          %380 = sbr.rel (%p378) target = $region28
        $region27: #{tpu_custom_call.1} parent=11 // pred_region
          _
        $region28: #{tpu_custom_call.1} parent=11 // pred_fallthru
          _
        // Predicated region
        $region29: #{tpu_custom_call.1} parent=11 // pred_check
          %p381 = pneg %p159
        $region30: #{tpu_custom_call.1} parent=11 // pred_check_branch
          %383 = sbr.rel (%p381) target = $region32
        $region31: #{tpu_custom_call.1} parent=11 // pred_region
          %385 = vsyncadd [#allocation11], 0
          %s386 = sshll.u32 %s5, 4
          %s387 = int_to_ptr.hbm [resolvable:$true] %s386
          %s388 = sshll.u32 [#allocation10], 4
          %s389 = int_to_ptr.vmem [resolvable:$true] %s388
          %394 = dma.hbm_to_vmem [thread:$0]  %s387, 1024, %s389, [#allocation11], 64, 64, 4
        $region32: #{tpu_custom_call.1} parent=11 // pred_fallthru
          _
        // Predicated region
        $region33: #{tpu_custom_call.1} parent=11 // pred_check
          %p395 = pneg %p180
        $region34: #{tpu_custom_call.1} parent=11 // pred_check_branch
          %397 = sbr.rel (%p395) target = $region36
        $region35: #{tpu_custom_call.1} parent=11 // pred_region
          _
        $region36: #{tpu_custom_call.1} parent=11 // pred_fallthru
          _
        // Predicated region
        $region37: #{tpu_custom_call.1} parent=11 // pred_check
          %p398 = pneg %p201
        $region38: #{tpu_custom_call.1} parent=11 // pred_check_branch
          %400 = sbr.rel (%p398) target = $region40
        $region39: #{tpu_custom_call.1} parent=11 // pred_region
          %402 = vsyncadd [#allocation11], 0
          %s403 = sshll.u32 %s7, 4
          %s404 = int_to_ptr.hbm [resolvable:$true] %s403
          %s405 = sshll.u32 [#allocation12], 4
          %s406 = int_to_ptr.vmem [resolvable:$true] %s405
          %411 = dma.hbm_to_vmem [thread:$0]  %s404, 2048, %s406, [#allocation11], 64, 64, 4
        $region40: #{tpu_custom_call.1} parent=11 // pred_fallthru
          _
        // Predicated region
        $region41: #{tpu_custom_call.1} parent=11 // pred_check
          %p412 = pneg %p222
        $region42: #{tpu_custom_call.1} parent=11 // pred_check_branch
          %414 = sbr.rel (%p412) target = $region44
        $region43: #{tpu_custom_call.1} parent=11 // pred_region
          _
        $region44: #{tpu_custom_call.1} parent=11 // pred_fallthru
          _
        // Predicated region
        $region45: #{tpu_custom_call.1} parent=11 // pred_check
          %p415 = pneg %p243
        $region46: #{tpu_custom_call.1} parent=11 // pred_check_branch
          %417 = sbr.rel (%p415) target = $region48
        $region47: #{tpu_custom_call.1} parent=11 // pred_region
          %419 = vsyncadd [#allocation14], 0
          %s420 = sshll.u32 %s9, 4
          %s421 = int_to_ptr.hbm [resolvable:$true] %s420
          %s422 = sshll.u32 [#allocation13], 4
          %s423 = int_to_ptr.vmem [resolvable:$true] %s422
          %428 = dma.hbm_to_vmem [thread:$0]  %s421, 2048, %s423, [#allocation14], 64, 64, 4
        $region48: #{tpu_custom_call.1} parent=11 // pred_fallthru
          _
        // Predicated region
        $region49: #{tpu_custom_call.1} parent=11 // pred_check
          %p429 = pneg %p264
        $region50: #{tpu_custom_call.1} parent=11 // pred_check_branch
          %431 = sbr.rel (%p429) target = $region52
        $region51: #{tpu_custom_call.1} parent=11 // pred_region
          _
        $region52: #{tpu_custom_call.1} parent=11 // pred_fallthru
          _
        // Predicated region
        $region53: #{tpu_custom_call.1} parent=11 // pred_check
          %p432 = pneg %p285
        $region54: #{tpu_custom_call.1} parent=11 // pred_check_branch
          %434 = sbr.rel (%p432) target = $region56
        $region55: #{tpu_custom_call.1} parent=11 // pred_region
          %436 = vsyncadd [#allocation14], 0
          %s437 = sshll.u32 %s11, 4
          %s438 = int_to_ptr.hbm [resolvable:$true] %s437
          %s439 = sshll.u32 [#allocation15], 4
          %s440 = int_to_ptr.vmem [resolvable:$true] %s439
          %445 = dma.hbm_to_vmem [thread:$0]  %s438, 1024, %s440, [#allocation14], 64, 64, 4
        $region56: #{tpu_custom_call.1} parent=11 // pred_fallthru
          _
        // Predicated region
        $region57: #{tpu_custom_call.1} parent=11 // pred_check
          %p446 = pneg %p306
        $region58: #{tpu_custom_call.1} parent=11 // pred_check_branch
          %448 = sbr.rel (%p446) target = $region60
        $region59: #{tpu_custom_call.1} parent=11 // pred_region
          _
        $region60: #{tpu_custom_call.1} parent=11 // pred_fallthru
          _
      $region12: #{tpu_custom_call.1} parent=5 // pred_fallthru
        _
      %p449 = scmp.lt.s32.totalorder %s28, 2
      // Predicated region
      $region61: #{tpu_custom_call.1} parent=5 // pred_check
        %p450 = pneg %p449
      $region62: #{tpu_custom_call.1} parent=5 // pred_check_branch
        %452 = sbr.rel (%p450) target = $region64
      $region63: #{tpu_custom_call.1} parent=5 // pred_region
        // Predicated region
        $region65: #{tpu_custom_call.1} parent=63 // pred_check
          %p453 = pneg %p48
        $region66: #{tpu_custom_call.1} parent=63 // pred_check_branch
          %455 = sbr.rel (%p453) target = $region68
        $region67: #{tpu_custom_call.1} parent=63 // pred_region
          %s456 = sand.u32 %s38, 1
          %s457 = scalar_lea.sflag [#allocation5], %s456
          %s458 = sand.u32 %s38, 1
          %s459 = smul.addr %s458, 16
          %s460 = scalar_lea.vmem [#allocation4], %s459
          %462 = vsyncadd %s457, 0
          %s463 = smul.addr %s28, 2
          %s464 = smul.addr %s463, 8
          %s465 = scalar_lea.hbm %s0, %s464
          %s466 = sshll.u32 %s465, 4
          %s467 = int_to_ptr.hbm [resolvable:$true] %s466
          %s468 = sshll.u32 %s460, 4
          %s469 = int_to_ptr.vmem [resolvable:$true] %s468
          %474 = dma.hbm_to_vmem [thread:$0]  %s467, 256, %s469, %s457, 128, 128, 8
        $region68: #{tpu_custom_call.1} parent=63 // pred_fallthru
          _
      $region64: #{tpu_custom_call.1} parent=5 // pred_fallthru
        _
      %p475 = scmp.le.s32.totalorder 1, %s28
      %p476 = scmp.lt.s32.totalorder %s28, 3
      %p477 = pnand %p475, %p476
      %p478 = pneg %p477
      // Predicated region
      $region69: #{tpu_custom_call.1} parent=5 // pred_check
        _
      $region70: #{tpu_custom_call.1} parent=5 // pred_check_branch
        %480 = sbr.rel (%p477) target = $region72
      $region71: #{tpu_custom_call.1} parent=5 // pred_region
        %s481 = ssub.s32 %s28, 1
        %s482 = sand.u32 %s41, 1
        %s483 = scalar_lea.sflag [#allocation5], %s482
        %s484 = sand.u32 %s41, 1
        %s485 = smul.addr %s484, 16
        %s486 = scalar_lea.vmem [#allocation4], %s485
        // Predicated region
        $region73: #{tpu_custom_call.1} parent=71 // pred_check
          %p487 = pneg %p54
        $region74: #{tpu_custom_call.1} parent=71 // pred_check_branch
          %489 = sbr.rel (%p487) target = $region76
        $region75: #{tpu_custom_call.1} parent=71 // pred_region
          %491 = dma.done %s483, 256
        $region76: #{tpu_custom_call.1} parent=71 // pred_fallthru
          _
        // Predicated region
        $region77: #{tpu_custom_call.1} parent=71 // pred_check
          %p492 = pneg %p75
        $region78: #{tpu_custom_call.1} parent=71 // pred_check_branch
          %494 = sbr.rel (%p492) target = $region80
        $region79: #{tpu_custom_call.1} parent=71 // pred_region
          %496 = dma.done [#allocation8], 2048
        $region80: #{tpu_custom_call.1} parent=71 // pred_fallthru
          _
        // Predicated region
        $region81: #{tpu_custom_call.1} parent=71 // pred_check
          %p497 = pneg %p117
        $region82: #{tpu_custom_call.1} parent=71 // pred_check_branch
          %499 = sbr.rel (%p497) target = $region84
        $region83: #{tpu_custom_call.1} parent=71 // pred_region
          %501 = dma.done [#allocation8], 2048
        $region84: #{tpu_custom_call.1} parent=71 // pred_fallthru
          _
        // Predicated region
        $region85: #{tpu_custom_call.1} parent=71 // pred_check
          %p502 = pneg %p159
        $region86: #{tpu_custom_call.1} parent=71 // pred_check_branch
          %504 = sbr.rel (%p502) target = $region88
        $region87: #{tpu_custom_call.1} parent=71 // pred_region
          %506 = dma.done [#allocation11], 1024
        $region88: #{tpu_custom_call.1} parent=71 // pred_fallthru
          _
        // Predicated region
        $region89: #{tpu_custom_call.1} parent=71 // pred_check
          %p507 = pneg %p201
        $region90: #{tpu_custom_call.1} parent=71 // pred_check_branch
          %509 = sbr.rel (%p507) target = $region92
        $region91: #{tpu_custom_call.1} parent=71 // pred_region
          %511 = dma.done [#allocation11], 2048
        $region92: #{tpu_custom_call.1} parent=71 // pred_fallthru
          _
        // Predicated region
        $region93: #{tpu_custom_call.1} parent=71 // pred_check
          %p512 = pneg %p243
        $region94: #{tpu_custom_call.1} parent=71 // pred_check_branch
          %514 = sbr.rel (%p512) target = $region96
        $region95: #{tpu_custom_call.1} parent=71 // pred_region
          %516 = dma.done [#allocation14], 2048
        $region96: #{tpu_custom_call.1} parent=71 // pred_fallthru
          _
        // Predicated region
        $region97: #{tpu_custom_call.1} parent=71 // pred_check
          %p517 = pneg %p285
        $region98: #{tpu_custom_call.1} parent=71 // pred_check_branch
          %519 = sbr.rel (%p517) target = $region100
        $region99: #{tpu_custom_call.1} parent=71 // pred_region
          %521 = dma.done [#allocation14], 1024
        $region100: #{tpu_custom_call.1} parent=71 // pred_fallthru
          _
        %s522 = sand.u32 %s41, 1
        %s523 = scalar_lea.sflag [#allocation5], %s522
        %s524 = sand.u32 %s41, 1
        %s525 = smul.addr %s524, 16
        %s526 = scalar_lea.vmem [#allocation4], %s525
        %p527 = pneg %p54
        %p528 = pneg %p51
        %p529 = pneg %p75
        %p530 = pneg %p72
        %p531 = pneg %p96
        %p532 = pneg %p93
        %p533 = pneg %p117
        %p534 = pneg %p114
        %p535 = pneg %p138
        %p536 = pneg %p135
        %p537 = pneg %p159
        %p538 = pneg %p156
        %p539 = pneg %p180
        %p540 = pneg %p177
        %p541 = pneg %p201
        %p542 = pneg %p198
        %p543 = pneg %p222
        %p544 = pneg %p219
        %p545 = pneg %p243
        %p546 = pneg %p240
        %p547 = pneg %p264
        %p548 = pneg %p261
        %p549 = pneg %p285
        %p550 = pneg %p282
        %p551 = pneg %p306
        %p552 = pneg %p303
        %p553 = pneg %p332
        %p554 = pneg %p329
        %s555 = sand.u32 %s319, 1
        %s556 = scalar_lea.sflag [#allocation6], %s555
        %s557 = sand.u32 %s319, 1
        %s558 = smul.addr %s557, 16
        %s559 = scalar_lea.vmem [#allocation16], %s558
        %560 = vst [vmem:[#allocation2] sm:$0xff] 0.0
        %v561 = vld [vmem:[%s486] sm:$0xff]
        %v562 = vld [vmem:[%s486 + $0x8] sm:$0xff]
        %563 = vst [vmem:[#allocation2 + $0x8] sm:$0xff] %v561
        %564 = vst [vmem:[#allocation2 + $0x10] sm:$0xff] %v562
        %v565 = vld [vmem:[#allocation2 + $0x8] sm:$0xff]
        %v566 = vld [vmem:[#allocation2 + $0x10] sm:$0xff]
        %v567 = vpack.c.bf16 %v566, %v565
        %v568 = vld [vmem:[#allocation10] sm:$0xf]
        %v569 = vld [vmem:[#allocation10 + $0x4] sm:$0xf]
        %v570 = vld [vmem:[#allocation10 + $0x8] sm:$0xf]
        %v571 = vld [vmem:[#allocation10 + $0xc] sm:$0xf]
        %v572 = vld [vmem:[#allocation10 + $0x10] sm:$0xf]
        %v573 = vld [vmem:[#allocation10 + $0x14] sm:$0xf]
        %v574 = vld [vmem:[#allocation10 + $0x18] sm:$0xf]
        %v575 = vld [vmem:[#allocation10 + $0x1c] sm:$0xf]
        %v576 = vld [vmem:[#allocation10 + $0x20] sm:$0xf]
        %v577 = vld [vmem:[#allocation10 + $0x24] sm:$0xf]
        %v578 = vld [vmem:[#allocation10 + $0x28] sm:$0xf]
        %v579 = vld [vmem:[#allocation10 + $0x2c] sm:$0xf]
        %v580 = vld [vmem:[#allocation10 + $0x30] sm:$0xf]
        %v581 = vld [vmem:[#allocation10 + $0x34] sm:$0xf]
        %v582 = vld [vmem:[#allocation10 + $0x38] sm:$0xf]
        %v583 = vld [vmem:[#allocation10 + $0x3c] sm:$0xf]
        %v584 = vld [vmem:[%s6] sm:$0x1]
        %v586 = vperm.slane %v584, 0
        %v604 = vunpack.c.l.b16 %v568
        %v605 = vunpack.c.l.b16 %v569
        %v606 = vunpack.c.l.b16 %v570
        %v607 = vunpack.c.l.b16 %v571
        %v608 = vunpack.c.l.b16 %v572
        %v609 = vunpack.c.l.b16 %v573
        %v610 = vunpack.c.l.b16 %v574
        %v611 = vunpack.c.l.b16 %v575
        %v612 = vunpack.c.l.b16 %v576
        %v613 = vunpack.c.l.b16 %v577
        %v614 = vunpack.c.l.b16 %v578
        %v615 = vunpack.c.l.b16 %v579
        %v616 = vunpack.c.l.b16 %v580
        %v617 = vunpack.c.l.b16 %v581
        %v618 = vunpack.c.l.b16 %v582
        %v619 = vunpack.c.l.b16 %v583
        %v620 = vpack.c.b16 %v605, %v604
        %v621 = vpack.c.b16 %v607, %v606
        %v622 = vpack.c.b16 %v609, %v608
        %v623 = vpack.c.b16 %v611, %v610
        %v624 = vpack.c.b16 %v613, %v612
        %v625 = vpack.c.b16 %v615, %v614
        %v626 = vpack.c.b16 %v617, %v616
        %v627 = vpack.c.b16 %v619, %v618
        %636 = vmatpush.bf16.msra.mxu0 %v627
        %637 = vmatpush.bf16.msra.mxu0 %v626
        %638 = vmatpush.bf16.msra.mxu0 %v625
        %639 = vmatpush.bf16.msra.mxu0 %v624
        %640 = vmatpush.bf16.msra.mxu0 %v623
        %641 = vmatpush.bf16.msra.mxu0 %v622
        %642 = vmatpush.bf16.msra.mxu0 %v621
        %643 = vmatpush.bf16.msra.mxu0 %v620
        %644 = vmatmul.bf16.gmra.mxu0 %v567
        %v645 = vpop.f32.mrf.mxu0
        %v646 = vadd.f32 %v586, %v645
        %v647 = vpop.f32.mrf.mxu0
        %v648 = vadd.f32 %v586, %v647
        %649 = vdwg.mxu0
        %650 = vst [vmem:[#allocation3] sm:$0xff] %v646
        %651 = vst [vmem:[#allocation3 + $0x8] sm:$0xff] %v648
        %v652 = vld [vmem:[#allocation2 + $0x7] sm:$0xff]
        %v653 = vld [vmem:[#allocation2 + $0xf] sm:$0xff]
        %v654 = vpack.c.bf16 %v653, %v652
        %v655 = vld [vmem:[#allocation7] sm:$0xf]
        %v656 = vld [vmem:[#allocation7 + $0x4] sm:$0xf]
        %v657 = vld [vmem:[#allocation7 + $0x8] sm:$0xf]
        %v658 = vld [vmem:[#allocation7 + $0xc] sm:$0xf]
        %v659 = vld [vmem:[#allocation7 + $0x10] sm:$0xf]
        %v660 = vld [vmem:[#allocation7 + $0x14] sm:$0xf]
        %v661 = vld [vmem:[#allocation7 + $0x18] sm:$0xf]
        %v662 = vld [vmem:[#allocation7 + $0x1c] sm:$0xf]
        %v663 = vld [vmem:[#allocation7 + $0x20] sm:$0xf]
        %v664 = vld [vmem:[#allocation7 + $0x24] sm:$0xf]
        %v665 = vld [vmem:[#allocation7 + $0x28] sm:$0xf]
        %v666 = vld [vmem:[#allocation7 + $0x2c] sm:$0xf]
        %v667 = vld [vmem:[#allocation7 + $0x30] sm:$0xf]
        %v668 = vld [vmem:[#allocation7 + $0x34] sm:$0xf]
        %v669 = vld [vmem:[#allocation7 + $0x38] sm:$0xf]
        %v670 = vld [vmem:[#allocation7 + $0x3c] sm:$0xf]
        %v671 = vld [vmem:[#allocation2 + $0x8] sm:$0xff]
        %v672 = vld [vmem:[#allocation2 + $0x10] sm:$0xff]
        %v673 = vpack.c.bf16 %v672, %v671
        %s674 = scalar_lea.vmem [#allocation7], 64
        %v675 = vld [vmem:[%s674] sm:$0xf]
        %v676 = vld [vmem:[%s674 + $0x4] sm:$0xf]
        %v677 = vld [vmem:[%s674 + $0x8] sm:$0xf]
        %v678 = vld [vmem:[%s674 + $0xc] sm:$0xf]
        %v679 = vld [vmem:[%s674 + $0x10] sm:$0xf]
        %v680 = vld [vmem:[%s674 + $0x14] sm:$0xf]
        %v681 = vld [vmem:[%s674 + $0x18] sm:$0xf]
        %v682 = vld [vmem:[%s674 + $0x1c] sm:$0xf]
        %v683 = vld [vmem:[%s674 + $0x20] sm:$0xf]
        %v684 = vld [vmem:[%s674 + $0x24] sm:$0xf]
        %v685 = vld [vmem:[%s674 + $0x28] sm:$0xf]
        %v686 = vld [vmem:[%s674 + $0x2c] sm:$0xf]
        %v687 = vld [vmem:[%s674 + $0x30] sm:$0xf]
        %v688 = vld [vmem:[%s674 + $0x34] sm:$0xf]
        %v689 = vld [vmem:[%s674 + $0x38] sm:$0xf]
        %v690 = vld [vmem:[%s674 + $0x3c] sm:$0xf]
        %v707 = vunpack.c.l.b16 %v675
        %v708 = vunpack.c.l.b16 %v676
        %v709 = vunpack.c.l.b16 %v677
        %v710 = vunpack.c.l.b16 %v678
        %v711 = vunpack.c.l.b16 %v679
        %v712 = vunpack.c.l.b16 %v680
        %v713 = vunpack.c.l.b16 %v681
        %v714 = vunpack.c.l.b16 %v682
        %v715 = vunpack.c.l.b16 %v683
        %v716 = vunpack.c.l.b16 %v684
        %v717 = vunpack.c.l.b16 %v685
        %v718 = vunpack.c.l.b16 %v686
        %v719 = vunpack.c.l.b16 %v687
        %v720 = vunpack.c.l.b16 %v688
        %v721 = vunpack.c.l.b16 %v689
        %v722 = vunpack.c.l.b16 %v690
        %v723 = vpack.c.b16 %v708, %v707
        %v724 = vpack.c.b16 %v710, %v709
        %v725 = vpack.c.b16 %v712, %v711
        %v726 = vpack.c.b16 %v714, %v713
        %v727 = vpack.c.b16 %v716, %v715
        %v728 = vpack.c.b16 %v718, %v717
        %v729 = vpack.c.b16 %v720, %v719
        %v730 = vpack.c.b16 %v722, %v721
        %739 = vmatpush.bf16.msra.mxu0 %v730
        %740 = vmatpush.bf16.msra.mxu0 %v729
        %741 = vmatpush.bf16.msra.mxu0 %v728
        %742 = vmatpush.bf16.msra.mxu0 %v727
        %743 = vmatpush.bf16.msra.mxu0 %v726
        %744 = vmatpush.bf16.msra.mxu0 %v725
        %745 = vmatpush.bf16.msra.mxu0 %v724
        %746 = vmatpush.bf16.msra.mxu0 %v723
        %747 = vmatmul.bf16.gmra.mxu0 %v673
        %v748 = vpop.f32.mrf.mxu0
        %v749 = vadd.f32 0.0, %v748
        %v750 = vpop.f32.mrf.mxu0
        %v751 = vadd.f32 0.0, %v750
        %752 = vdwg.mxu0
        %v769 = vunpack.c.l.b16 %v655
        %v770 = vunpack.c.l.b16 %v656
        %v771 = vunpack.c.l.b16 %v657
        %v772 = vunpack.c.l.b16 %v658
        %v773 = vunpack.c.l.b16 %v659
        %v774 = vunpack.c.l.b16 %v660
        %v775 = vunpack.c.l.b16 %v661
        %v776 = vunpack.c.l.b16 %v662
        %v777 = vunpack.c.l.b16 %v663
        %v778 = vunpack.c.l.b16 %v664
        %v779 = vunpack.c.l.b16 %v665
        %v780 = vunpack.c.l.b16 %v666
        %v781 = vunpack.c.l.b16 %v667
        %v782 = vunpack.c.l.b16 %v668
        %v783 = vunpack.c.l.b16 %v669
        %v784 = vunpack.c.l.b16 %v670
        %v785 = vpack.c.b16 %v770, %v769
        %v786 = vpack.c.b16 %v772, %v771
        %v787 = vpack.c.b16 %v774, %v773
        %v788 = vpack.c.b16 %v776, %v775
        %v789 = vpack.c.b16 %v778, %v777
        %v790 = vpack.c.b16 %v780, %v779
        %v791 = vpack.c.b16 %v782, %v781
        %v792 = vpack.c.b16 %v784, %v783
        %801 = vmatpush.bf16.msra.mxu0 %v792
        %802 = vmatpush.bf16.msra.mxu0 %v791
        %803 = vmatpush.bf16.msra.mxu0 %v790
        %804 = vmatpush.bf16.msra.mxu0 %v789
        %805 = vmatpush.bf16.msra.mxu0 %v788
        %806 = vmatpush.bf16.msra.mxu0 %v787
        %807 = vmatpush.bf16.msra.mxu0 %v786
        %808 = vmatpush.bf16.msra.mxu0 %v785
        %809 = vmatmul.bf16.gmra.mxu0 %v654
        %v810 = vpop.f32.mrf.mxu0
        %v811 = vadd.f32 %v749, %v810
        %v812 = vpop.f32.mrf.mxu0
        %v813 = vadd.f32 %v751, %v812
        %814 = vdwg.mxu0
        %v815 = vld [vmem:[%s2] sm:$0x1]
        %v817 = vperm.slane %v815, 0
        %v819 = vadd.f32 %v811, %v817
        %v820 = vadd.f32 %v813, %v817
        %v821 = vmax.f32 %v819, 0.0
        %v822 = vmax.f32 %v820, 0.0
        %823 = vst [vmem:[#allocation2 + $0x8] sm:$0xff] %v821
        %824 = vst [vmem:[#allocation2 + $0x10] sm:$0xff] %v822
        %v825 = vld [vmem:[#allocation2 + $0x7] sm:$0xff]
        %v826 = vld [vmem:[#allocation2 + $0xf] sm:$0xff]
        %v827 = vpack.c.bf16 %v826, %v825
        %v828 = vld [vmem:[#allocation9] sm:$0xf]
        %v829 = vld [vmem:[#allocation9 + $0x4] sm:$0xf]
        %v830 = vld [vmem:[#allocation9 + $0x8] sm:$0xf]
        %v831 = vld [vmem:[#allocation9 + $0xc] sm:$0xf]
        %v832 = vld [vmem:[#allocation9 + $0x10] sm:$0xf]
        %v833 = vld [vmem:[#allocation9 + $0x14] sm:$0xf]
        %v834 = vld [vmem:[#allocation9 + $0x18] sm:$0xf]
        %v835 = vld [vmem:[#allocation9 + $0x1c] sm:$0xf]
        %v836 = vld [vmem:[#allocation9 + $0x20] sm:$0xf]
        %v837 = vld [vmem:[#allocation9 + $0x24] sm:$0xf]
        %v838 = vld [vmem:[#allocation9 + $0x28] sm:$0xf]
        %v839 = vld [vmem:[#allocation9 + $0x2c] sm:$0xf]
        %v840 = vld [vmem:[#allocation9 + $0x30] sm:$0xf]
        %v841 = vld [vmem:[#allocation9 + $0x34] sm:$0xf]
        %v842 = vld [vmem:[#allocation9 + $0x38] sm:$0xf]
        %v843 = vld [vmem:[#allocation9 + $0x3c] sm:$0xf]
        %v844 = vld [vmem:[#allocation2 + $0x8] sm:$0xff]
        %v845 = vld [vmem:[#allocation2 + $0x10] sm:$0xff]
        %v846 = vpack.c.bf16 %v845, %v844
        %s847 = scalar_lea.vmem [#allocation9], 64
        %v848 = vld [vmem:[%s847] sm:$0xf]
        %v849 = vld [vmem:[%s847 + $0x4] sm:$0xf]
        %v850 = vld [vmem:[%s847 + $0x8] sm:$0xf]
        %v851 = vld [vmem:[%s847 + $0xc] sm:$0xf]
        %v852 = vld [vmem:[%s847 + $0x10] sm:$0xf]
        %v853 = vld [vmem:[%s847 + $0x14] sm:$0xf]
        %v854 = vld [vmem:[%s847 + $0x18] sm:$0xf]
        %v855 = vld [vmem:[%s847 + $0x1c] sm:$0xf]
        %v856 = vld [vmem:[%s847 + $0x20] sm:$0xf]
        %v857 = vld [vmem:[%s847 + $0x24] sm:$0xf]
        %v858 = vld [vmem:[%s847 + $0x28] sm:$0xf]
        %v859 = vld [vmem:[%s847 + $0x2c] sm:$0xf]
        %v860 = vld [vmem:[%s847 + $0x30] sm:$0xf]
        %v861 = vld [vmem:[%s847 + $0x34] sm:$0xf]
        %v862 = vld [vmem:[%s847 + $0x38] sm:$0xf]
        %v863 = vld [vmem:[%s847 + $0x3c] sm:$0xf]
        %v880 = vunpack.c.l.b16 %v848
        %v881 = vunpack.c.l.b16 %v849
        %v882 = vunpack.c.l.b16 %v850
        %v883 = vunpack.c.l.b16 %v851
        %v884 = vunpack.c.l.b16 %v852
        %v885 = vunpack.c.l.b16 %v853
        %v886 = vunpack.c.l.b16 %v854
        %v887 = vunpack.c.l.b16 %v855
        %v888 = vunpack.c.l.b16 %v856
        %v889 = vunpack.c.l.b16 %v857
        %v890 = vunpack.c.l.b16 %v858
        %v891 = vunpack.c.l.b16 %v859
        %v892 = vunpack.c.l.b16 %v860
        %v893 = vunpack.c.l.b16 %v861
        %v894 = vunpack.c.l.b16 %v862
        %v895 = vunpack.c.l.b16 %v863
        %v896 = vpack.c.b16 %v881, %v880
        %v897 = vpack.c.b16 %v883, %v882
        %v898 = vpack.c.b16 %v885, %v884
        %v899 = vpack.c.b16 %v887, %v886
        %v900 = vpack.c.b16 %v889, %v888
        %v901 = vpack.c.b16 %v891, %v890
        %v902 = vpack.c.b16 %v893, %v892
        %v903 = vpack.c.b16 %v895, %v894
        %912 = vmatpush.bf16.msra.mxu0 %v903
        %913 = vmatpush.bf16.msra.mxu0 %v902
        %914 = vmatpush.bf16.msra.mxu0 %v901
        %915 = vmatpush.bf16.msra.mxu0 %v900
        %916 = vmatpush.bf16.msra.mxu0 %v899
        %917 = vmatpush.bf16.msra.mxu0 %v898
        %918 = vmatpush.bf16.msra.mxu0 %v897
        %919 = vmatpush.bf16.msra.mxu0 %v896
        %920 = vmatmul.bf16.gmra.mxu0 %v846
        %v921 = vpop.f32.mrf.mxu0
        %v922 = vadd.f32 0.0, %v921
        %v923 = vpop.f32.mrf.mxu0
        %v924 = vadd.f32 0.0, %v923
        %925 = vdwg.mxu0
        %v942 = vunpack.c.l.b16 %v828
        %v943 = vunpack.c.l.b16 %v829
        %v944 = vunpack.c.l.b16 %v830
        %v945 = vunpack.c.l.b16 %v831
        %v946 = vunpack.c.l.b16 %v832
        %v947 = vunpack.c.l.b16 %v833
        %v948 = vunpack.c.l.b16 %v834
        %v949 = vunpack.c.l.b16 %v835
        %v950 = vunpack.c.l.b16 %v836
        %v951 = vunpack.c.l.b16 %v837
        %v952 = vunpack.c.l.b16 %v838
        %v953 = vunpack.c.l.b16 %v839
        %v954 = vunpack.c.l.b16 %v840
        %v955 = vunpack.c.l.b16 %v841
        %v956 = vunpack.c.l.b16 %v842
        %v957 = vunpack.c.l.b16 %v843
        %v958 = vpack.c.b16 %v943, %v942
        %v959 = vpack.c.b16 %v945, %v944
        %v960 = vpack.c.b16 %v947, %v946
        %v961 = vpack.c.b16 %v949, %v948
        %v962 = vpack.c.b16 %v951, %v950
        %v963 = vpack.c.b16 %v953, %v952
        %v964 = vpack.c.b16 %v955, %v954
        %v965 = vpack.c.b16 %v957, %v956
        %974 = vmatpush.bf16.msra.mxu0 %v965
        %975 = vmatpush.bf16.msra.mxu0 %v964
        %976 = vmatpush.bf16.msra.mxu0 %v963
        %977 = vmatpush.bf16.msra.mxu0 %v962
        %978 = vmatpush.bf16.msra.mxu0 %v961
        %979 = vmatpush.bf16.msra.mxu0 %v960
        %980 = vmatpush.bf16.msra.mxu0 %v959
        %981 = vmatpush.bf16.msra.mxu0 %v958
        %982 = vmatmul.bf16.gmra.mxu0 %v827
        %v983 = vpop.f32.mrf.mxu0
        %v984 = vadd.f32 %v922, %v983
        %v985 = vpop.f32.mrf.mxu0
        %v986 = vadd.f32 %v924, %v985
        %987 = vdwg.mxu0
        %v988 = vld [vmem:[%s4] sm:$0x1]
        %v990 = vperm.slane %v988, 0
        %v992 = vadd.f32 %v984, %v990
        %v993 = vadd.f32 %v986, %v990
        %v994 = vmax.f32 %v992, 0.0
        %v995 = vmax.f32 %v993, 0.0
        %v996 = vld [vmem:[#allocation3] sm:$0xff]
        %v997 = vld [vmem:[#allocation3 + $0x8] sm:$0xff]
        %v998 = vadd.f32 %v994, %v996
        %v999 = vadd.f32 %v995, %v997
        %v1000 = vmax.f32 %v998, 0.0
        %v1001 = vmax.f32 %v999, 0.0
        %1002 = vst [vmem:[#allocation2 + $0x8] sm:$0xff] %v1000
        %1003 = vst [vmem:[#allocation2 + $0x10] sm:$0xff] %v1001
        %v1004 = vld [vmem:[#allocation2 + $0x8] sm:$0xff]
        %v1005 = vld [vmem:[#allocation2 + $0x10] sm:$0xff]
        %1006 = vst [vmem:[#allocation3] sm:$0xff] %v1004
        %1007 = vst [vmem:[#allocation3 + $0x8] sm:$0xff] %v1005
        %v1008 = vld [vmem:[#allocation2 + $0x6] sm:$0xff]
        %v1009 = vld [vmem:[#allocation2 + $0xe] sm:$0xff]
        %v1010 = vpack.c.bf16 %v1009, %v1008
        %v1011 = vld [vmem:[#allocation12] sm:$0xf]
        %v1012 = vld [vmem:[#allocation12 + $0x4] sm:$0xf]
        %v1013 = vld [vmem:[#allocation12 + $0x8] sm:$0xf]
        %v1014 = vld [vmem:[#allocation12 + $0xc] sm:$0xf]
        %v1015 = vld [vmem:[#allocation12 + $0x10] sm:$0xf]
        %v1016 = vld [vmem:[#allocation12 + $0x14] sm:$0xf]
        %v1017 = vld [vmem:[#allocation12 + $0x18] sm:$0xf]
        %v1018 = vld [vmem:[#allocation12 + $0x1c] sm:$0xf]
        %v1019 = vld [vmem:[#allocation12 + $0x20] sm:$0xf]
        %v1020 = vld [vmem:[#allocation12 + $0x24] sm:$0xf]
        %v1021 = vld [vmem:[#allocation12 + $0x28] sm:$0xf]
        %v1022 = vld [vmem:[#allocation12 + $0x2c] sm:$0xf]
        %v1023 = vld [vmem:[#allocation12 + $0x30] sm:$0xf]
        %v1024 = vld [vmem:[#allocation12 + $0x34] sm:$0xf]
        %v1025 = vld [vmem:[#allocation12 + $0x38] sm:$0xf]
        %v1026 = vld [vmem:[#allocation12 + $0x3c] sm:$0xf]
        %v1027 = vld [vmem:[#allocation2 + $0x8] sm:$0xff]
        %v1028 = vld [vmem:[#allocation2 + $0x10] sm:$0xff]
        %v1029 = vpack.c.bf16 %v1028, %v1027
        %s1030 = scalar_lea.vmem [#allocation12], 64
        %v1031 = vld [vmem:[%s1030] sm:$0xf]
        %v1032 = vld [vmem:[%s1030 + $0x4] sm:$0xf]
        %v1033 = vld [vmem:[%s1030 + $0x8] sm:$0xf]
        %v1034 = vld [vmem:[%s1030 + $0xc] sm:$0xf]
        %v1035 = vld [vmem:[%s1030 + $0x10] sm:$0xf]
        %v1036 = vld [vmem:[%s1030 + $0x14] sm:$0xf]
        %v1037 = vld [vmem:[%s1030 + $0x18] sm:$0xf]
        %v1038 = vld [vmem:[%s1030 + $0x1c] sm:$0xf]
        %v1039 = vld [vmem:[%s1030 + $0x20] sm:$0xf]
        %v1040 = vld [vmem:[%s1030 + $0x24] sm:$0xf]
        %v1041 = vld [vmem:[%s1030 + $0x28] sm:$0xf]
        %v1042 = vld [vmem:[%s1030 + $0x2c] sm:$0xf]
        %v1043 = vld [vmem:[%s1030 + $0x30] sm:$0xf]
        %v1044 = vld [vmem:[%s1030 + $0x34] sm:$0xf]
        %v1045 = vld [vmem:[%s1030 + $0x38] sm:$0xf]
        %v1046 = vld [vmem:[%s1030 + $0x3c] sm:$0xf]
        %v1063 = vunpack.c.l.b16 %v1031
        %v1064 = vunpack.c.l.b16 %v1032
        %v1065 = vunpack.c.l.b16 %v1033
        %v1066 = vunpack.c.l.b16 %v1034
        %v1067 = vunpack.c.l.b16 %v1035
        %v1068 = vunpack.c.l.b16 %v1036
        %v1069 = vunpack.c.l.b16 %v1037
        %v1070 = vunpack.c.l.b16 %v1038
        %v1071 = vunpack.c.l.b16 %v1039
        %v1072 = vunpack.c.l.b16 %v1040
        %v1073 = vunpack.c.l.b16 %v1041
        %v1074 = vunpack.c.l.b16 %v1042
        %v1075 = vunpack.c.l.b16 %v1043
        %v1076 = vunpack.c.l.b16 %v1044
        %v1077 = vunpack.c.l.b16 %v1045
        %v1078 = vunpack.c.l.b16 %v1046
        %v1079 = vpack.c.b16 %v1064, %v1063
        %v1080 = vpack.c.b16 %v1066, %v1065
        %v1081 = vpack.c.b16 %v1068, %v1067
        %v1082 = vpack.c.b16 %v1070, %v1069
        %v1083 = vpack.c.b16 %v1072, %v1071
        %v1084 = vpack.c.b16 %v1074, %v1073
        %v1085 = vpack.c.b16 %v1076, %v1075
        %v1086 = vpack.c.b16 %v1078, %v1077
        %1095 = vmatpush.bf16.msra.mxu0 %v1086
        %1096 = vmatpush.bf16.msra.mxu0 %v1085
        %1097 = vmatpush.bf16.msra.mxu0 %v1084
        %1098 = vmatpush.bf16.msra.mxu0 %v1083
        %1099 = vmatpush.bf16.msra.mxu0 %v1082
        %1100 = vmatpush.bf16.msra.mxu0 %v1081
        %1101 = vmatpush.bf16.msra.mxu0 %v1080
        %1102 = vmatpush.bf16.msra.mxu0 %v1079
        %1103 = vmatmul.bf16.gmra.mxu0 %v1029
        %v1104 = vpop.f32.mrf.mxu0
        %v1105 = vadd.f32 0.0, %v1104
        %v1106 = vpop.f32.mrf.mxu0
        %v1107 = vadd.f32 0.0, %v1106
        %1108 = vdwg.mxu0
        %v1125 = vunpack.c.l.b16 %v1011
        %v1126 = vunpack.c.l.b16 %v1012
        %v1127 = vunpack.c.l.b16 %v1013
        %v1128 = vunpack.c.l.b16 %v1014
        %v1129 = vunpack.c.l.b16 %v1015
        %v1130 = vunpack.c.l.b16 %v1016
        %v1131 = vunpack.c.l.b16 %v1017
        %v1132 = vunpack.c.l.b16 %v1018
        %v1133 = vunpack.c.l.b16 %v1019
        %v1134 = vunpack.c.l.b16 %v1020
        %v1135 = vunpack.c.l.b16 %v1021
        %v1136 = vunpack.c.l.b16 %v1022
        %v1137 = vunpack.c.l.b16 %v1023
        %v1138 = vunpack.c.l.b16 %v1024
        %v1139 = vunpack.c.l.b16 %v1025
        %v1140 = vunpack.c.l.b16 %v1026
        %v1141 = vpack.c.b16 %v1126, %v1125
        %v1142 = vpack.c.b16 %v1128, %v1127
        %v1143 = vpack.c.b16 %v1130, %v1129
        %v1144 = vpack.c.b16 %v1132, %v1131
        %v1145 = vpack.c.b16 %v1134, %v1133
        %v1146 = vpack.c.b16 %v1136, %v1135
        %v1147 = vpack.c.b16 %v1138, %v1137
        %v1148 = vpack.c.b16 %v1140, %v1139
        %1157 = vmatpush.bf16.msra.mxu0 %v1148
        %1158 = vmatpush.bf16.msra.mxu0 %v1147
        %1159 = vmatpush.bf16.msra.mxu0 %v1146
        %1160 = vmatpush.bf16.msra.mxu0 %v1145
        %1161 = vmatpush.bf16.msra.mxu0 %v1144
        %1162 = vmatpush.bf16.msra.mxu0 %v1143
        %1163 = vmatpush.bf16.msra.mxu0 %v1142
        %1164 = vmatpush.bf16.msra.mxu0 %v1141
        %1165 = vmatmul.bf16.gmra.mxu0 %v1010
        %v1166 = vpop.f32.mrf.mxu0
        %v1167 = vadd.f32 %v1105, %v1166
        %v1168 = vpop.f32.mrf.mxu0
        %v1169 = vadd.f32 %v1107, %v1168
        %1170 = vdwg.mxu0
        %v1171 = vld [vmem:[%s8] sm:$0x1]
        %v1173 = vperm.slane %v1171, 0
        %v1175 = vadd.f32 %v1167, %v1173
        %v1176 = vadd.f32 %v1169, %v1173
        %v1177 = vmax.f32 %v1175, 0.0
        %v1178 = vmax.f32 %v1176, 0.0
        %1179 = vst [vmem:[#allocation2 + $0x8] sm:$0xff] %v1177
        %1180 = vst [vmem:[#allocation2 + $0x10] sm:$0xff] %v1178
        %v1181 = vld [vmem:[#allocation2 + $0x6] sm:$0xff]
        %v1182 = vld [vmem:[#allocation2 + $0xe] sm:$0xff]
        %v1183 = vpack.c.bf16 %v1182, %v1181
        %v1184 = vld [vmem:[#allocation13] sm:$0xf]
        %v1185 = vld [vmem:[#allocation13 + $0x4] sm:$0xf]
        %v1186 = vld [vmem:[#allocation13 + $0x8] sm:$0xf]
        %v1187 = vld [vmem:[#allocation13 + $0xc] sm:$0xf]
        %v1188 = vld [vmem:[#allocation13 + $0x10] sm:$0xf]
        %v1189 = vld [vmem:[#allocation13 + $0x14] sm:$0xf]
        %v1190 = vld [vmem:[#allocation13 + $0x18] sm:$0xf]
        %v1191 = vld [vmem:[#allocation13 + $0x1c] sm:$0xf]
        %v1192 = vld [vmem:[#allocation13 + $0x20] sm:$0xf]
        %v1193 = vld [vmem:[#allocation13 + $0x24] sm:$0xf]
        %v1194 = vld [vmem:[#allocation13 + $0x28] sm:$0xf]
        %v1195 = vld [vmem:[#allocation13 + $0x2c] sm:$0xf]
        %v1196 = vld [vmem:[#allocation13 + $0x30] sm:$0xf]
        %v1197 = vld [vmem:[#allocation13 + $0x34] sm:$0xf]
        %v1198 = vld [vmem:[#allocation13 + $0x38] sm:$0xf]
        %v1199 = vld [vmem:[#allocation13 + $0x3c] sm:$0xf]
        %v1200 = vld [vmem:[#allocation2 + $0x8] sm:$0xff]
        %v1201 = vld [vmem:[#allocation2 + $0x10] sm:$0xff]
        %v1202 = vpack.c.bf16 %v1201, %v1200
        %s1203 = scalar_lea.vmem [#allocation13], 64
        %v1204 = vld [vmem:[%s1203] sm:$0xf]
        %v1205 = vld [vmem:[%s1203 + $0x4] sm:$0xf]
        %v1206 = vld [vmem:[%s1203 + $0x8] sm:$0xf]
        %v1207 = vld [vmem:[%s1203 + $0xc] sm:$0xf]
        %v1208 = vld [vmem:[%s1203 + $0x10] sm:$0xf]
        %v1209 = vld [vmem:[%s1203 + $0x14] sm:$0xf]
        %v1210 = vld [vmem:[%s1203 + $0x18] sm:$0xf]
        %v1211 = vld [vmem:[%s1203 + $0x1c] sm:$0xf]
        %v1212 = vld [vmem:[%s1203 + $0x20] sm:$0xf]
        %v1213 = vld [vmem:[%s1203 + $0x24] sm:$0xf]
        %v1214 = vld [vmem:[%s1203 + $0x28] sm:$0xf]
        %v1215 = vld [vmem:[%s1203 + $0x2c] sm:$0xf]
        %v1216 = vld [vmem:[%s1203 + $0x30] sm:$0xf]
        %v1217 = vld [vmem:[%s1203 + $0x34] sm:$0xf]
        %v1218 = vld [vmem:[%s1203 + $0x38] sm:$0xf]
        %v1219 = vld [vmem:[%s1203 + $0x3c] sm:$0xf]
        %v1236 = vunpack.c.l.b16 %v1204
        %v1237 = vunpack.c.l.b16 %v1205
        %v1238 = vunpack.c.l.b16 %v1206
        %v1239 = vunpack.c.l.b16 %v1207
        %v1240 = vunpack.c.l.b16 %v1208
        %v1241 = vunpack.c.l.b16 %v1209
        %v1242 = vunpack.c.l.b16 %v1210
        %v1243 = vunpack.c.l.b16 %v1211
        %v1244 = vunpack.c.l.b16 %v1212
        %v1245 = vunpack.c.l.b16 %v1213
        %v1246 = vunpack.c.l.b16 %v1214
        %v1247 = vunpack.c.l.b16 %v1215
        %v1248 = vunpack.c.l.b16 %v1216
        %v1249 = vunpack.c.l.b16 %v1217
        %v1250 = vunpack.c.l.b16 %v1218
        %v1251 = vunpack.c.l.b16 %v1219
        %v1252 = vpack.c.b16 %v1237, %v1236
        %v1253 = vpack.c.b16 %v1239, %v1238
        %v1254 = vpack.c.b16 %v1241, %v1240
        %v1255 = vpack.c.b16 %v1243, %v1242
        %v1256 = vpack.c.b16 %v1245, %v1244
        %v1257 = vpack.c.b16 %v1247, %v1246
        %v1258 = vpack.c.b16 %v1249, %v1248
        %v1259 = vpack.c.b16 %v1251, %v1250
        %1268 = vmatpush.bf16.msra.mxu0 %v1259
        %1269 = vmatpush.bf16.msra.mxu0 %v1258
        %1270 = vmatpush.bf16.msra.mxu0 %v1257
        %1271 = vmatpush.bf16.msra.mxu0 %v1256
        %1272 = vmatpush.bf16.msra.mxu0 %v1255
        %1273 = vmatpush.bf16.msra.mxu0 %v1254
        %1274 = vmatpush.bf16.msra.mxu0 %v1253
        %1275 = vmatpush.bf16.msra.mxu0 %v1252
        %1276 = vmatmul.bf16.gmra.mxu0 %v1202
        %v1277 = vpop.f32.mrf.mxu0
        %v1278 = vadd.f32 0.0, %v1277
        %v1279 = vpop.f32.mrf.mxu0
        %v1280 = vadd.f32 0.0, %v1279
        %1281 = vdwg.mxu0
        %v1298 = vunpack.c.l.b16 %v1184
        %v1299 = vunpack.c.l.b16 %v1185
        %v1300 = vunpack.c.l.b16 %v1186
        %v1301 = vunpack.c.l.b16 %v1187
        %v1302 = vunpack.c.l.b16 %v1188
        %v1303 = vunpack.c.l.b16 %v1189
        %v1304 = vunpack.c.l.b16 %v1190
        %v1305 = vunpack.c.l.b16 %v1191
        %v1306 = vunpack.c.l.b16 %v1192
        %v1307 = vunpack.c.l.b16 %v1193
        %v1308 = vunpack.c.l.b16 %v1194
        %v1309 = vunpack.c.l.b16 %v1195
        %v1310 = vunpack.c.l.b16 %v1196
        %v1311 = vunpack.c.l.b16 %v1197
        %v1312 = vunpack.c.l.b16 %v1198
        %v1313 = vunpack.c.l.b16 %v1199
        %v1314 = vpack.c.b16 %v1299, %v1298
        %v1315 = vpack.c.b16 %v1301, %v1300
        %v1316 = vpack.c.b16 %v1303, %v1302
        %v1317 = vpack.c.b16 %v1305, %v1304
        %v1318 = vpack.c.b16 %v1307, %v1306
        %v1319 = vpack.c.b16 %v1309, %v1308
        %v1320 = vpack.c.b16 %v1311, %v1310
        %v1321 = vpack.c.b16 %v1313, %v1312
        %1330 = vmatpush.bf16.msra.mxu0 %v1321
        %1331 = vmatpush.bf16.msra.mxu0 %v1320
        %1332 = vmatpush.bf16.msra.mxu0 %v1319
        %1333 = vmatpush.bf16.msra.mxu0 %v1318
        %1334 = vmatpush.bf16.msra.mxu0 %v1317
        %1335 = vmatpush.bf16.msra.mxu0 %v1316
        %1336 = vmatpush.bf16.msra.mxu0 %v1315
        %1337 = vmatpush.bf16.msra.mxu0 %v1314
        %1338 = vmatmul.bf16.gmra.mxu0 %v1183
        %v1339 = vpop.f32.mrf.mxu0
        %v1340 = vadd.f32 %v1278, %v1339
        %v1341 = vpop.f32.mrf.mxu0
        %v1342 = vadd.f32 %v1280, %v1341
        %1343 = vdwg.mxu0
        %v1344 = vld [vmem:[%s10] sm:$0x1]
        %v1346 = vperm.slane %v1344, 0
        %v1348 = vadd.f32 %v1340, %v1346
        %v1349 = vadd.f32 %v1342, %v1346
        %v1350 = vmax.f32 %v1348, 0.0
        %v1351 = vmax.f32 %v1349, 0.0
        %v1352 = vld [vmem:[#allocation3] sm:$0xff]
        %v1353 = vld [vmem:[#allocation3 + $0x8] sm:$0xff]
        %v1354 = vadd.f32 %v1350, %v1352
        %v1355 = vadd.f32 %v1351, %v1353
        %v1356 = vmax.f32 %v1354, 0.0
        %v1357 = vmax.f32 %v1355, 0.0
        %1358 = vst [vmem:[#allocation2 + $0x8] sm:$0xff] %v1356
        %1359 = vst [vmem:[#allocation2 + $0x10] sm:$0xff] %v1357
        %v1360 = vld [vmem:[#allocation2 + $0x8] sm:$0xff]
        %v1361 = vld [vmem:[#allocation2 + $0x10] sm:$0xff]
        %v1362 = vpack.c.bf16 %v1361, %v1360
        %v1363 = vld [vmem:[#allocation15] sm:$0xf]
        %v1364 = vld [vmem:[#allocation15 + $0x4] sm:$0xf]
        %v1365 = vld [vmem:[#allocation15 + $0x8] sm:$0xf]
        %v1366 = vld [vmem:[#allocation15 + $0xc] sm:$0xf]
        %v1367 = vld [vmem:[#allocation15 + $0x10] sm:$0xf]
        %v1368 = vld [vmem:[#allocation15 + $0x14] sm:$0xf]
        %v1369 = vld [vmem:[#allocation15 + $0x18] sm:$0xf]
        %v1370 = vld [vmem:[#allocation15 + $0x1c] sm:$0xf]
        %v1371 = vld [vmem:[#allocation15 + $0x20] sm:$0xf]
        %v1372 = vld [vmem:[#allocation15 + $0x24] sm:$0xf]
        %v1373 = vld [vmem:[#allocation15 + $0x28] sm:$0xf]
        %v1374 = vld [vmem:[#allocation15 + $0x2c] sm:$0xf]
        %v1375 = vld [vmem:[#allocation15 + $0x30] sm:$0xf]
        %v1376 = vld [vmem:[#allocation15 + $0x34] sm:$0xf]
        %v1377 = vld [vmem:[#allocation15 + $0x38] sm:$0xf]
        %v1378 = vld [vmem:[#allocation15 + $0x3c] sm:$0xf]
        %v1379 = vld [vmem:[%s12] sm:$0x1]
        %v1381 = vperm.slane %v1379, 0
        %v1399 = vunpack.c.l.b16 %v1363
        %v1400 = vunpack.c.l.b16 %v1364
        %v1401 = vunpack.c.l.b16 %v1365
        %v1402 = vunpack.c.l.b16 %v1366
        %v1403 = vunpack.c.l.b16 %v1367
        %v1404 = vunpack.c.l.b16 %v1368
        %v1405 = vunpack.c.l.b16 %v1369
        %v1406 = vunpack.c.l.b16 %v1370
        %v1407 = vunpack.c.l.b16 %v1371
        %v1408 = vunpack.c.l.b16 %v1372
        %v1409 = vunpack.c.l.b16 %v1373
        %v1410 = vunpack.c.l.b16 %v1374
        %v1411 = vunpack.c.l.b16 %v1375
        %v1412 = vunpack.c.l.b16 %v1376
        %v1413 = vunpack.c.l.b16 %v1377
        %v1414 = vunpack.c.l.b16 %v1378
        %v1415 = vpack.c.b16 %v1400, %v1399
        %v1416 = vpack.c.b16 %v1402, %v1401
        %v1417 = vpack.c.b16 %v1404, %v1403
        %v1418 = vpack.c.b16 %v1406, %v1405
        %v1419 = vpack.c.b16 %v1408, %v1407
        %v1420 = vpack.c.b16 %v1410, %v1409
        %v1421 = vpack.c.b16 %v1412, %v1411
        %v1422 = vpack.c.b16 %v1414, %v1413
        %1431 = vmatpush.bf16.msra.mxu0 %v1422
        %1432 = vmatpush.bf16.msra.mxu0 %v1421
        %1433 = vmatpush.bf16.msra.mxu0 %v1420
        %1434 = vmatpush.bf16.msra.mxu0 %v1419
        %1435 = vmatpush.bf16.msra.mxu0 %v1418
        %1436 = vmatpush.bf16.msra.mxu0 %v1417
        %1437 = vmatpush.bf16.msra.mxu0 %v1416
        %1438 = vmatpush.bf16.msra.mxu0 %v1415
        %1439 = vmatmul.bf16.gmra.mxu0 %v1362
        %v1440 = vpop.f32.mrf.mxu0
        %v1441 = vadd.f32 %v1381, %v1440
        %v1442 = vpop.f32.mrf.mxu0
        %v1443 = vadd.f32 %v1381, %v1442
        %1444 = vdwg.mxu0
        %v1445 = vmul.f32 %v1441, 0.5
        %v1446 = vmul.f32 %v1443, 0.5
        %v1447 = vtanh.pop %v1445
        %v1448 = vtanh.pop %v1446
        %v1449 = vmul.f32 %v1447, 0.5
        %v1450 = vmul.f32 %v1448, 0.5
        %v1451 = vadd.f32 %v1449, 0.5
        %v1452 = vadd.f32 %v1450, 0.5
        %1453 = vst [vmem:[%s559] sm:$0xff] %v1451
        %1454 = vst [vmem:[%s559 + $0x8] sm:$0xff] %v1452
        %s1455 = sand.u32 %s319, 1
        %s1456 = scalar_lea.sflag [#allocation6], %s1455
        %s1457 = sand.u32 %s319, 1
        %s1458 = smul.addr %s1457, 16
        %s1459 = scalar_lea.vmem [#allocation16], %s1458
        // Predicated region
        $region101: #{tpu_custom_call.1} parent=71 // pred_check
          %p1460 = pneg %p329
        $region102: #{tpu_custom_call.1} parent=71 // pred_check_branch
          %1462 = sbr.rel (%p1460) target = $region104
        $region103: #{tpu_custom_call.1} parent=71 // pred_region
          %1464 = vsyncadd %s1456, 0
          %s1465 = smul.addr %s33, 2
          %s1466 = smul.addr %s1465, 8
          %s1467 = scalar_lea.hbm %s13, %s1466
          %s1468 = sshll.u32 %s1459, 4
          %s1469 = int_to_ptr.vmem [resolvable:$true] %s1468
          %s1470 = sshll.u32 %s1467, 4
          %s1471 = int_to_ptr.hbm [resolvable:$true] %s1470
          %1476 = dma.vmem_to_hbm [thread:$0]  %s1469, 256, %s1471, %s1456, 128, 128, 8
        $region104: #{tpu_custom_call.1} parent=71 // pred_fallthru
          _
      $region72: #{tpu_custom_call.1} parent=5 // pred_fallthru
        _
      %p1477 = scmp.le.s32.totalorder 2, %s28
      // Predicated region
      $region105: #{tpu_custom_call.1} parent=5 // pred_check
        %p1478 = pneg %p1477
      $region106: #{tpu_custom_call.1} parent=5 // pred_check_branch
        %1480 = sbr.rel (%p1478) target = $region108
      $region107: #{tpu_custom_call.1} parent=5 // pred_region
        %s1481 = ssub.s32 %s28, 2
        // Predicated region
        $region109: #{tpu_custom_call.1} parent=107 // pred_check
          %p1482 = pneg %p335
        $region110: #{tpu_custom_call.1} parent=107 // pred_check_branch
          %1484 = sbr.rel (%p1482) target = $region112
        $region111: #{tpu_custom_call.1} parent=107 // pred_region
          %s1485 = sand.u32 %s320, 1
          %s1486 = scalar_lea.sflag [#allocation6], %s1485
          %s1487 = sand.u32 %s320, 1
          %s1488 = smul.addr %s1487, 16
          %s1489 = scalar_lea.vmem [#allocation16], %s1488
          %1491 = dma.done %s1486, 256
        $region112: #{tpu_custom_call.1} parent=107 // pred_fallthru
          _
      $region108: #{tpu_custom_call.1} parent=5 // pred_fallthru
        _
    $region6: #{tpu_custom_call.1} parent=1 // loop_footer
      %s32 = sadd.s32 1, %s28
    $region7: #{tpu_custom_call.1} parent=1 // loop_footer_branch
      %27 = sbr.rel target = $region3
    $region8: #{tpu_custom_call.1} parent=1 // loop_exit
      _
    %1492 = vsyncpa [#allocation5], 1
    %s1493 = scalar_lea.sflag [#allocation5], 1
    %1494 = vsyncpa %s1493, 1
    %1495 = vsyncpa [#allocation8], 1
    %1496 = vsyncpa [#allocation11], 1
    %1497 = vsyncpa [#allocation14], 1
    %1498 = vsyncpa [#allocation6], 1
    %s1499 = scalar_lea.sflag [#allocation6], 1
    %1500 = vsyncpa %s1499, 1

</llo_original>
